<compile_context>
chip_gen: v5e
topology: v5e:2x2
jax: 0.10.0
libtpu: 0.0.40
codegen_flags: <defaults>
</compile_context>

<pallas_src>
import jax
import jax.numpy as jnp
from jax import lax
from jax.experimental import pallas as pl
from jax.experimental.pallas import tpu as pltpu

# ---------------- small synthetic CLIP text-encoder config ----------------
VOCAB = 64
CTX = 8              # context length L
WIDTH = 128          # transformer width D (lane-dense: multiple of 128)
HEADS = 4
HEAD_DIM = WIDTH // HEADS
LAYERS = 2
EMBED = 16           # output embedding dim (text_projection out)
BATCH = 2
EPS = 1e-5


def _layer_norm(x, w, b):
    mu = jnp.mean(x, axis=-1, keepdims=True)
    var = jnp.mean((x - mu) ** 2, axis=-1, keepdims=True)
    return (x - mu) * lax.rsqrt(var + EPS) * w + b


def clip_text_kernel(x_ref, w_big_ref, w_out_ref, w_pr_ref, b_small_ref,
                     b_wide_ref, lnf_ref, o_ref):
    """Full text-transformer stack for one sequence (grid step = one batch row).

    x_ref      : [L, D]            token+pos embedded sequence
    w_big_ref  : [NL, D, 7D]       per-layer  w_in(3D) | w_fc(4D)   (lane-concat)
    w_out_ref  : [NL, H, Hd, D]    per-layer attention out-projection, per head
    w_pr_ref   : [NL, 4D, D]       per-layer MLP c_proj weight
    b_small_ref: [NL, 6, D]        rows: ln1_w, ln1_b, ln2_w, ln2_b, b_out, b_proj
    b_wide_ref : [NL, 1, 7D]       lanes: b_in(3D) | b_fc(4D)
    lnf_ref    : [2, D]            rows: ln_final weight, bias
    o_ref      : [L, D]            final-LayerNormed activations
    """
    L, D, H, Hd = CTX, WIDTH, HEADS, HEAD_DIM

    x = x_ref[...]                                               # [L, D] f32

    # Causal additive bias, built once per invocation (hoisted out of layers).
    row = lax.broadcasted_iota(jnp.int32, (L, L), 0)
    col = lax.broadcasted_iota(jnp.int32, (L, L), 1)
    bias = jnp.where(col <= row, 0.0, -1e30).astype(jnp.float32)  # [L, L]

    for l in range(LAYERS):                                      # unrolled: tiny model
        # ---- static views into the packed per-layer parameters ----
        w_in = w_big_ref[l, :, 0 * D:3 * D]                      # [D, 3D] (q-scale folded)
        w_fc = w_big_ref[l, :, 3 * D:7 * D]                      # [D, 4D]
        wo_h = w_out_ref[l]                                      # [H, Hd, D]
        w_pr = w_pr_ref[l]                                       # [4D, D]
        ln1_w = b_small_ref[l, 0:1, :]
        ln1_b = b_small_ref[l, 1:2, :]
        ln2_w = b_small_ref[l, 2:3, :]
        ln2_b = b_small_ref[l, 3:4, :]
        b_out = b_small_ref[l, 4:5, :]
        b_prj = b_small_ref[l, 5:6, :]
        b_in = b_wide_ref[l, :, 0 * D:3 * D]                     # [1, 3D]
        b_fc = b_wide_ref[l, :, 3 * D:7 * D]                     # [1, 4D]

        # ---------------- multi-head causal self-attention ----------------
        h1 = _layer_norm(x, ln1_w, ln1_b)                        # [L, D]
        qkv = jnp.dot(h1, w_in,
                      preferred_element_type=jnp.float32) + b_in  # [L, 3D]

        # Head split: static lane windows stacked on a new leading (batch) axis.
        def heads_of(base):
            return jnp.concatenate(
                [qkv[:, base + i * Hd: base + (i + 1) * Hd].reshape(1, L, Hd)
                 for i in range(H)], axis=0)                     # [H, L, Hd]

        q = heads_of(0 * D)
        k = heads_of(1 * D)
        v = heads_of(2 * D)

        # One batched dot for scores and one for P@V (batch dim = heads).
        s = lax.dot_general(q, k, (((2,), (2,)), ((0,), (0,))),
                            preferred_element_type=jnp.float32)  # [H, L, L]
        s = s + bias[None, :, :]
        m = jnp.max(s, axis=-1, keepdims=True)
        p = jnp.exp(s - m)
        p = p / jnp.sum(p, axis=-1, keepdims=True)               # exact divide
        o = lax.dot_general(p, v, (((2,), (1,)), ((0,), (0,))),
                            preferred_element_type=jnp.float32)  # [H, L, Hd]

        # Head merge folded into the out-projection: sum_h (o_h @ Wo_h).
        attn = lax.dot_general(o, wo_h, (((2,), (1,)), ((0,), (0,))),
                               preferred_element_type=jnp.float32)  # [H, L, D]
        x = x + jnp.sum(attn, axis=0) + b_out

        # ---------------- MLP (c_fc -> QuickGELU -> c_proj) ----------------
        h2 = _layer_norm(x, ln2_w, ln2_b)
        a = jnp.dot(h2, w_fc,
                    preferred_element_type=jnp.float32) + b_fc    # [L, 4D]
        g = a * jax.nn.sigmoid(1.702 * a)                         # QuickGELU (f32)
        x = x + jnp.dot(g, w_pr,
                        preferred_element_type=jnp.float32) + b_prj

    o_ref[...] = _layer_norm(x, lnf_ref[0:1, :], lnf_ref[1:2, :])


@jax.jit
def clip_encode_text(text, params):
    D = WIDTH
    # Embedding gather + positional add: tiny tail op, plain JAX.
    x = params["token_embedding"][text] + params["positional_embedding"][None, :, :]
    x = x.reshape(BATCH * CTX, D).astype(jnp.float32)

    xf = pl.pallas_call(
        clip_text_kernel,
        out_shape=jax.ShapeDtypeStruct((BATCH * CTX, D), jnp.float32),
        grid=(BATCH,),
        in_specs=[
            pl.BlockSpec((CTX, D), lambda b: (b, 0)),                       # x (per sequence)
            pl.BlockSpec((LAYERS, D, 7 * D), lambda b: (0, 0, 0)),          # w_big (resident)
            pl.BlockSpec((LAYERS, HEADS, HEAD_DIM, D), lambda b: (0, 0, 0, 0)),  # w_out
            pl.BlockSpec((LAYERS, 4 * D, D), lambda b: (0, 0, 0)),          # w_pr
            pl.BlockSpec((LAYERS, 6, D), lambda b: (0, 0, 0)),              # b_small
            pl.BlockSpec((LAYERS, 1, 7 * D), lambda b: (0, 0, 0)),          # b_wide
            pl.BlockSpec((2, D), lambda b: (0, 0)),                         # ln_final
        ],
        out_specs=pl.BlockSpec((CTX, D), lambda b: (b, 0)),
        compiler_params=pltpu.CompilerParams(
            dimension_semantics=("parallel",)),   # v7x: one sequence per TensorCore
    )(x, params["w_big"], params["w_out"], params["w_pr"],
      params["b_small"], params["b_wide"], params["lnf"])

    # EOT-token feature pick + text_projection: tiny tail ops, plain JAX.
    eot_idx = jnp.argmax(text, axis=-1)                                     # [B]
    feats = xf.reshape(BATCH, CTX, D)[jnp.arange(BATCH), eot_idx]           # [B, D]
    return feats @ params["text_projection"]                                # [B, E]


# ---------------- pure-JAX reference (same math, same packed params) ----------------
def clip_encode_text_ref(text, params):
    D, Hd, H = WIDTH, HEAD_DIM, HEADS

    def ln(x, w, b):
        mu = x.mean(-1, keepdims=True)
        var = ((x - mu) ** 2).mean(-1, keepdims=True)
        return (x - mu) * lax.rsqrt(var + EPS) * w + b

    x = params["token_embedding"][text] + params["positional_embedding"][None]
    mask = jnp.tril(jnp.ones((CTX, CTX), bool))
    for l in range(LAYERS):
        w_in = params["w_big"][l, :, :3 * D]
        w_fc = params["w_big"][l, :, 3 * D:]
        wo = params["w_out"][l].reshape(D, D)
        w_pr = params["w_pr"][l]
        ln1_w, ln1_b, ln2_w, ln2_b, b_out, b_prj = [params["b_small"][l, i]
                                                    for i in range(6)]
        b_in = params["b_wide"][l, 0, :3 * D]
        b_fc = params["b_wide"][l, 0, 3 * D:]

        h = ln(x, ln1_w, ln1_b)
        qkv = h @ w_in + b_in                         # [B, L, 3D]  (q-scale folded)
        heads = []
        for i in range(H):
            q = qkv[..., 0 * D + i * Hd: 0 * D + (i + 1) * Hd]
            k = qkv[..., 1 * D + i * Hd: 1 * D + (i + 1) * Hd]
            v = qkv[..., 2 * D + i * Hd: 2 * D + (i + 1) * Hd]
            s = jnp.einsum("bld,bmd->blm", q, k)
            s = jnp.where(mask, s, -1e30)
            p = jax.nn.softmax(s, axis=-1)
            heads.append(jnp.einsum("blm,bmd->bld", p, v))
        x = x + jnp.concatenate(heads, -1) @ wo + b_out
        h2 = ln(x, ln2_w, ln2_b)
        a = h2 @ w_fc + b_fc
        x = x + (a * jax.nn.sigmoid(1.702 * a)) @ w_pr + b_prj
    xf = ln(x, params["lnf"][0], params["lnf"][1])
    feats = xf[jnp.arange(BATCH), jnp.argmax(text, axis=-1)]
    return feats @ params["text_projection"]


# ---------------- deterministic synthetic parameter init (packed layout) ----------------
def init_params(key):
    ks = iter(jax.random.split(key, 12))

    def nrm(shape, std):
        return (std * jax.random.normal(next(ks), shape)).astype(jnp.float32)

    D, NL, F, H, Hd = WIDTH, LAYERS, 4 * WIDTH, HEADS, HEAD_DIM
    scale = Hd ** -0.5

    # PyTorch-style in_proj [3D, D] rows [q; k; v]; transpose to [D, 3D] and
    # fold 1/sqrt(head_dim) into the q columns (and q bias).
    w_in = jnp.transpose(nrm((NL, 3 * D, D), D ** -0.5), (0, 2, 1))   # [NL, D, 3D]
    b_in = nrm((NL, 3 * D), 0.01)
    q_scale = jnp.concatenate([jnp.full((D,), scale, jnp.float32),
                               jnp.ones((2 * D,), jnp.float32)])
    w_in = w_in * q_scale[None, None, :]
    b_in = b_in * q_scale[None, :]

    wo = jnp.transpose(nrm((NL, D, D), D ** -0.5), (0, 2, 1))          # [NL, D(in), D(out)]
    b_out = nrm((NL, D), 0.01)
    w_fc = jnp.transpose(nrm((NL, F, D), D ** -0.5), (0, 2, 1))        # [NL, D, 4D]
    b_fc = nrm((NL, F), 0.01)
    w_pr = jnp.transpose(nrm((NL, D, F), F ** -0.5), (0, 2, 1))        # [NL, 4D, D]
    b_prj = nrm((NL, D), 0.01)

    ln1_w = jnp.ones((NL, D), jnp.float32)
    ln1_b = jnp.zeros((NL, D), jnp.float32)
    ln2_w = jnp.ones((NL, D), jnp.float32)
    ln2_b = jnp.zeros((NL, D), jnp.float32)
    lnf_w = jnp.ones((D,), jnp.float32)
    lnf_b = jnp.zeros((D,), jnp.float32)

    return dict(
        token_embedding=nrm((VOCAB, D), 0.02),
        positional_embedding=nrm((CTX, D), 0.01),
        # packed per-layer parameters: few large DMAs instead of 14 tiny ones
        w_big=jnp.concatenate([w_in, w_fc], axis=-1),                   # [NL, D, 7D]
        w_out=wo.reshape(NL, H, Hd, D),                                  # [NL, H, Hd, D]
        w_pr=w_pr,                                                       # [NL, 4D, D]
        b_small=jnp.stack([ln1_w, ln1_b, ln2_w, ln2_b, b_out, b_prj],
                          axis=1),                                       # [NL, 6, D]
        b_wide=jnp.concatenate([b_in, b_fc], axis=-1)[:, None, :],       # [NL, 1, 7D]
        lnf=jnp.stack([lnf_w, lnf_b], axis=0),                           # [2, D]
        text_projection=nrm((D, EMBED), D ** -0.5),
    )


if __name__ == "__main__":
    key = jax.random.PRNGKey(0)
    pkey, tkey = jax.random.split(key)
    params = init_params(pkey)
    text = jax.random.randint(tkey, (BATCH, CTX), 0, VOCAB, dtype=jnp.int32)

    out = clip_encode_text(text, params)
    jax.block_until_ready(out)

    ref = clip_encode_text_ref(text, params)
    assert out.shape == (BATCH, EMBED)
    assert jnp.allclose(out, ref, atol=2e-3, rtol=2e-3), (out, ref)
    print("KERNEL_OK")
</pallas_src>

<mosaic_0001>
module attributes {stable_mosaic.version = 11 : i64} {
  func.func @clip_text_kernel(%arg0: i32, %arg1: memref<8x128xf32, #tpu.memory_space<vmem>>, %arg2: memref<2x128x896xf32, #tpu.memory_space<vmem>>, %arg3: memref<2x4x32x128xf32, #tpu.memory_space<vmem>>, %arg4: memref<2x512x128xf32, #tpu.memory_space<vmem>>, %arg5: memref<2x6x128xf32, #tpu.memory_space<vmem>>, %arg6: memref<2x1x896xf32, #tpu.memory_space<vmem>>, %arg7: memref<2x128xf32, #tpu.memory_space<vmem>>, %arg8: memref<8x128xf32, #tpu.memory_space<vmem>>) attributes {dimension_semantics = [#tpu.dimension_semantics<parallel>], iteration_bounds = array<i64: 2>, scalar_prefetch = 0 : i64, scratch_operands = 0 : i64, tpu.core_type = #tpu.core_type<tc>, window_params = [{transform_indices = @transform_0, window_bounds = array<i64: 8, 128>}, {pipeline_mode = #tpu.pipeline_mode<synchronous>, transform_indices = @transform_1, window_bounds = array<i64: 2, 128, 896>}, {pipeline_mode = #tpu.pipeline_mode<synchronous>, transform_indices = @transform_2, window_bounds = array<i64: 2, 4, 32, 128>}, {pipeline_mode = #tpu.pipeline_mode<synchronous>, transform_indices = @transform_3, window_bounds = array<i64: 2, 512, 128>}, {pipeline_mode = #tpu.pipeline_mode<synchronous>, transform_indices = @transform_4, window_bounds = array<i64: 2, 6, 128>}, {pipeline_mode = #tpu.pipeline_mode<synchronous>, transform_indices = @transform_5, window_bounds = array<i64: 2, 1, 896>}, {pipeline_mode = #tpu.pipeline_mode<synchronous>, transform_indices = @transform_6, window_bounds = array<i64: 2, 128>}, {transform_indices = @transform_7, window_bounds = array<i64: 8, 128>}]} {
    %c0 = arith.constant 0 : index
    %c0_0 = arith.constant 0 : index
    %0 = vector.load %arg1[%c0, %c0_0] : memref<8x128xf32, #tpu.memory_space<vmem>>, vector<8x128xf32>
    %1 = tpu.iota {dimensions = array<i32: 0>} : vector<8x8xi32>
    %2 = tpu.iota {dimensions = array<i32: 1>} : vector<8x8xi32>
    %3 = arith.cmpi sle, %2, %1 : vector<8x8xi32>
    %cst = arith.constant 0.000000e+00 : f32
    %cst_1 = arith.constant -1.000000e+30 : f32
    %4 = vector.broadcast %cst : f32 to vector<8x8xf32>
    %5 = vector.broadcast %cst_1 : f32 to vector<8x8xf32>
    %6 = arith.select %3, %4, %5 : vector<8x8xi1>, vector<8x8xf32>
    %c0_2 = arith.constant 0 : index
    %c0_3 = arith.constant 0 : index
    %c0_4 = arith.constant 0 : index
    %7 = vector.load %arg2[%c0_2, %c0_3, %c0_4] : memref<2x128x896xf32, #tpu.memory_space<vmem>>, vector<1x128x384xf32>
    %8 = vector.shape_cast %7 : vector<1x128x384xf32> to vector<128x384xf32>
    %c0_5 = arith.constant 0 : index
    %c0_6 = arith.constant 0 : index
    %c384 = arith.constant 384 : index
    %9 = vector.load %arg2[%c0_5, %c0_6, %c384] : memref<2x128x896xf32, #tpu.memory_space<vmem>>, vector<1x128x512xf32>
    %10 = vector.shape_cast %9 : vector<1x128x512xf32> to vector<128x512xf32>
    %c0_7 = arith.constant 0 : index
    %c0_8 = arith.constant 0 : index
    %c0_9 = arith.constant 0 : index
    %c0_10 = arith.constant 0 : index
    %11 = vector.load %arg3[%c0_7, %c0_8, %c0_9, %c0_10] : memref<2x4x32x128xf32, #tpu.memory_space<vmem>>, vector<1x4x32x128xf32>
    %12 = vector.shape_cast %11 : vector<1x4x32x128xf32> to vector<4x32x128xf32>
    %c0_11 = arith.constant 0 : index
    %c0_12 = arith.constant 0 : index
    %c0_13 = arith.constant 0 : index
    %13 = vector.load %arg4[%c0_11, %c0_12, %c0_13] : memref<2x512x128xf32, #tpu.memory_space<vmem>>, vector<1x512x128xf32>
    %14 = vector.shape_cast %13 : vector<1x512x128xf32> to vector<512x128xf32>
    %c0_14 = arith.constant 0 : index
    %c0_15 = arith.constant 0 : index
    %c0_16 = arith.constant 0 : index
    %15 = vector.load %arg5[%c0_14, %c0_15, %c0_16] : memref<2x6x128xf32, #tpu.memory_space<vmem>>, vector<1x1x128xf32>
    %16 = vector.shape_cast %15 : vector<1x1x128xf32> to vector<1x128xf32>
    %c0_17 = arith.constant 0 : index
    %c1 = arith.constant 1 : index
    %c0_18 = arith.constant 0 : index
    %17 = vector.load %arg5[%c0_17, %c1, %c0_18] : memref<2x6x128xf32, #tpu.memory_space<vmem>>, vector<1x1x128xf32>
    %18 = vector.shape_cast %17 : vector<1x1x128xf32> to vector<1x128xf32>
    %c0_19 = arith.constant 0 : index
    %c2 = arith.constant 2 : index
    %c0_20 = arith.constant 0 : index
    %19 = vector.load %arg5[%c0_19, %c2, %c0_20] : memref<2x6x128xf32, #tpu.memory_space<vmem>>, vector<1x1x128xf32>
    %20 = vector.shape_cast %19 : vector<1x1x128xf32> to vector<1x128xf32>
    %c0_21 = arith.constant 0 : index
    %c3 = arith.constant 3 : index
    %c0_22 = arith.constant 0 : index
    %21 = vector.load %arg5[%c0_21, %c3, %c0_22] : memref<2x6x128xf32, #tpu.memory_space<vmem>>, vector<1x1x128xf32>
    %22 = vector.shape_cast %21 : vector<1x1x128xf32> to vector<1x128xf32>
    %c0_23 = arith.constant 0 : index
    %c4 = arith.constant 4 : index
    %c0_24 = arith.constant 0 : index
    %23 = vector.load %arg5[%c0_23, %c4, %c0_24] : memref<2x6x128xf32, #tpu.memory_space<vmem>>, vector<1x1x128xf32>
    %24 = vector.shape_cast %23 : vector<1x1x128xf32> to vector<1x128xf32>
    %c0_25 = arith.constant 0 : index
    %c5 = arith.constant 5 : index
    %c0_26 = arith.constant 0 : index
    %25 = vector.load %arg5[%c0_25, %c5, %c0_26] : memref<2x6x128xf32, #tpu.memory_space<vmem>>, vector<1x1x128xf32>
    %26 = vector.shape_cast %25 : vector<1x1x128xf32> to vector<1x128xf32>
    %c0_27 = arith.constant 0 : index
    %c0_28 = arith.constant 0 : index
    %c0_29 = arith.constant 0 : index
    %27 = vector.load %arg6[%c0_27, %c0_28, %c0_29] : memref<2x1x896xf32, #tpu.memory_space<vmem>>, vector<1x1x384xf32>
    %28 = vector.shape_cast %27 : vector<1x1x384xf32> to vector<1x384xf32>
    %c0_30 = arith.constant 0 : index
    %c0_31 = arith.constant 0 : index
    %c384_32 = arith.constant 384 : index
    %29 = vector.load %arg6[%c0_30, %c0_31, %c384_32] : memref<2x1x896xf32, #tpu.memory_space<vmem>>, vector<1x1x512xf32>
    %30 = vector.shape_cast %29 : vector<1x1x512xf32> to vector<1x512xf32>
    %cst_33 = arith.constant dense<0.000000e+00> : vector<8xf32>
    %31 = vector.multi_reduction <add>, %0, %cst_33 [1] : vector<8x128xf32> to vector<8xf32>
    %32 = vector.shape_cast %31 : vector<8xf32> to vector<8x1xf32>
    %cst_34 = arith.constant 1.280000e+02 : f32
    %33 = vector.broadcast %cst_34 : f32 to vector<8x1xf32>
    %34 = arith.divf %32, %33 : vector<8x1xf32>
    %35 = vector.broadcast %34 : vector<8x1xf32> to vector<8x128xf32>
    %36 = arith.subf %0, %35 : vector<8x128xf32>
    %37 = arith.mulf %36, %36 : vector<8x128xf32>
    %cst_35 = arith.constant dense<0.000000e+00> : vector<8xf32>
    %38 = vector.multi_reduction <add>, %37, %cst_35 [1] : vector<8x128xf32> to vector<8xf32>
    %39 = vector.shape_cast %38 : vector<8xf32> to vector<8x1xf32>
    %cst_36 = arith.constant 1.280000e+02 : f32
    %40 = vector.broadcast %cst_36 : f32 to vector<8x1xf32>
    %41 = arith.divf %39, %40 : vector<8x1xf32>
    %42 = vector.broadcast %34 : vector<8x1xf32> to vector<8x128xf32>
    %43 = arith.subf %0, %42 : vector<8x128xf32>
    %cst_37 = arith.constant 9.99999974E-6 : f32
    %44 = vector.broadcast %cst_37 : f32 to vector<8x1xf32>
    %45 = arith.addf %41, %44 : vector<8x1xf32>
    %46 = math.rsqrt %45 : vector<8x1xf32>
    %47 = vector.broadcast %46 : vector<8x1xf32> to vector<8x128xf32>
    %48 = arith.mulf %43, %47 : vector<8x128xf32>
    %49 = vector.broadcast %16 : vector<1x128xf32> to vector<8x128xf32>
    %50 = arith.mulf %48, %49 : vector<8x128xf32>
    %51 = vector.broadcast %18 : vector<1x128xf32> to vector<8x128xf32>
    %52 = arith.addf %50, %51 : vector<8x128xf32>
    %cst_38 = arith.constant dense<0.000000e+00> : vector<8x384xf32>
    %53 = tpu.matmul %52, %8, %cst_38 {dimension_numbers = #tpu.dot_dimension_numbers<[1], [0], [0], [1], [0, 0, 1, 1], [], []>} : vector<8x128xf32>, vector<128x384xf32>, vector<8x384xf32> -> vector<8x384xf32>
    %54 = vector.broadcast %28 : vector<1x384xf32> to vector<8x384xf32>
    %55 = arith.addf %53, %54 : vector<8x384xf32>
    %56 = vector.extract_strided_slice %55 {offsets = [0, 0], sizes = [8, 32], strides = [1, 1]} : vector<8x384xf32> to vector<8x32xf32>
    %57 = vector.shape_cast %56 : vector<8x32xf32> to vector<1x8x32xf32>
    %58 = vector.extract_strided_slice %55 {offsets = [0, 32], sizes = [8, 32], strides = [1, 1]} : vector<8x384xf32> to vector<8x32xf32>
    %59 = vector.shape_cast %58 : vector<8x32xf32> to vector<1x8x32xf32>
    %60 = vector.extract_strided_slice %55 {offsets = [0, 64], sizes = [8, 32], strides = [1, 1]} : vector<8x384xf32> to vector<8x32xf32>
    %61 = vector.shape_cast %60 : vector<8x32xf32> to vector<1x8x32xf32>
    %62 = vector.extract_strided_slice %55 {offsets = [0, 96], sizes = [8, 32], strides = [1, 1]} : vector<8x384xf32> to vector<8x32xf32>
    %63 = vector.shape_cast %62 : vector<8x32xf32> to vector<1x8x32xf32>
    %64 = tpu.concatenate %57, %59, %61, %63 in 0 : vector<1x8x32xf32>, vector<1x8x32xf32>, vector<1x8x32xf32>, vector<1x8x32xf32> -> vector<4x8x32xf32>
    %65 = vector.extract_strided_slice %55 {offsets = [0, 128], sizes = [8, 32], strides = [1, 1]} : vector<8x384xf32> to vector<8x32xf32>
    %66 = vector.shape_cast %65 : vector<8x32xf32> to vector<1x8x32xf32>
    %67 = vector.extract_strided_slice %55 {offsets = [0, 160], sizes = [8, 32], strides = [1, 1]} : vector<8x384xf32> to vector<8x32xf32>
    %68 = vector.shape_cast %67 : vector<8x32xf32> to vector<1x8x32xf32>
    %69 = vector.extract_strided_slice %55 {offsets = [0, 192], sizes = [8, 32], strides = [1, 1]} : vector<8x384xf32> to vector<8x32xf32>
    %70 = vector.shape_cast %69 : vector<8x32xf32> to vector<1x8x32xf32>
    %71 = vector.extract_strided_slice %55 {offsets = [0, 224], sizes = [8, 32], strides = [1, 1]} : vector<8x384xf32> to vector<8x32xf32>
    %72 = vector.shape_cast %71 : vector<8x32xf32> to vector<1x8x32xf32>
    %73 = tpu.concatenate %66, %68, %70, %72 in 0 : vector<1x8x32xf32>, vector<1x8x32xf32>, vector<1x8x32xf32>, vector<1x8x32xf32> -> vector<4x8x32xf32>
    %74 = vector.extract_strided_slice %55 {offsets = [0, 256], sizes = [8, 32], strides = [1, 1]} : vector<8x384xf32> to vector<8x32xf32>
    %75 = vector.shape_cast %74 : vector<8x32xf32> to vector<1x8x32xf32>
    %76 = vector.extract_strided_slice %55 {offsets = [0, 288], sizes = [8, 32], strides = [1, 1]} : vector<8x384xf32> to vector<8x32xf32>
    %77 = vector.shape_cast %76 : vector<8x32xf32> to vector<1x8x32xf32>
    %78 = vector.extract_strided_slice %55 {offsets = [0, 320], sizes = [8, 32], strides = [1, 1]} : vector<8x384xf32> to vector<8x32xf32>
    %79 = vector.shape_cast %78 : vector<8x32xf32> to vector<1x8x32xf32>
    %80 = vector.extract_strided_slice %55 {offsets = [0, 352], sizes = [8, 32], strides = [1, 1]} : vector<8x384xf32> to vector<8x32xf32>
    %81 = vector.shape_cast %80 : vector<8x32xf32> to vector<1x8x32xf32>
    %82 = tpu.concatenate %75, %77, %79, %81 in 0 : vector<1x8x32xf32>, vector<1x8x32xf32>, vector<1x8x32xf32>, vector<1x8x32xf32> -> vector<4x8x32xf32>
    %cst_39 = arith.constant dense<0.000000e+00> : vector<4x8x8xf32>
    %83 = tpu.matmul %64, %73, %cst_39 {dimension_numbers = #tpu.dot_dimension_numbers<[2], [2], [1], [1], [0, 0, 0, 1, 1, 1], [0], [0]>} : vector<4x8x32xf32>, vector<4x8x32xf32>, vector<4x8x8xf32> -> vector<4x8x8xf32>
    %84 = vector.shape_cast %6 : vector<8x8xf32> to vector<1x8x8xf32>
    %85 = vector.broadcast %84 : vector<1x8x8xf32> to vector<4x8x8xf32>
    %86 = arith.addf %83, %85 : vector<4x8x8xf32>
    %cst_40 = arith.constant dense<0xFF800000> : vector<4x8xf32>
    %87 = vector.multi_reduction <maximumf>, %86, %cst_40 [2] : vector<4x8x8xf32> to vector<4x8xf32>
    %88 = vector.shape_cast %87 : vector<4x8xf32> to vector<4x8x1xf32>
    %89 = vector.broadcast %88 : vector<4x8x1xf32> to vector<4x8x8xf32>
    %90 = arith.subf %86, %89 : vector<4x8x8xf32>
    %91 = math.exp %90 : vector<4x8x8xf32>
    %cst_41 = arith.constant dense<0.000000e+00> : vector<4x8xf32>
    %92 = vector.multi_reduction <add>, %91, %cst_41 [2] : vector<4x8x8xf32> to vector<4x8xf32>
    %93 = vector.shape_cast %92 : vector<4x8xf32> to vector<4x8x1xf32>
    %94 = vector.broadcast %93 : vector<4x8x1xf32> to vector<4x8x8xf32>
    %95 = arith.divf %91, %94 : vector<4x8x8xf32>
    %cst_42 = arith.constant dense<0.000000e+00> : vector<4x8x32xf32>
    %96 = tpu.matmul %95, %82, %cst_42 {dimension_numbers = #tpu.dot_dimension_numbers<[2], [1], [1], [2], [0, 0, 0, 1, 1, 2], [0], [0]>} : vector<4x8x8xf32>, vector<4x8x32xf32>, vector<4x8x32xf32> -> vector<4x8x32xf32>
    %cst_43 = arith.constant dense<0.000000e+00> : vector<4x8x128xf32>
    %97 = tpu.matmul %96, %12, %cst_43 {dimension_numbers = #tpu.dot_dimension_numbers<[2], [1], [1], [2], [0, 0, 0, 1, 1, 2], [0], [0]>} : vector<4x8x32xf32>, vector<4x32x128xf32>, vector<4x8x128xf32> -> vector<4x8x128xf32>
    %cst_44 = arith.constant dense<0.000000e+00> : vector<8x128xf32>
    %98 = vector.multi_reduction <add>, %97, %cst_44 [0] : vector<4x8x128xf32> to vector<8x128xf32>
    %99 = arith.addf %0, %98 : vector<8x128xf32>
    %100 = vector.broadcast %24 : vector<1x128xf32> to vector<8x128xf32>
    %101 = arith.addf %99, %100 : vector<8x128xf32>
    %cst_45 = arith.constant dense<0.000000e+00> : vector<8xf32>
    %102 = vector.multi_reduction <add>, %101, %cst_45 [1] : vector<8x128xf32> to vector<8xf32>
    %103 = vector.shape_cast %102 : vector<8xf32> to vector<8x1xf32>
    %cst_46 = arith.constant 1.280000e+02 : f32
    %104 = vector.broadcast %cst_46 : f32 to vector<8x1xf32>
    %105 = arith.divf %103, %104 : vector<8x1xf32>
    %106 = vector.broadcast %105 : vector<8x1xf32> to vector<8x128xf32>
    %107 = arith.subf %101, %106 : vector<8x128xf32>
    %108 = arith.mulf %107, %107 : vector<8x128xf32>
    %cst_47 = arith.constant dense<0.000000e+00> : vector<8xf32>
    %109 = vector.multi_reduction <add>, %108, %cst_47 [1] : vector<8x128xf32> to vector<8xf32>
    %110 = vector.shape_cast %109 : vector<8xf32> to vector<8x1xf32>
    %cst_48 = arith.constant 1.280000e+02 : f32
    %111 = vector.broadcast %cst_48 : f32 to vector<8x1xf32>
    %112 = arith.divf %110, %111 : vector<8x1xf32>
    %113 = vector.broadcast %105 : vector<8x1xf32> to vector<8x128xf32>
    %114 = arith.subf %101, %113 : vector<8x128xf32>
    %cst_49 = arith.constant 9.99999974E-6 : f32
    %115 = vector.broadcast %cst_49 : f32 to vector<8x1xf32>
    %116 = arith.addf %112, %115 : vector<8x1xf32>
    %117 = math.rsqrt %116 : vector<8x1xf32>
    %118 = vector.broadcast %117 : vector<8x1xf32> to vector<8x128xf32>
    %119 = arith.mulf %114, %118 : vector<8x128xf32>
    %120 = vector.broadcast %20 : vector<1x128xf32> to vector<8x128xf32>
    %121 = arith.mulf %119, %120 : vector<8x128xf32>
    %122 = vector.broadcast %22 : vector<1x128xf32> to vector<8x128xf32>
    %123 = arith.addf %121, %122 : vector<8x128xf32>
    %cst_50 = arith.constant dense<0.000000e+00> : vector<8x512xf32>
    %124 = tpu.matmul %123, %10, %cst_50 {dimension_numbers = #tpu.dot_dimension_numbers<[1], [0], [0], [1], [0, 0, 1, 1], [], []>} : vector<8x128xf32>, vector<128x512xf32>, vector<8x512xf32> -> vector<8x512xf32>
    %125 = vector.broadcast %30 : vector<1x512xf32> to vector<8x512xf32>
    %126 = arith.addf %124, %125 : vector<8x512xf32>
    %cst_51 = arith.constant 1.702000e+00 : f32
    %127 = vector.broadcast %cst_51 : f32 to vector<8x512xf32>
    %128 = arith.mulf %127, %126 : vector<8x512xf32>
    %129 = arith.negf %128 : vector<8x512xf32>
    %130 = math.exp %129 : vector<8x512xf32>
    %cst_52 = arith.constant 1.000000e+00 : f32
    %131 = vector.broadcast %cst_52 : f32 to vector<8x512xf32>
    %132 = arith.addf %131, %130 : vector<8x512xf32>
    %133 = arith.divf %131, %132 : vector<8x512xf32>
    %134 = arith.mulf %126, %133 : vector<8x512xf32>
    %cst_53 = arith.constant dense<0.000000e+00> : vector<8x128xf32>
    %135 = tpu.matmul %134, %14, %cst_53 {dimension_numbers = #tpu.dot_dimension_numbers<[1], [0], [0], [1], [0, 0, 1, 1], [], []>} : vector<8x512xf32>, vector<512x128xf32>, vector<8x128xf32> -> vector<8x128xf32>
    %136 = arith.addf %101, %135 : vector<8x128xf32>
    %137 = vector.broadcast %26 : vector<1x128xf32> to vector<8x128xf32>
    %138 = arith.addf %136, %137 : vector<8x128xf32>
    %c1_54 = arith.constant 1 : index
    %c0_55 = arith.constant 0 : index
    %c0_56 = arith.constant 0 : index
    %139 = vector.load %arg2[%c1_54, %c0_55, %c0_56] : memref<2x128x896xf32, #tpu.memory_space<vmem>>, vector<1x128x384xf32>
    %140 = vector.shape_cast %139 : vector<1x128x384xf32> to vector<128x384xf32>
    %c1_57 = arith.constant 1 : index
    %c0_58 = arith.constant 0 : index
    %c384_59 = arith.constant 384 : index
    %141 = vector.load %arg2[%c1_57, %c0_58, %c384_59] : memref<2x128x896xf32, #tpu.memory_space<vmem>>, vector<1x128x512xf32>
    %142 = vector.shape_cast %141 : vector<1x128x512xf32> to vector<128x512xf32>
    %c1_60 = arith.constant 1 : index
    %c0_61 = arith.constant 0 : index
    %c0_62 = arith.constant 0 : index
    %c0_63 = arith.constant 0 : index
    %143 = vector.load %arg3[%c1_60, %c0_61, %c0_62, %c0_63] : memref<2x4x32x128xf32, #tpu.memory_space<vmem>>, vector<1x4x32x128xf32>
    %144 = vector.shape_cast %143 : vector<1x4x32x128xf32> to vector<4x32x128xf32>
    %c1_64 = arith.constant 1 : index
    %c0_65 = arith.constant 0 : index
    %c0_66 = arith.constant 0 : index
    %145 = vector.load %arg4[%c1_64, %c0_65, %c0_66] : memref<2x512x128xf32, #tpu.memory_space<vmem>>, vector<1x512x128xf32>
    %146 = vector.shape_cast %145 : vector<1x512x128xf32> to vector<512x128xf32>
    %c1_67 = arith.constant 1 : index
    %c0_68 = arith.constant 0 : index
    %c0_69 = arith.constant 0 : index
    %147 = vector.load %arg5[%c1_67, %c0_68, %c0_69] : memref<2x6x128xf32, #tpu.memory_space<vmem>>, vector<1x1x128xf32>
    %148 = vector.shape_cast %147 : vector<1x1x128xf32> to vector<1x128xf32>
    %c1_70 = arith.constant 1 : index
    %c1_71 = arith.constant 1 : index
    %c0_72 = arith.constant 0 : index
    %149 = vector.load %arg5[%c1_70, %c1_71, %c0_72] : memref<2x6x128xf32, #tpu.memory_space<vmem>>, vector<1x1x128xf32>
    %150 = vector.shape_cast %149 : vector<1x1x128xf32> to vector<1x128xf32>
    %c1_73 = arith.constant 1 : index
    %c2_74 = arith.constant 2 : index
    %c0_75 = arith.constant 0 : index
    %151 = vector.load %arg5[%c1_73, %c2_74, %c0_75] : memref<2x6x128xf32, #tpu.memory_space<vmem>>, vector<1x1x128xf32>
    %152 = vector.shape_cast %151 : vector<1x1x128xf32> to vector<1x128xf32>
    %c1_76 = arith.constant 1 : index
    %c3_77 = arith.constant 3 : index
    %c0_78 = arith.constant 0 : index
    %153 = vector.load %arg5[%c1_76, %c3_77, %c0_78] : memref<2x6x128xf32, #tpu.memory_space<vmem>>, vector<1x1x128xf32>
    %154 = vector.shape_cast %153 : vector<1x1x128xf32> to vector<1x128xf32>
    %c1_79 = arith.constant 1 : index
    %c4_80 = arith.constant 4 : index
    %c0_81 = arith.constant 0 : index
    %155 = vector.load %arg5[%c1_79, %c4_80, %c0_81] : memref<2x6x128xf32, #tpu.memory_space<vmem>>, vector<1x1x128xf32>
    %156 = vector.shape_cast %155 : vector<1x1x128xf32> to vector<1x128xf32>
    %c1_82 = arith.constant 1 : index
    %c5_83 = arith.constant 5 : index
    %c0_84 = arith.constant 0 : index
    %157 = vector.load %arg5[%c1_82, %c5_83, %c0_84] : memref<2x6x128xf32, #tpu.memory_space<vmem>>, vector<1x1x128xf32>
    %158 = vector.shape_cast %157 : vector<1x1x128xf32> to vector<1x128xf32>
    %c1_85 = arith.constant 1 : index
    %c0_86 = arith.constant 0 : index
    %c0_87 = arith.constant 0 : index
    %159 = vector.load %arg6[%c1_85, %c0_86, %c0_87] : memref<2x1x896xf32, #tpu.memory_space<vmem>>, vector<1x1x384xf32>
    %160 = vector.shape_cast %159 : vector<1x1x384xf32> to vector<1x384xf32>
    %c1_88 = arith.constant 1 : index
    %c0_89 = arith.constant 0 : index
    %c384_90 = arith.constant 384 : index
    %161 = vector.load %arg6[%c1_88, %c0_89, %c384_90] : memref<2x1x896xf32, #tpu.memory_space<vmem>>, vector<1x1x512xf32>
    %162 = vector.shape_cast %161 : vector<1x1x512xf32> to vector<1x512xf32>
    %cst_91 = arith.constant dense<0.000000e+00> : vector<8xf32>
    %163 = vector.multi_reduction <add>, %138, %cst_91 [1] : vector<8x128xf32> to vector<8xf32>
    %164 = vector.shape_cast %163 : vector<8xf32> to vector<8x1xf32>
    %cst_92 = arith.constant 1.280000e+02 : f32
    %165 = vector.broadcast %cst_92 : f32 to vector<8x1xf32>
    %166 = arith.divf %164, %165 : vector<8x1xf32>
    %167 = vector.broadcast %166 : vector<8x1xf32> to vector<8x128xf32>
    %168 = arith.subf %138, %167 : vector<8x128xf32>
    %169 = arith.mulf %168, %168 : vector<8x128xf32>
    %cst_93 = arith.constant dense<0.000000e+00> : vector<8xf32>
    %170 = vector.multi_reduction <add>, %169, %cst_93 [1] : vector<8x128xf32> to vector<8xf32>
    %171 = vector.shape_cast %170 : vector<8xf32> to vector<8x1xf32>
    %cst_94 = arith.constant 1.280000e+02 : f32
    %172 = vector.broadcast %cst_94 : f32 to vector<8x1xf32>
    %173 = arith.divf %171, %172 : vector<8x1xf32>
    %174 = vector.broadcast %166 : vector<8x1xf32> to vector<8x128xf32>
    %175 = arith.subf %138, %174 : vector<8x128xf32>
    %cst_95 = arith.constant 9.99999974E-6 : f32
    %176 = vector.broadcast %cst_95 : f32 to vector<8x1xf32>
    %177 = arith.addf %173, %176 : vector<8x1xf32>
    %178 = math.rsqrt %177 : vector<8x1xf32>
    %179 = vector.broadcast %178 : vector<8x1xf32> to vector<8x128xf32>
    %180 = arith.mulf %175, %179 : vector<8x128xf32>
    %181 = vector.broadcast %148 : vector<1x128xf32> to vector<8x128xf32>
    %182 = arith.mulf %180, %181 : vector<8x128xf32>
    %183 = vector.broadcast %150 : vector<1x128xf32> to vector<8x128xf32>
    %184 = arith.addf %182, %183 : vector<8x128xf32>
    %cst_96 = arith.constant dense<0.000000e+00> : vector<8x384xf32>
    %185 = tpu.matmul %184, %140, %cst_96 {dimension_numbers = #tpu.dot_dimension_numbers<[1], [0], [0], [1], [0, 0, 1, 1], [], []>} : vector<8x128xf32>, vector<128x384xf32>, vector<8x384xf32> -> vector<8x384xf32>
    %186 = vector.broadcast %160 : vector<1x384xf32> to vector<8x384xf32>
    %187 = arith.addf %185, %186 : vector<8x384xf32>
    %188 = vector.extract_strided_slice %187 {offsets = [0, 0], sizes = [8, 32], strides = [1, 1]} : vector<8x384xf32> to vector<8x32xf32>
    %189 = vector.shape_cast %188 : vector<8x32xf32> to vector<1x8x32xf32>
    %190 = vector.extract_strided_slice %187 {offsets = [0, 32], sizes = [8, 32], strides = [1, 1]} : vector<8x384xf32> to vector<8x32xf32>
    %191 = vector.shape_cast %190 : vector<8x32xf32> to vector<1x8x32xf32>
    %192 = vector.extract_strided_slice %187 {offsets = [0, 64], sizes = [8, 32], strides = [1, 1]} : vector<8x384xf32> to vector<8x32xf32>
    %193 = vector.shape_cast %192 : vector<8x32xf32> to vector<1x8x32xf32>
    %194 = vector.extract_strided_slice %187 {offsets = [0, 96], sizes = [8, 32], strides = [1, 1]} : vector<8x384xf32> to vector<8x32xf32>
    %195 = vector.shape_cast %194 : vector<8x32xf32> to vector<1x8x32xf32>
    %196 = tpu.concatenate %189, %191, %193, %195 in 0 : vector<1x8x32xf32>, vector<1x8x32xf32>, vector<1x8x32xf32>, vector<1x8x32xf32> -> vector<4x8x32xf32>
    %197 = vector.extract_strided_slice %187 {offsets = [0, 128], sizes = [8, 32], strides = [1, 1]} : vector<8x384xf32> to vector<8x32xf32>
    %198 = vector.shape_cast %197 : vector<8x32xf32> to vector<1x8x32xf32>
    %199 = vector.extract_strided_slice %187 {offsets = [0, 160], sizes = [8, 32], strides = [1, 1]} : vector<8x384xf32> to vector<8x32xf32>
    %200 = vector.shape_cast %199 : vector<8x32xf32> to vector<1x8x32xf32>
    %201 = vector.extract_strided_slice %187 {offsets = [0, 192], sizes = [8, 32], strides = [1, 1]} : vector<8x384xf32> to vector<8x32xf32>
    %202 = vector.shape_cast %201 : vector<8x32xf32> to vector<1x8x32xf32>
    %203 = vector.extract_strided_slice %187 {offsets = [0, 224], sizes = [8, 32], strides = [1, 1]} : vector<8x384xf32> to vector<8x32xf32>
    %204 = vector.shape_cast %203 : vector<8x32xf32> to vector<1x8x32xf32>
    %205 = tpu.concatenate %198, %200, %202, %204 in 0 : vector<1x8x32xf32>, vector<1x8x32xf32>, vector<1x8x32xf32>, vector<1x8x32xf32> -> vector<4x8x32xf32>
    %206 = vector.extract_strided_slice %187 {offsets = [0, 256], sizes = [8, 32], strides = [1, 1]} : vector<8x384xf32> to vector<8x32xf32>
    %207 = vector.shape_cast %206 : vector<8x32xf32> to vector<1x8x32xf32>
    %208 = vector.extract_strided_slice %187 {offsets = [0, 288], sizes = [8, 32], strides = [1, 1]} : vector<8x384xf32> to vector<8x32xf32>
    %209 = vector.shape_cast %208 : vector<8x32xf32> to vector<1x8x32xf32>
    %210 = vector.extract_strided_slice %187 {offsets = [0, 320], sizes = [8, 32], strides = [1, 1]} : vector<8x384xf32> to vector<8x32xf32>
    %211 = vector.shape_cast %210 : vector<8x32xf32> to vector<1x8x32xf32>
    %212 = vector.extract_strided_slice %187 {offsets = [0, 352], sizes = [8, 32], strides = [1, 1]} : vector<8x384xf32> to vector<8x32xf32>
    %213 = vector.shape_cast %212 : vector<8x32xf32> to vector<1x8x32xf32>
    %214 = tpu.concatenate %207, %209, %211, %213 in 0 : vector<1x8x32xf32>, vector<1x8x32xf32>, vector<1x8x32xf32>, vector<1x8x32xf32> -> vector<4x8x32xf32>
    %cst_97 = arith.constant dense<0.000000e+00> : vector<4x8x8xf32>
    %215 = tpu.matmul %196, %205, %cst_97 {dimension_numbers = #tpu.dot_dimension_numbers<[2], [2], [1], [1], [0, 0, 0, 1, 1, 1], [0], [0]>} : vector<4x8x32xf32>, vector<4x8x32xf32>, vector<4x8x8xf32> -> vector<4x8x8xf32>
    %216 = vector.shape_cast %6 : vector<8x8xf32> to vector<1x8x8xf32>
    %217 = vector.broadcast %216 : vector<1x8x8xf32> to vector<4x8x8xf32>
    %218 = arith.addf %215, %217 : vector<4x8x8xf32>
    %cst_98 = arith.constant dense<0xFF800000> : vector<4x8xf32>
    %219 = vector.multi_reduction <maximumf>, %218, %cst_98 [2] : vector<4x8x8xf32> to vector<4x8xf32>
    %220 = vector.shape_cast %219 : vector<4x8xf32> to vector<4x8x1xf32>
    %221 = vector.broadcast %220 : vector<4x8x1xf32> to vector<4x8x8xf32>
    %222 = arith.subf %218, %221 : vector<4x8x8xf32>
    %223 = math.exp %222 : vector<4x8x8xf32>
    %cst_99 = arith.constant dense<0.000000e+00> : vector<4x8xf32>
    %224 = vector.multi_reduction <add>, %223, %cst_99 [2] : vector<4x8x8xf32> to vector<4x8xf32>
    %225 = vector.shape_cast %224 : vector<4x8xf32> to vector<4x8x1xf32>
    %226 = vector.broadcast %225 : vector<4x8x1xf32> to vector<4x8x8xf32>
    %227 = arith.divf %223, %226 : vector<4x8x8xf32>
    %cst_100 = arith.constant dense<0.000000e+00> : vector<4x8x32xf32>
    %228 = tpu.matmul %227, %214, %cst_100 {dimension_numbers = #tpu.dot_dimension_numbers<[2], [1], [1], [2], [0, 0, 0, 1, 1, 2], [0], [0]>} : vector<4x8x8xf32>, vector<4x8x32xf32>, vector<4x8x32xf32> -> vector<4x8x32xf32>
    %cst_101 = arith.constant dense<0.000000e+00> : vector<4x8x128xf32>
    %229 = tpu.matmul %228, %144, %cst_101 {dimension_numbers = #tpu.dot_dimension_numbers<[2], [1], [1], [2], [0, 0, 0, 1, 1, 2], [0], [0]>} : vector<4x8x32xf32>, vector<4x32x128xf32>, vector<4x8x128xf32> -> vector<4x8x128xf32>
    %cst_102 = arith.constant dense<0.000000e+00> : vector<8x128xf32>
    %230 = vector.multi_reduction <add>, %229, %cst_102 [0] : vector<4x8x128xf32> to vector<8x128xf32>
    %231 = arith.addf %138, %230 : vector<8x128xf32>
    %232 = vector.broadcast %156 : vector<1x128xf32> to vector<8x128xf32>
    %233 = arith.addf %231, %232 : vector<8x128xf32>
    %cst_103 = arith.constant dense<0.000000e+00> : vector<8xf32>
    %234 = vector.multi_reduction <add>, %233, %cst_103 [1] : vector<8x128xf32> to vector<8xf32>
    %235 = vector.shape_cast %234 : vector<8xf32> to vector<8x1xf32>
    %cst_104 = arith.constant 1.280000e+02 : f32
    %236 = vector.broadcast %cst_104 : f32 to vector<8x1xf32>
    %237 = arith.divf %235, %236 : vector<8x1xf32>
    %238 = vector.broadcast %237 : vector<8x1xf32> to vector<8x128xf32>
    %239 = arith.subf %233, %238 : vector<8x128xf32>
    %240 = arith.mulf %239, %239 : vector<8x128xf32>
    %cst_105 = arith.constant dense<0.000000e+00> : vector<8xf32>
    %241 = vector.multi_reduction <add>, %240, %cst_105 [1] : vector<8x128xf32> to vector<8xf32>
    %242 = vector.shape_cast %241 : vector<8xf32> to vector<8x1xf32>
    %cst_106 = arith.constant 1.280000e+02 : f32
    %243 = vector.broadcast %cst_106 : f32 to vector<8x1xf32>
    %244 = arith.divf %242, %243 : vector<8x1xf32>
    %245 = vector.broadcast %237 : vector<8x1xf32> to vector<8x128xf32>
    %246 = arith.subf %233, %245 : vector<8x128xf32>
    %cst_107 = arith.constant 9.99999974E-6 : f32
    %247 = vector.broadcast %cst_107 : f32 to vector<8x1xf32>
    %248 = arith.addf %244, %247 : vector<8x1xf32>
    %249 = math.rsqrt %248 : vector<8x1xf32>
    %250 = vector.broadcast %249 : vector<8x1xf32> to vector<8x128xf32>
    %251 = arith.mulf %246, %250 : vector<8x128xf32>
    %252 = vector.broadcast %152 : vector<1x128xf32> to vector<8x128xf32>
    %253 = arith.mulf %251, %252 : vector<8x128xf32>
    %254 = vector.broadcast %154 : vector<1x128xf32> to vector<8x128xf32>
    %255 = arith.addf %253, %254 : vector<8x128xf32>
    %cst_108 = arith.constant dense<0.000000e+00> : vector<8x512xf32>
    %256 = tpu.matmul %255, %142, %cst_108 {dimension_numbers = #tpu.dot_dimension_numbers<[1], [0], [0], [1], [0, 0, 1, 1], [], []>} : vector<8x128xf32>, vector<128x512xf32>, vector<8x512xf32> -> vector<8x512xf32>
    %257 = vector.broadcast %162 : vector<1x512xf32> to vector<8x512xf32>
    %258 = arith.addf %256, %257 : vector<8x512xf32>
    %cst_109 = arith.constant 1.702000e+00 : f32
    %259 = vector.broadcast %cst_109 : f32 to vector<8x512xf32>
    %260 = arith.mulf %259, %258 : vector<8x512xf32>
    %261 = arith.negf %260 : vector<8x512xf32>
    %262 = math.exp %261 : vector<8x512xf32>
    %cst_110 = arith.constant 1.000000e+00 : f32
    %263 = vector.broadcast %cst_110 : f32 to vector<8x512xf32>
    %264 = arith.addf %263, %262 : vector<8x512xf32>
    %265 = arith.divf %263, %264 : vector<8x512xf32>
    %266 = arith.mulf %258, %265 : vector<8x512xf32>
    %cst_111 = arith.constant dense<0.000000e+00> : vector<8x128xf32>
    %267 = tpu.matmul %266, %146, %cst_111 {dimension_numbers = #tpu.dot_dimension_numbers<[1], [0], [0], [1], [0, 0, 1, 1], [], []>} : vector<8x512xf32>, vector<512x128xf32>, vector<8x128xf32> -> vector<8x128xf32>
    %268 = arith.addf %233, %267 : vector<8x128xf32>
    %269 = vector.broadcast %158 : vector<1x128xf32> to vector<8x128xf32>
    %270 = arith.addf %268, %269 : vector<8x128xf32>
    %c0_112 = arith.constant 0 : index
    %c0_113 = arith.constant 0 : index
    %271 = vector.load %arg7[%c0_112, %c0_113] : memref<2x128xf32, #tpu.memory_space<vmem>>, vector<1x128xf32>
    %c1_114 = arith.constant 1 : index
    %c0_115 = arith.constant 0 : index
    %272 = vector.load %arg7[%c1_114, %c0_115] : memref<2x128xf32, #tpu.memory_space<vmem>>, vector<1x128xf32>
    %cst_116 = arith.constant dense<0.000000e+00> : vector<8xf32>
    %273 = vector.multi_reduction <add>, %270, %cst_116 [1] : vector<8x128xf32> to vector<8xf32>
    %274 = vector.shape_cast %273 : vector<8xf32> to vector<8x1xf32>
    %cst_117 = arith.constant 1.280000e+02 : f32
    %275 = vector.broadcast %cst_117 : f32 to vector<8x1xf32>
    %276 = arith.divf %274, %275 : vector<8x1xf32>
    %277 = vector.broadcast %276 : vector<8x1xf32> to vector<8x128xf32>
    %278 = arith.subf %270, %277 : vector<8x128xf32>
    %279 = arith.mulf %278, %278 : vector<8x128xf32>
    %cst_118 = arith.constant dense<0.000000e+00> : vector<8xf32>
    %280 = vector.multi_reduction <add>, %279, %cst_118 [1] : vector<8x128xf32> to vector<8xf32>
    %281 = vector.shape_cast %280 : vector<8xf32> to vector<8x1xf32>
    %cst_119 = arith.constant 1.280000e+02 : f32
    %282 = vector.broadcast %cst_119 : f32 to vector<8x1xf32>
    %283 = arith.divf %281, %282 : vector<8x1xf32>
    %284 = vector.broadcast %276 : vector<8x1xf32> to vector<8x128xf32>
    %285 = arith.subf %270, %284 : vector<8x128xf32>
    %cst_120 = arith.constant 9.99999974E-6 : f32
    %286 = vector.broadcast %cst_120 : f32 to vector<8x1xf32>
    %287 = arith.addf %283, %286 : vector<8x1xf32>
    %288 = math.rsqrt %287 : vector<8x1xf32>
    %289 = vector.broadcast %288 : vector<8x1xf32> to vector<8x128xf32>
    %290 = arith.mulf %285, %289 : vector<8x128xf32>
    %291 = vector.broadcast %271 : vector<1x128xf32> to vector<8x128xf32>
    %292 = arith.mulf %290, %291 : vector<8x128xf32>
    %293 = vector.broadcast %272 : vector<1x128xf32> to vector<8x128xf32>
    %294 = arith.addf %292, %293 : vector<8x128xf32>
    %c0_121 = arith.constant 0 : index
    %c0_122 = arith.constant 0 : index
    %295 = vector.load %arg8[%c0_121, %c0_122] : memref<8x128xf32, #tpu.memory_space<vmem>>, vector<8x128xf32>
    tpu.vector_store %arg8[%c0_121, %c0_122], %294 {strides = array<i32>} : memref<8x128xf32, #tpu.memory_space<vmem>>, vector<8x128xf32>,
    return
  }
  func.func @transform_0(%arg0: i32) -> (i32, i32) {
    %c0_i32 = arith.constant 0 : i32
    %c0_i32_0 = arith.constant 0 : i32
    return %arg0, %c0_i32 : i32, i32
  }
  func.func @transform_1(%arg0: i32) -> (i32, i32, i32) {
    %c0_i32 = arith.constant 0 : i32
    %c0_i32_0 = arith.constant 0 : i32
    %c0_i32_1 = arith.constant 0 : i32
    %c0_i32_2 = arith.constant 0 : i32
    return %c0_i32, %c0_i32_0, %c0_i32_1 : i32, i32, i32
  }
  func.func @transform_2(%arg0: i32) -> (i32, i32, i32, i32) {
    %c0_i32 = arith.constant 0 : i32
    %c0_i32_0 = arith.constant 0 : i32
    %c0_i32_1 = arith.constant 0 : i32
    %c0_i32_2 = arith.constant 0 : i32
    %c0_i32_3 = arith.constant 0 : i32
    return %c0_i32, %c0_i32_0, %c0_i32_1, %c0_i32_2 : i32, i32, i32, i32
  }
  func.func @transform_3(%arg0: i32) -> (i32, i32, i32) {
    %c0_i32 = arith.constant 0 : i32
    %c0_i32_0 = arith.constant 0 : i32
    %c0_i32_1 = arith.constant 0 : i32
    %c0_i32_2 = arith.constant 0 : i32
    return %c0_i32, %c0_i32_0, %c0_i32_1 : i32, i32, i32
  }
  func.func @transform_4(%arg0: i32) -> (i32, i32, i32) {
    %c0_i32 = arith.constant 0 : i32
    %c0_i32_0 = arith.constant 0 : i32
    %c0_i32_1 = arith.constant 0 : i32
    %c0_i32_2 = arith.constant 0 : i32
    return %c0_i32, %c0_i32_0, %c0_i32_1 : i32, i32, i32
  }
  func.func @transform_5(%arg0: i32) -> (i32, i32, i32) {
    %c0_i32 = arith.constant 0 : i32
    %c0_i32_0 = arith.constant 0 : i32
    %c0_i32_1 = arith.constant 0 : i32
    %c0_i32_2 = arith.constant 0 : i32
    return %c0_i32, %c0_i32_0, %c0_i32_1 : i32, i32, i32
  }
  func.func @transform_6(%arg0: i32) -> (i32, i32) {
    %c0_i32 = arith.constant 0 : i32
    %c0_i32_0 = arith.constant 0 : i32
    %c0_i32_1 = arith.constant 0 : i32
    return %c0_i32, %c0_i32_0 : i32, i32
  }
  func.func @transform_7(%arg0: i32) -> (i32, i32) {
    %c0_i32 = arith.constant 0 : i32
    %c0_i32_0 = arith.constant 0 : i32
    return %arg0, %c0_i32 : i32, i32
  }
}

</mosaic_0001>

<llo_original>
// kernel: clip_encode_text.1
$region0: #{clip_encode_text.1}
  #allocation0 [shape = 'u32[]', space=smem, size = 0x4, offset = 0x4, fixed_abs, tag = 'smem constant byte address 0x4 - core index']
  #allocation1 [shape = 'u32[72,128]{1,0:T(1,128)}', space=vmem, size = 0x9000, scoped, tag = 'internal scratch']
  %s0 = inlined_call_operand.vmem [shape: f32[16,128], index: 0, kind: input, shape index: {}]
  %s1 = inlined_call_operand.hbm [shape: f32[2,128,896], index: 1, kind: input, shape index: {}]
  %s2 = inlined_call_operand.hbm [shape: f32[2,4,32,128], index: 2, kind: input, shape index: {}]
  %s3 = inlined_call_operand.hbm [shape: f32[2,512,128], index: 3, kind: input, shape index: {}]
  %s4 = inlined_call_operand.vmem [shape: f32[2,6,128], index: 4, kind: input, shape index: {}]
  %s5 = inlined_call_operand.vmem [shape: f32[2,1,896], index: 5, kind: input, shape index: {}]
  %s6 = inlined_call_operand.vmem [shape: f32[2,128], index: 6, kind: input, shape index: {}]
  %s7 = inlined_call_operand.vmem [shape: f32[16,128], index: 7, kind: output, shape index: {}]
  %s8 = sld [smem:[#allocation0]]
  $region73: #{clip_encode_text.1} parent=0
    _
  %s10 = ssub.s32 1, %s8
  %s11 = scalar_select 0, %s10, %s8
  $region1: #{clip_encode_text.1} parent=0
    #allocation2 [shape = 'u8[917504]{0}', space=vmem, size = 0xe0000, scoped, tag = 'input window, operand 1, single buffered']
    #allocation3 [shape = 's32[2]{0}', space=sflag, size = 0x8, scoped, tag = 'scoped memory for clip_encode_text.1']
    #allocation4 [shape = 'u8[131072]{0}', space=vmem, size = 0x20000, scoped, tag = 'input window, operand 2, single buffered']
    #allocation5 [shape = 's32[1]{0}', space=sflag, size = 0x4, scoped, tag = 'scoped memory for clip_encode_text.1']
    #allocation6 [shape = 'u8[524288]{0}', space=vmem, size = 0x80000, scoped, tag = 'input window, operand 3, single buffered']
    %12 = vsyncpa [#allocation3], 0
    %13 = vsyncpa [#allocation5], 0
    loop: start=0, step=1, limit=4
    $region2: #{clip_encode_text.1} parent=1 // loop_pre_header
      _
    $region3: #{clip_encode_text.1} parent=1 // loop_header
      %s15 = sphi 0, %s19
      %p16 = scmp.ge.s32.totalorder %s15, 4
      %s25 = sphi 0, %s27
      %s28 = sphi 0, %s25
      %s29 = sphi 0, %s28
      %s45 = sphi 0, %s29
      %s49 = sphi 0, %s49
      %s51 = sphi 0, %s49
      %s52 = sphi 0, %s51
      %s66 = sphi 0, %s52
      %s70 = sphi 0, %s70
      %s72 = sphi 0, %s70
      %s73 = sphi 0, %s72
      %s87 = sphi 0, %s73
      %s91 = sphi 0, %s91
      %s93 = sphi 0, %s91
      %s94 = sphi 0, %s93
      %s108 = sphi 0, %s94
      %s112 = sphi 0, %s112
      %s114 = sphi 0, %s112
      %s115 = sphi 0, %s114
      %s129 = sphi 0, %s115
      %s133 = sphi 0, %s133
      %s135 = sphi 0, %s133
      %s136 = sphi 0, %s135
      %s150 = sphi 0, %s136
      %s154 = sphi 0, %s154
      %s156 = sphi 0, %s154
      %s157 = sphi 0, %s156
      %s171 = sphi 0, %s157
      %s177 = sphi 0, %s179
      %s180 = sphi 0, %s177
      %s181 = sphi 0, %s180
      %s197 = sphi 0, %s181
    $region4: #{clip_encode_text.1} parent=1 // loop_header_branch
      %18 = sbr.rel (%p16) target = $region8
    $region5: #{clip_encode_text.1} parent=1 // loop_body
      %s20 = ssub.s32 %s15, 1
      %s21 = ssub.s32 %s15, 2
      %s22 = sadd.s32 %s15, 1
      %s23 = ssub.s32 %s15, %s22
      %p24 = scmp.eq.s32.totalorder %s23, 0
      %s26 = sadd.s32 %s25, 1
      %s27 = scalar_select %p24, %s25, %s26
      %p30 = pneg %p24
      %p31 = scmp.eq.s32.totalorder %s15, 1
      %p32 = por %p30, %p31
      %p33 = scmp.ne.s32.totalorder %s25, %s28
      %p34 = scmp.eq.s32.totalorder %s15, 0
      %p35 = por %p33, %p34
      %p36 = scmp.ne.s32.totalorder %s25, %s28
      %p37 = scmp.eq.s32.totalorder %s20, 1
      %p38 = por %p36, %p37
      %p39 = scmp.ne.s32.totalorder %s28, %s29
      %p40 = scmp.eq.s32.totalorder %s20, 0
      %p41 = por %p39, %p40
      %p42 = scmp.ne.s32.totalorder %s28, %s29
      %p43 = scmp.eq.s32.totalorder %s21, 1
      %p44 = por %p42, %p43
      %p46 = scmp.ne.s32.totalorder %s29, %s45
      %p47 = scmp.eq.s32.totalorder %s21, 0
      %p48 = por %p46, %p47
      %s50 = sadd.s32 %s49, 1
      %p53 = scmp.eq.s32.totalorder %s15, 1
      %p54 = scmp.ne.s32.totalorder %s49, %s51
      %p55 = scmp.eq.s32.totalorder %s15, 0
      %p56 = por %p54, %p55
      %p57 = scmp.ne.s32.totalorder %s49, %s51
      %p58 = scmp.eq.s32.totalorder %s20, 1
      %p59 = por %p57, %p58
      %p60 = scmp.ne.s32.totalorder %s51, %s52
      %p61 = scmp.eq.s32.totalorder %s20, 0
      %p62 = por %p60, %p61
      %p63 = scmp.ne.s32.totalorder %s51, %s52
      %p64 = scmp.eq.s32.totalorder %s21, 1
      %p65 = por %p63, %p64
      %p67 = scmp.ne.s32.totalorder %s52, %s66
      %p68 = scmp.eq.s32.totalorder %s21, 0
      %p69 = por %p67, %p68
      %s71 = sadd.s32 %s70, 1
      %p74 = scmp.eq.s32.totalorder %s15, 1
      %p75 = scmp.ne.s32.totalorder %s70, %s72
      %p76 = scmp.eq.s32.totalorder %s15, 0
      %p77 = por %p75, %p76
      %p78 = scmp.ne.s32.totalorder %s70, %s72
      %p79 = scmp.eq.s32.totalorder %s20, 1
      %p80 = por %p78, %p79
      %p81 = scmp.ne.s32.totalorder %s72, %s73
      %p82 = scmp.eq.s32.totalorder %s20, 0
      %p83 = por %p81, %p82
      %p84 = scmp.ne.s32.totalorder %s72, %s73
      %p85 = scmp.eq.s32.totalorder %s21, 1
      %p86 = por %p84, %p85
      %p88 = scmp.ne.s32.totalorder %s73, %s87
      %p89 = scmp.eq.s32.totalorder %s21, 0
      %p90 = por %p88, %p89
      %s92 = sadd.s32 %s91, 1
      %p95 = scmp.eq.s32.totalorder %s15, 1
      %p96 = scmp.ne.s32.totalorder %s91, %s93
      %p97 = scmp.eq.s32.totalorder %s15, 0
      %p98 = por %p96, %p97
      %p99 = scmp.ne.s32.totalorder %s91, %s93
      %p100 = scmp.eq.s32.totalorder %s20, 1
      %p101 = por %p99, %p100
      %p102 = scmp.ne.s32.totalorder %s93, %s94
      %p103 = scmp.eq.s32.totalorder %s20, 0
      %p104 = por %p102, %p103
      %p105 = scmp.ne.s32.totalorder %s93, %s94
      %p106 = scmp.eq.s32.totalorder %s21, 1
      %p107 = por %p105, %p106
      %p109 = scmp.ne.s32.totalorder %s94, %s108
      %p110 = scmp.eq.s32.totalorder %s21, 0
      %p111 = por %p109, %p110
      %s113 = sadd.s32 %s112, 1
      %p116 = scmp.eq.s32.totalorder %s15, 1
      %p117 = scmp.ne.s32.totalorder %s112, %s114
      %p118 = scmp.eq.s32.totalorder %s15, 0
      %p119 = por %p117, %p118
      %p120 = scmp.ne.s32.totalorder %s112, %s114
      %p121 = scmp.eq.s32.totalorder %s20, 1
      %p122 = por %p120, %p121
      %p123 = scmp.ne.s32.totalorder %s114, %s115
      %p124 = scmp.eq.s32.totalorder %s20, 0
      %p125 = por %p123, %p124
      %p126 = scmp.ne.s32.totalorder %s114, %s115
      %p127 = scmp.eq.s32.totalorder %s21, 1
      %p128 = por %p126, %p127
      %p130 = scmp.ne.s32.totalorder %s115, %s129
      %p131 = scmp.eq.s32.totalorder %s21, 0
      %p132 = por %p130, %p131
      %s134 = sadd.s32 %s133, 1
      %p137 = scmp.eq.s32.totalorder %s15, 1
      %p138 = scmp.ne.s32.totalorder %s133, %s135
      %p139 = scmp.eq.s32.totalorder %s15, 0
      %p140 = por %p138, %p139
      %p141 = scmp.ne.s32.totalorder %s133, %s135
      %p142 = scmp.eq.s32.totalorder %s20, 1
      %p143 = por %p141, %p142
      %p144 = scmp.ne.s32.totalorder %s135, %s136
      %p145 = scmp.eq.s32.totalorder %s20, 0
      %p146 = por %p144, %p145
      %p147 = scmp.ne.s32.totalorder %s135, %s136
      %p148 = scmp.eq.s32.totalorder %s21, 1
      %p149 = por %p147, %p148
      %p151 = scmp.ne.s32.totalorder %s136, %s150
      %p152 = scmp.eq.s32.totalorder %s21, 0
      %p153 = por %p151, %p152
      %s155 = sadd.s32 %s154, 1
      %p158 = scmp.eq.s32.totalorder %s15, 1
      %p159 = scmp.ne.s32.totalorder %s154, %s156
      %p160 = scmp.eq.s32.totalorder %s15, 0
      %p161 = por %p159, %p160
      %p162 = scmp.ne.s32.totalorder %s154, %s156
      %p163 = scmp.eq.s32.totalorder %s20, 1
      %p164 = por %p162, %p163
      %p165 = scmp.ne.s32.totalorder %s156, %s157
      %p166 = scmp.eq.s32.totalorder %s20, 0
      %p167 = por %p165, %p166
      %p168 = scmp.ne.s32.totalorder %s156, %s157
      %p169 = scmp.eq.s32.totalorder %s21, 1
      %p170 = por %p168, %p169
      %p172 = scmp.ne.s32.totalorder %s157, %s171
      %p173 = scmp.eq.s32.totalorder %s21, 0
      %p174 = por %p172, %p173
      %s175 = ssub.s32 %s15, %s22
      %p176 = scmp.eq.s32.totalorder %s175, 0
      %s178 = sadd.s32 %s177, 1
      %s179 = scalar_select %p176, %s177, %s178
      %p182 = pneg %p176
      %p183 = scmp.eq.s32.totalorder %s15, 1
      %p184 = por %p182, %p183
      %p185 = scmp.ne.s32.totalorder %s177, %s180
      %p186 = scmp.eq.s32.totalorder %s15, 0
      %p187 = por %p185, %p186
      %p188 = scmp.ne.s32.totalorder %s177, %s180
      %p189 = scmp.eq.s32.totalorder %s20, 1
      %p190 = por %p188, %p189
      %p191 = scmp.ne.s32.totalorder %s180, %s181
      %p192 = scmp.eq.s32.totalorder %s20, 0
      %p193 = por %p191, %p192
      %p194 = scmp.ne.s32.totalorder %s180, %s181
      %p195 = scmp.eq.s32.totalorder %s21, 1
      %p196 = por %p194, %p195
      %p198 = scmp.ne.s32.totalorder %s181, %s197
      %p199 = scmp.eq.s32.totalorder %s21, 0
      %p200 = por %p198, %p199
      %p201 = scmp.le.s32.totalorder 1, %s15
      %p202 = scmp.lt.s32.totalorder %s15, 3
      %p203 = pnand %p201, %p202
      %p204 = pneg %p203
      // Predicated region
      $region9: #{clip_encode_text.1} parent=5 // pred_check
        _
      $region10: #{clip_encode_text.1} parent=5 // pred_check_branch
        %206 = sbr.rel (%p203) target = $region12
      $region11: #{clip_encode_text.1} parent=5 // pred_region
        %s207 = ssub.s32 %s15, 1
        // Predicated region
        $region13: #{clip_encode_text.1} parent=11 // pred_check
          %p208 = pneg %p62
        $region14: #{clip_encode_text.1} parent=11 // pred_check_branch
          %210 = sbr.rel (%p208) target = $region16
        $region15: #{clip_encode_text.1} parent=11 // pred_region
          %212 = vsyncadd [#allocation3], 0
          %s213 = sshll.u32 %s1, 4
          %s214 = int_to_ptr.hbm [resolvable:$true] %s213
          %s215 = sshll.u32 [#allocation2], 4
          %s216 = int_to_ptr.vmem [resolvable:$true] %s215
          %221 = dma.hbm_to_vmem [thread:$0]  %s214, 28672, %s216, [#allocation3], 896, 896, 56
        $region16: #{clip_encode_text.1} parent=11 // pred_fallthru
          _
        // Predicated region
        $region17: #{clip_encode_text.1} parent=11 // pred_check
          %p222 = pneg %p83
        $region18: #{clip_encode_text.1} parent=11 // pred_check_branch
          %224 = sbr.rel (%p222) target = $region20
        $region19: #{clip_encode_text.1} parent=11 // pred_region
          %226 = vsyncadd [#allocation5], 0
          %s227 = sshll.u32 %s2, 4
          %s228 = int_to_ptr.hbm [resolvable:$true] %s227
          %s229 = sshll.u32 [#allocation4], 4
          %s230 = int_to_ptr.vmem [resolvable:$true] %s229
          %235 = dma.hbm_to_vmem [thread:$0]  %s228, 4096, %s230, [#allocation5], 128, 128, 8
        $region20: #{clip_encode_text.1} parent=11 // pred_fallthru
          _
        // Predicated region
        $region21: #{clip_encode_text.1} parent=11 // pred_check
          %p236 = pneg %p104
        $region22: #{clip_encode_text.1} parent=11 // pred_check_branch
          %238 = sbr.rel (%p236) target = $region24
        $region23: #{clip_encode_text.1} parent=11 // pred_region
          %240 = vsyncadd [#allocation5], 0
          %s241 = sshll.u32 %s3, 4
          %s242 = int_to_ptr.hbm [resolvable:$true] %s241
          %s243 = sshll.u32 [#allocation6], 4
          %s244 = int_to_ptr.vmem [resolvable:$true] %s243
          %249 = dma.hbm_to_vmem [thread:$0]  %s242, 16384, %s244, [#allocation5], 128, 128, 8
        $region24: #{clip_encode_text.1} parent=11 // pred_fallthru
          _
        // Predicated region
        $region25: #{clip_encode_text.1} parent=11 // pred_check
          %p250 = pneg %p125
        $region26: #{clip_encode_text.1} parent=11 // pred_check_branch
          %252 = sbr.rel (%p250) target = $region28
        $region27: #{clip_encode_text.1} parent=11 // pred_region
          _
        $region28: #{clip_encode_text.1} parent=11 // pred_fallthru
          _
        // Predicated region
        $region29: #{clip_encode_text.1} parent=11 // pred_check
          %p253 = pneg %p146
        $region30: #{clip_encode_text.1} parent=11 // pred_check_branch
          %255 = sbr.rel (%p253) target = $region32
        $region31: #{clip_encode_text.1} parent=11 // pred_region
          _
        $region32: #{clip_encode_text.1} parent=11 // pred_fallthru
          _
        // Predicated region
        $region33: #{clip_encode_text.1} parent=11 // pred_check
          %p256 = pneg %p167
        $region34: #{clip_encode_text.1} parent=11 // pred_check_branch
          %258 = sbr.rel (%p256) target = $region36
        $region35: #{clip_encode_text.1} parent=11 // pred_region
          _
        $region36: #{clip_encode_text.1} parent=11 // pred_fallthru
          _
      $region12: #{clip_encode_text.1} parent=5 // pred_fallthru
        _
      %p259 = scmp.lt.s32.totalorder %s15, 2
      // Predicated region
      $region37: #{clip_encode_text.1} parent=5 // pred_check
        %p260 = pneg %p259
      $region38: #{clip_encode_text.1} parent=5 // pred_check_branch
        %262 = sbr.rel (%p260) target = $region40
      $region39: #{clip_encode_text.1} parent=5 // pred_region
        // Predicated region
        $region41: #{clip_encode_text.1} parent=39 // pred_check
          %p263 = pneg %p35
        $region42: #{clip_encode_text.1} parent=39 // pred_check_branch
          %265 = sbr.rel (%p263) target = $region44
        $region43: #{clip_encode_text.1} parent=39 // pred_region
          %p266 = scmp.lt.s32.totalorder %s15, 1
          %s267 = scalar_select %p266, %s15, 1
          %s268 = smul.addr %s267, 8
          %s269 = scalar_lea.vmem %s0, %s268
        $region44: #{clip_encode_text.1} parent=39 // pred_fallthru
          _
      $region40: #{clip_encode_text.1} parent=5 // pred_fallthru
        _
      %p270 = scmp.le.s32.totalorder 1, %s15
      %p271 = scmp.lt.s32.totalorder %s15, 3
      %p272 = pnand %p270, %p271
      %p273 = pneg %p272
      // Predicated region
      $region45: #{clip_encode_text.1} parent=5 // pred_check
        _
      $region46: #{clip_encode_text.1} parent=5 // pred_check_branch
        %275 = sbr.rel (%p272) target = $region48
      $region47: #{clip_encode_text.1} parent=5 // pred_region
        %s276 = ssub.s32 %s15, 1
        // Predicated region
        $region49: #{clip_encode_text.1} parent=47 // pred_check
          %p277 = pneg %p62
        $region50: #{clip_encode_text.1} parent=47 // pred_check_branch
          %279 = sbr.rel (%p277) target = $region52
        $region51: #{clip_encode_text.1} parent=47 // pred_region
          %281 = dma.done [#allocation3], 28672
        $region52: #{clip_encode_text.1} parent=47 // pred_fallthru
          _
        // Predicated region
        $region53: #{clip_encode_text.1} parent=47 // pred_check
          %p282 = pneg %p83
        $region54: #{clip_encode_text.1} parent=47 // pred_check_branch
          %284 = sbr.rel (%p282) target = $region56
        $region55: #{clip_encode_text.1} parent=47 // pred_region
          %286 = dma.done [#allocation5], 4096
        $region56: #{clip_encode_text.1} parent=47 // pred_fallthru
          _
        // Predicated region
        $region57: #{clip_encode_text.1} parent=47 // pred_check
          %p287 = pneg %p104
        $region58: #{clip_encode_text.1} parent=47 // pred_check_branch
          %289 = sbr.rel (%p287) target = $region60
        $region59: #{clip_encode_text.1} parent=47 // pred_region
          %291 = dma.done [#allocation5], 16384
        $region60: #{clip_encode_text.1} parent=47 // pred_fallthru
          _
        %p292 = scmp.lt.s32.totalorder %s20, 1
        %s293 = scalar_select %p292, %s20, 1
        %s294 = smul.addr %s293, 8
        %s295 = scalar_lea.vmem %s0, %s294
        %p296 = pneg %p41
        %p297 = pneg %p38
        %p298 = pneg %p62
        %p299 = pneg %p59
        %p300 = pneg %p83
        %p301 = pneg %p80
        %p302 = pneg %p104
        %p303 = pneg %p101
        %p304 = pneg %p125
        %p305 = pneg %p122
        %p306 = pneg %p146
        %p307 = pneg %p143
        %p308 = pneg %p167
        %p309 = pneg %p164
        %p310 = pneg %p193
        %p311 = pneg %p190
        %p312 = scmp.lt.s32.totalorder %s20, 1
        %s313 = scalar_select %p312, %s20, 1
        %s314 = smul.addr %s313, 8
        %s315 = scalar_lea.vmem %s7, %s314
        %p316 = scmp.lt.s32.totalorder %s20, 1
        %s317 = scalar_select %p316, %s20, 1
        %s318 = smul.addr %s317, 8
        %s319 = scalar_lea.vmem %s0, %s318
        %p320 = scmp.lt.s32.totalorder %s20, 1
        %s321 = scalar_select %p320, %s20, 1
        %s322 = smul.addr %s321, 8
        %s323 = scalar_lea.vmem %s7, %s322
        %v324 = vld [vmem:[%s319] sm:$0xff]
        %v325 = vlaneseq
        %v326 = vshrl.u32 %v325, 7
        %v327 = vlaneseq
        %v328 = vand.u32 %v327, 127
        %vm329 = vcmp.le.s32.totalorder %v328, %v326
        %v330 = vsel %vm329, 0.0, -1e+30
        %v331 = vld [vmem:[#allocation2] sm:$0xff]
        %v332 = vld [vmem:[#allocation2 + $0x8] sm:$0xff]
        %v333 = vld [vmem:[#allocation2 + $0x10] sm:$0xff]
        %v334 = vld [vmem:[#allocation2 + $0x38] sm:$0xff]
        %v335 = vld [vmem:[#allocation2 + $0x40] sm:$0xff]
        %v336 = vld [vmem:[#allocation2 + $0x48] sm:$0xff]
        %v337 = vld [vmem:[#allocation2 + $0x70] sm:$0xff]
        %v338 = vld [vmem:[#allocation2 + $0x78] sm:$0xff]
        %v339 = vld [vmem:[#allocation2 + $0x80] sm:$0xff]
        %v340 = vld [vmem:[#allocation2 + $0xa8] sm:$0xff]
        %v341 = vld [vmem:[#allocation2 + $0xb0] sm:$0xff]
        %v342 = vld [vmem:[#allocation2 + $0xb8] sm:$0xff]
        %v343 = vld [vmem:[#allocation2 + $0xe0] sm:$0xff]
        %v344 = vld [vmem:[#allocation2 + $0xe8] sm:$0xff]
        %v345 = vld [vmem:[#allocation2 + $0xf0] sm:$0xff]
        %v346 = vld [vmem:[#allocation2 + $0x118] sm:$0xff]
        %v347 = vld [vmem:[#allocation2 + $0x120] sm:$0xff]
        %v348 = vld [vmem:[#allocation2 + $0x128] sm:$0xff]
        %v349 = vld [vmem:[#allocation2 + $0x150] sm:$0xff]
        %v350 = vld [vmem:[#allocation2 + $0x158] sm:$0xff]
        %v351 = vld [vmem:[#allocation2 + $0x160] sm:$0xff]
        %v352 = vld [vmem:[#allocation2 + $0x188] sm:$0xff]
        %v353 = vld [vmem:[#allocation2 + $0x190] sm:$0xff]
        %v354 = vld [vmem:[#allocation2 + $0x198] sm:$0xff]
        %v355 = vld [vmem:[#allocation2 + $0x1c0] sm:$0xff]
        %v356 = vld [vmem:[#allocation2 + $0x1c8] sm:$0xff]
        %v357 = vld [vmem:[#allocation2 + $0x1d0] sm:$0xff]
        %v358 = vld [vmem:[#allocation2 + $0x1f8] sm:$0xff]
        %v359 = vld [vmem:[#allocation2 + $0x200] sm:$0xff]
        %v360 = vld [vmem:[#allocation2 + $0x208] sm:$0xff]
        %v361 = vld [vmem:[#allocation2 + $0x230] sm:$0xff]
        %v362 = vld [vmem:[#allocation2 + $0x238] sm:$0xff]
        %v363 = vld [vmem:[#allocation2 + $0x240] sm:$0xff]
        %v364 = vld [vmem:[#allocation2 + $0x268] sm:$0xff]
        %v365 = vld [vmem:[#allocation2 + $0x270] sm:$0xff]
        %v366 = vld [vmem:[#allocation2 + $0x278] sm:$0xff]
        %v367 = vld [vmem:[#allocation2 + $0x2a0] sm:$0xff]
        %v368 = vld [vmem:[#allocation2 + $0x2a8] sm:$0xff]
        %v369 = vld [vmem:[#allocation2 + $0x2b0] sm:$0xff]
        %v370 = vld [vmem:[#allocation2 + $0x2d8] sm:$0xff]
        %v371 = vld [vmem:[#allocation2 + $0x2e0] sm:$0xff]
        %v372 = vld [vmem:[#allocation2 + $0x2e8] sm:$0xff]
        %v373 = vld [vmem:[#allocation2 + $0x310] sm:$0xff]
        %v374 = vld [vmem:[#allocation2 + $0x318] sm:$0xff]
        %v375 = vld [vmem:[#allocation2 + $0x320] sm:$0xff]
        %v376 = vld [vmem:[#allocation2 + $0x348] sm:$0xff]
        %v377 = vld [vmem:[#allocation2 + $0x350] sm:$0xff]
        %v378 = vld [vmem:[#allocation2 + $0x358] sm:$0xff]
        %v379 = vld [vmem:[#allocation2 + $0x18] sm:$0xff]
        %v380 = vld [vmem:[#allocation2 + $0x20] sm:$0xff]
        %v381 = vld [vmem:[#allocation2 + $0x28] sm:$0xff]
        %v382 = vld [vmem:[#allocation2 + $0x30] sm:$0xff]
        %v383 = vld [vmem:[#allocation2 + $0x50] sm:$0xff]
        %v384 = vld [vmem:[#allocation2 + $0x58] sm:$0xff]
        %v385 = vld [vmem:[#allocation2 + $0x60] sm:$0xff]
        %v386 = vld [vmem:[#allocation2 + $0x68] sm:$0xff]
        %v387 = vld [vmem:[#allocation2 + $0x88] sm:$0xff]
        %v388 = vld [vmem:[#allocation2 + $0x90] sm:$0xff]
        %v389 = vld [vmem:[#allocation2 + $0x98] sm:$0xff]
        %v390 = vld [vmem:[#allocation2 + $0xa0] sm:$0xff]
        %v391 = vld [vmem:[#allocation2 + $0xc0] sm:$0xff]
        %v392 = vld [vmem:[#allocation2 + $0xc8] sm:$0xff]
        %v393 = vld [vmem:[#allocation2 + $0xd0] sm:$0xff]
        %v394 = vld [vmem:[#allocation2 + $0xd8] sm:$0xff]
        %v395 = vld [vmem:[#allocation2 + $0xf8] sm:$0xff]
        %v396 = vld [vmem:[#allocation2 + $0x100] sm:$0xff]
        %v397 = vld [vmem:[#allocation2 + $0x108] sm:$0xff]
        %v398 = vld [vmem:[#allocation2 + $0x110] sm:$0xff]
        %v399 = vld [vmem:[#allocation2 + $0x130] sm:$0xff]
        %v400 = vld [vmem:[#allocation2 + $0x138] sm:$0xff]
        %v401 = vld [vmem:[#allocation2 + $0x140] sm:$0xff]
        %v402 = vld [vmem:[#allocation2 + $0x148] sm:$0xff]
        %v403 = vld [vmem:[#allocation2 + $0x168] sm:$0xff]
        %v404 = vld [vmem:[#allocation2 + $0x170] sm:$0xff]
        %v405 = vld [vmem:[#allocation2 + $0x178] sm:$0xff]
        %v406 = vld [vmem:[#allocation2 + $0x180] sm:$0xff]
        %v407 = vld [vmem:[#allocation2 + $0x1a0] sm:$0xff]
        %v408 = vld [vmem:[#allocation2 + $0x1a8] sm:$0xff]
        %v409 = vld [vmem:[#allocation2 + $0x1b0] sm:$0xff]
        %v410 = vld [vmem:[#allocation2 + $0x1b8] sm:$0xff]
        %v411 = vld [vmem:[#allocation2 + $0x1d8] sm:$0xff]
        %v412 = vld [vmem:[#allocation2 + $0x1e0] sm:$0xff]
        %v413 = vld [vmem:[#allocation2 + $0x1e8] sm:$0xff]
        %v414 = vld [vmem:[#allocation2 + $0x1f0] sm:$0xff]
        %v415 = vld [vmem:[#allocation2 + $0x210] sm:$0xff]
        %v416 = vld [vmem:[#allocation2 + $0x218] sm:$0xff]
        %v417 = vld [vmem:[#allocation2 + $0x220] sm:$0xff]
        %v418 = vld [vmem:[#allocation2 + $0x228] sm:$0xff]
        %v419 = vld [vmem:[#allocation2 + $0x248] sm:$0xff]
        %v420 = vld [vmem:[#allocation2 + $0x250] sm:$0xff]
        %v421 = vld [vmem:[#allocation2 + $0x258] sm:$0xff]
        %v422 = vld [vmem:[#allocation2 + $0x260] sm:$0xff]
        %v423 = vld [vmem:[#allocation2 + $0x280] sm:$0xff]
        %v424 = vld [vmem:[#allocation2 + $0x288] sm:$0xff]
        %v425 = vld [vmem:[#allocation2 + $0x290] sm:$0xff]
        %v426 = vld [vmem:[#allocation2 + $0x298] sm:$0xff]
        %v427 = vld [vmem:[#allocation2 + $0x2b8] sm:$0xff]
        %v428 = vld [vmem:[#allocation2 + $0x2c0] sm:$0xff]
        %v429 = vld [vmem:[#allocation2 + $0x2c8] sm:$0xff]
        %v430 = vld [vmem:[#allocation2 + $0x2d0] sm:$0xff]
        %v431 = vld [vmem:[#allocation2 + $0x2f0] sm:$0xff]
        %v432 = vld [vmem:[#allocation2 + $0x2f8] sm:$0xff]
        %v433 = vld [vmem:[#allocation2 + $0x300] sm:$0xff]
        %v434 = vld [vmem:[#allocation2 + $0x308] sm:$0xff]
        %v435 = vld [vmem:[#allocation2 + $0x328] sm:$0xff]
        %v436 = vld [vmem:[#allocation2 + $0x330] sm:$0xff]
        %v437 = vld [vmem:[#allocation2 + $0x338] sm:$0xff]
        %v438 = vld [vmem:[#allocation2 + $0x340] sm:$0xff]
        %v439 = vld [vmem:[#allocation2 + $0x360] sm:$0xff]
        %v440 = vld [vmem:[#allocation2 + $0x368] sm:$0xff]
        %v441 = vld [vmem:[#allocation2 + $0x370] sm:$0xff]
        %v442 = vld [vmem:[#allocation2 + $0x378] sm:$0xff]
        %v443 = vld [vmem:[#allocation4] sm:$0xff]
        %v444 = vld [vmem:[#allocation4 + $0x8] sm:$0xff]
        %v445 = vld [vmem:[#allocation4 + $0x10] sm:$0xff]
        %v446 = vld [vmem:[#allocation4 + $0x18] sm:$0xff]
        %v447 = vld [vmem:[#allocation4 + $0x20] sm:$0xff]
        %v448 = vld [vmem:[#allocation4 + $0x28] sm:$0xff]
        %v449 = vld [vmem:[#allocation4 + $0x30] sm:$0xff]
        %v450 = vld [vmem:[#allocation4 + $0x38] sm:$0xff]
        %v451 = vld [vmem:[#allocation4 + $0x40] sm:$0xff]
        %v452 = vld [vmem:[#allocation4 + $0x48] sm:$0xff]
        %v453 = vld [vmem:[#allocation4 + $0x50] sm:$0xff]
        %v454 = vld [vmem:[#allocation4 + $0x58] sm:$0xff]
        %v455 = vld [vmem:[#allocation4 + $0x60] sm:$0xff]
        %v456 = vld [vmem:[#allocation4 + $0x68] sm:$0xff]
        %v457 = vld [vmem:[#allocation4 + $0x70] sm:$0xff]
        %v458 = vld [vmem:[#allocation4 + $0x78] sm:$0xff]
        %v459 = vld [vmem:[#allocation6] sm:$0xff]
        %v460 = vld [vmem:[#allocation6 + $0x8] sm:$0xff]
        %v461 = vld [vmem:[#allocation6 + $0x10] sm:$0xff]
        %v462 = vld [vmem:[#allocation6 + $0x18] sm:$0xff]
        %v463 = vld [vmem:[#allocation6 + $0x20] sm:$0xff]
        %v464 = vld [vmem:[#allocation6 + $0x28] sm:$0xff]
        %v465 = vld [vmem:[#allocation6 + $0x30] sm:$0xff]
        %v466 = vld [vmem:[#allocation6 + $0x38] sm:$0xff]
        %v467 = vld [vmem:[#allocation6 + $0x40] sm:$0xff]
        %v468 = vld [vmem:[#allocation6 + $0x48] sm:$0xff]
        %v469 = vld [vmem:[#allocation6 + $0x50] sm:$0xff]
        %v470 = vld [vmem:[#allocation6 + $0x58] sm:$0xff]
        %v471 = vld [vmem:[#allocation6 + $0x60] sm:$0xff]
        %v472 = vld [vmem:[#allocation6 + $0x68] sm:$0xff]
        %v473 = vld [vmem:[#allocation6 + $0x70] sm:$0xff]
        %v474 = vld [vmem:[#allocation6 + $0x78] sm:$0xff]
        %v475 = vld [vmem:[#allocation6 + $0x80] sm:$0xff]
        %v476 = vld [vmem:[#allocation6 + $0x88] sm:$0xff]
        %v477 = vld [vmem:[#allocation6 + $0x90] sm:$0xff]
        %v478 = vld [vmem:[#allocation6 + $0x98] sm:$0xff]
        %v479 = vld [vmem:[#allocation6 + $0xa0] sm:$0xff]
        %v480 = vld [vmem:[#allocation6 + $0xa8] sm:$0xff]
        %v481 = vld [vmem:[#allocation6 + $0xb0] sm:$0xff]
        %v482 = vld [vmem:[#allocation6 + $0xb8] sm:$0xff]
        %v483 = vld [vmem:[#allocation6 + $0xc0] sm:$0xff]
        %v484 = vld [vmem:[#allocation6 + $0xc8] sm:$0xff]
        %v485 = vld [vmem:[#allocation6 + $0xd0] sm:$0xff]
        %v486 = vld [vmem:[#allocation6 + $0xd8] sm:$0xff]
        %v487 = vld [vmem:[#allocation6 + $0xe0] sm:$0xff]
        %v488 = vld [vmem:[#allocation6 + $0xe8] sm:$0xff]
        %v489 = vld [vmem:[#allocation6 + $0xf0] sm:$0xff]
        %v490 = vld [vmem:[#allocation6 + $0xf8] sm:$0xff]
        %v491 = vld [vmem:[#allocation6 + $0x100] sm:$0xff]
        %v492 = vld [vmem:[#allocation6 + $0x108] sm:$0xff]
        %v493 = vld [vmem:[#allocation6 + $0x110] sm:$0xff]
        %v494 = vld [vmem:[#allocation6 + $0x118] sm:$0xff]
        %v495 = vld [vmem:[#allocation6 + $0x120] sm:$0xff]
        %v496 = vld [vmem:[#allocation6 + $0x128] sm:$0xff]
        %v497 = vld [vmem:[#allocation6 + $0x130] sm:$0xff]
        %v498 = vld [vmem:[#allocation6 + $0x138] sm:$0xff]
        %v499 = vld [vmem:[#allocation6 + $0x140] sm:$0xff]
        %v500 = vld [vmem:[#allocation6 + $0x148] sm:$0xff]
        %v501 = vld [vmem:[#allocation6 + $0x150] sm:$0xff]
        %v502 = vld [vmem:[#allocation6 + $0x158] sm:$0xff]
        %v503 = vld [vmem:[#allocation6 + $0x160] sm:$0xff]
        %v504 = vld [vmem:[#allocation6 + $0x168] sm:$0xff]
        %v505 = vld [vmem:[#allocation6 + $0x170] sm:$0xff]
        %v506 = vld [vmem:[#allocation6 + $0x178] sm:$0xff]
        %v507 = vld [vmem:[#allocation6 + $0x180] sm:$0xff]
        %v508 = vld [vmem:[#allocation6 + $0x188] sm:$0xff]
        %v509 = vld [vmem:[#allocation6 + $0x190] sm:$0xff]
        %v510 = vld [vmem:[#allocation6 + $0x198] sm:$0xff]
        %v511 = vld [vmem:[#allocation6 + $0x1a0] sm:$0xff]
        %v512 = vld [vmem:[#allocation6 + $0x1a8] sm:$0xff]
        %v513 = vld [vmem:[#allocation6 + $0x1b0] sm:$0xff]
        %v514 = vld [vmem:[#allocation6 + $0x1b8] sm:$0xff]
        %v515 = vld [vmem:[#allocation6 + $0x1c0] sm:$0xff]
        %v516 = vld [vmem:[#allocation6 + $0x1c8] sm:$0xff]
        %v517 = vld [vmem:[#allocation6 + $0x1d0] sm:$0xff]
        %v518 = vld [vmem:[#allocation6 + $0x1d8] sm:$0xff]
        %v519 = vld [vmem:[#allocation6 + $0x1e0] sm:$0xff]
        %v520 = vld [vmem:[#allocation6 + $0x1e8] sm:$0xff]
        %v521 = vld [vmem:[#allocation6 + $0x1f0] sm:$0xff]
        %v522 = vld [vmem:[#allocation6 + $0x1f8] sm:$0xff]
        %v523 = vld [vmem:[%s4] sm:$0x1]
        %v524 = vld [vmem:[%s4 + $0x1] sm:$0x1]
        %v525 = vld [vmem:[%s4 + $0x2] sm:$0x1]
        %v526 = vld [vmem:[%s4 + $0x3] sm:$0x1]
        %v527 = vld [vmem:[%s4 + $0x4] sm:$0x1]
        %v528 = vld [vmem:[%s4 + $0x5] sm:$0x1]
        %v529 = vld [vmem:[%s5] sm:$0x7]
        %v530 = vld [vmem:[%s5 + $0x3] sm:$0xf]
        %531 = vadd.xlane.f32.xlu0 %v324
        %v532 = vpop.xlane.xlu0 %531
        %v533 = vrcp.pop 128.0
        %v534 = vmul.f32 128.0, %v533
        %v535 = vsub.f32 1.0, %v534
        %v536 = vmul.f32 %v533, %v535
        %v537 = vadd.f32 %v533, %v536
        %vm538 = vweird.f32 %v533
        %v539 = vsel %vm538, %v533, %v537
        %v540 = vmul.f32 %v532, %v539
        %v541 = vsub.f32 %v324, %v540
        %v542 = vmul.f32 %v541, %v541
        %543 = vadd.xlane.f32.xlu0 %v542
        %v544 = vpop.xlane.xlu0 %543
        %v545 = vmul.f32 %v544, %v539
        %v546 = vadd.f32 %v545, 1e-05
        %v547 = vrsqrt.pop %v546
        %v548 = vmul.f32 %v547, %v546
        %v549 = vmul.f32 %v548, %v547
        %v550 = vmul.f32 0.5, %v549
        %v551 = vsub.f32 1.5, %v550
        %v552 = vmul.f32 %v547, %v551
        %vm553 = vweird.f32 %v546
        %vm554 = vweird.f32 %v547
        %vm555 = vmor %vm553, %vm554
        %v556 = vsel %vm555, %v547, %v552
        %v557 = vmul.f32 %v541, %v556
        %v558 = vperm.slane %v523, 0
        %v559 = vmul.f32 %v557, %v558
        %v560 = vperm.slane %v524, 0
        %v561 = vadd.f32 %v559, %v560
        %v563 = vperm.slane %v529, 0
        %v564 = vperm.slane %v529, 1
        %v565 = vperm.slane %v529, 2
        %569 = vmatpush.msra.mxu0 %v376
        %570 = vmatpush.msra.mxu0 %v373
        %571 = vmatpush.msra.mxu0 %v370
        %572 = vmatpush.msra.mxu0 %v367
        %573 = vmatpush.msra.mxu0 %v364
        %574 = vmatpush.msra.mxu0 %v361
        %575 = vmatpush.msra.mxu0 %v358
        %576 = vmatpush.msra.mxu0 %v355
        %577 = vmatpush.msra.mxu0 %v352
        %578 = vmatpush.msra.mxu0 %v349
        %579 = vmatpush.msra.mxu0 %v346
        %580 = vmatpush.msra.mxu0 %v343
        %581 = vmatpush.msra.mxu0 %v340
        %582 = vmatpush.msra.mxu0 %v337
        %583 = vmatpush.msra.mxu0 %v334
        %584 = vmatpush.msra.mxu0 %v331
        %585 = vmatmul.f32.gmra.mxu0 %v561
        %v586 = vpop.f32.mrf.mxu0
        %v587 = vadd.f32 %v563, %v586
        %588 = vdwg.mxu0
        %589 = vmatpush.msra.mxu0 %v377
        %590 = vmatpush.msra.mxu0 %v374
        %591 = vmatpush.msra.mxu0 %v371
        %592 = vmatpush.msra.mxu0 %v368
        %593 = vmatpush.msra.mxu0 %v365
        %594 = vmatpush.msra.mxu0 %v362
        %595 = vmatpush.msra.mxu0 %v359
        %596 = vmatpush.msra.mxu0 %v356
        %597 = vmatpush.msra.mxu0 %v353
        %598 = vmatpush.msra.mxu0 %v350
        %599 = vmatpush.msra.mxu0 %v347
        %600 = vmatpush.msra.mxu0 %v344
        %601 = vmatpush.msra.mxu0 %v341
        %602 = vmatpush.msra.mxu0 %v338
        %603 = vmatpush.msra.mxu0 %v335
        %604 = vmatpush.msra.mxu0 %v332
        %605 = vmatmul.f32.gmra.mxu0 %v561
        %v606 = vpop.f32.mrf.mxu0
        %v607 = vadd.f32 %v564, %v606
        %608 = vdwg.mxu0
        %609 = vmatpush.msra.mxu0 %v378
        %610 = vmatpush.msra.mxu0 %v375
        %611 = vmatpush.msra.mxu0 %v372
        %612 = vmatpush.msra.mxu0 %v369
        %613 = vmatpush.msra.mxu0 %v366
        %614 = vmatpush.msra.mxu0 %v363
        %615 = vmatpush.msra.mxu0 %v360
        %616 = vmatpush.msra.mxu0 %v357
        %617 = vmatpush.msra.mxu0 %v354
        %618 = vmatpush.msra.mxu0 %v351
        %619 = vmatpush.msra.mxu0 %v348
        %620 = vmatpush.msra.mxu0 %v345
        %621 = vmatpush.msra.mxu0 %v342
        %622 = vmatpush.msra.mxu0 %v339
        %623 = vmatpush.msra.mxu0 %v336
        %624 = vmatpush.msra.mxu0 %v333
        %625 = vmatmul.f32.gmra.mxu0 %v561
        %v626 = vpop.f32.mrf.mxu0
        %v627 = vadd.f32 %v565, %v626
        %628 = vdwg.mxu0
        %630 = vrot.lane.b32.xlu0 %v587, 96
        %v631 = vpop.permute.xlu0 %630
        %632 = vrot.lane.b32.xlu0 %v587, 64
        %v633 = vpop.permute.xlu0 %632
        %634 = vrot.lane.b32.xlu0 %v587, 32
        %v635 = vpop.permute.xlu0 %634
        %637 = vrot.lane.b32.xlu0 %v607, 96
        %v638 = vpop.permute.xlu0 %637
        %639 = vrot.lane.b32.xlu0 %v607, 64
        %v640 = vpop.permute.xlu0 %639
        %641 = vrot.lane.b32.xlu0 %v607, 32
        %v642 = vpop.permute.xlu0 %641
        %644 = vrot.lane.b32.xlu0 %v627, 96
        %v645 = vpop.permute.xlu0 %644
        %647 = vrot.lane.b32.xlu0 %v627, 64
        %v648 = vpop.permute.xlu0 %647
        %650 = vrot.lane.b32.xlu0 %v627, 32
        %v651 = vpop.permute.xlu0 %650
        %vm653 = vcmask 261120
        %v654 = vsel %vm653, %v587, 0
        %v656 = vsel %vm653, %v607, 0
        %658 = vmatpush.xpose.msra.mxu0 0.0
        %659 = vmatpush.xpose.msra.mxu0 0.0
        %660 = vmatpush.xpose.msra.mxu0 0.0
        %661 = vmatpush.xpose.msra.mxu0 0.0
        %662 = vmatpush.xpose.msra.mxu0 0.0
        %663 = vmatpush.xpose.msra.mxu0 0.0
        %664 = vmatpush.xpose.msra.mxu0 0.0
        %665 = vmatpush.xpose.msra.mxu0 0.0
        %666 = vmatpush.xpose.msra.mxu0 0.0
        %667 = vmatpush.xpose.msra.mxu0 0.0
        %668 = vmatpush.xpose.msra.mxu0 0.0
        %669 = vmatpush.xpose.msra.mxu0 0.0
        %670 = vmatpush.xpose.msra.mxu0 0.0
        %671 = vmatpush.xpose.msra.mxu0 0.0
        %672 = vmatpush.xpose.msra.mxu0 0.0
        %673 = vmatpush.xpose.msra.mxu0 %v656
        %674 = vmatmul.f32.gmra.mxu0 %v654
        %v675 = vpop.f32.mrf.mxu0
        %v676 = vadd.f32 %v330, %v675
        %677 = vdwg.mxu0
        %v678 = vsel %vm653, %v631, 0
        %v680 = vsel %vm653, %v638, 0
        %682 = vmatpush.xpose.msra.mxu0 0.0
        %683 = vmatpush.xpose.msra.mxu0 0.0
        %684 = vmatpush.xpose.msra.mxu0 0.0
        %685 = vmatpush.xpose.msra.mxu0 0.0
        %686 = vmatpush.xpose.msra.mxu0 0.0
        %687 = vmatpush.xpose.msra.mxu0 0.0
        %688 = vmatpush.xpose.msra.mxu0 0.0
        %689 = vmatpush.xpose.msra.mxu0 0.0
        %690 = vmatpush.xpose.msra.mxu0 0.0
        %691 = vmatpush.xpose.msra.mxu0 0.0
        %692 = vmatpush.xpose.msra.mxu0 0.0
        %693 = vmatpush.xpose.msra.mxu0 0.0
        %694 = vmatpush.xpose.msra.mxu0 0.0
        %695 = vmatpush.xpose.msra.mxu0 0.0
        %696 = vmatpush.xpose.msra.mxu0 0.0
        %697 = vmatpush.xpose.msra.mxu0 %v680
        %698 = vmatmul.f32.gmra.mxu0 %v678
        %v699 = vpop.f32.mrf.mxu0
        %v700 = vadd.f32 %v330, %v699
        %701 = vdwg.mxu0
        %v702 = vsel %vm653, %v633, 0
        %v704 = vsel %vm653, %v640, 0
        %706 = vmatpush.xpose.msra.mxu0 0.0
        %707 = vmatpush.xpose.msra.mxu0 0.0
        %708 = vmatpush.xpose.msra.mxu0 0.0
        %709 = vmatpush.xpose.msra.mxu0 0.0
        %710 = vmatpush.xpose.msra.mxu0 0.0
        %711 = vmatpush.xpose.msra.mxu0 0.0
        %712 = vmatpush.xpose.msra.mxu0 0.0
        %713 = vmatpush.xpose.msra.mxu0 0.0
        %714 = vmatpush.xpose.msra.mxu0 0.0
        %715 = vmatpush.xpose.msra.mxu0 0.0
        %716 = vmatpush.xpose.msra.mxu0 0.0
        %717 = vmatpush.xpose.msra.mxu0 0.0
        %718 = vmatpush.xpose.msra.mxu0 0.0
        %719 = vmatpush.xpose.msra.mxu0 0.0
        %720 = vmatpush.xpose.msra.mxu0 0.0
        %721 = vmatpush.xpose.msra.mxu0 %v704
        %722 = vmatmul.f32.gmra.mxu0 %v702
        %v723 = vpop.f32.mrf.mxu0
        %v724 = vadd.f32 %v330, %v723
        %725 = vdwg.mxu0
        %v726 = vsel %vm653, %v635, 0
        %v728 = vsel %vm653, %v642, 0
        %730 = vmatpush.xpose.msra.mxu0 0.0
        %731 = vmatpush.xpose.msra.mxu0 0.0
        %732 = vmatpush.xpose.msra.mxu0 0.0
        %733 = vmatpush.xpose.msra.mxu0 0.0
        %734 = vmatpush.xpose.msra.mxu0 0.0
        %735 = vmatpush.xpose.msra.mxu0 0.0
        %736 = vmatpush.xpose.msra.mxu0 0.0
        %737 = vmatpush.xpose.msra.mxu0 0.0
        %738 = vmatpush.xpose.msra.mxu0 0.0
        %739 = vmatpush.xpose.msra.mxu0 0.0
        %740 = vmatpush.xpose.msra.mxu0 0.0
        %741 = vmatpush.xpose.msra.mxu0 0.0
        %742 = vmatpush.xpose.msra.mxu0 0.0
        %743 = vmatpush.xpose.msra.mxu0 0.0
        %744 = vmatpush.xpose.msra.mxu0 0.0
        %745 = vmatpush.xpose.msra.mxu0 %v728
        %746 = vmatmul.f32.gmra.mxu0 %v726
        %v747 = vpop.f32.mrf.mxu0
        %v748 = vadd.f32 %v330, %v747
        %749 = vdwg.mxu0
        %vm750 = vcmask 64512
        %v751 = vsel %vm750, %v676, -inf
        %752 = vmax.xlane.f32.xlu0 %v751
        %v753 = vpop.xlane.xlu0 %752
        %v754 = vsel %vm750, %v700, -inf
        %755 = vmax.xlane.f32.xlu0 %v754
        %v756 = vpop.xlane.xlu0 %755
        %v757 = vsel %vm750, %v724, -inf
        %758 = vmax.xlane.f32.xlu0 %v757
        %v759 = vpop.xlane.xlu0 %758
        %v760 = vsel %vm750, %v748, -inf
        %761 = vmax.xlane.f32.xlu0 %v760
        %v762 = vpop.xlane.xlu0 %761
        %v763 = vsub.f32 %v676, %v753
        %v764 = vsub.f32 %v700, %v756
        %v765 = vsub.f32 %v724, %v759
        %v766 = vsub.f32 %v748, %v762
        %v767 = vmul.f32 %v763, 1.442695
        %v768 = vpow.pop %v767
        %v769 = vmul.f32 %v764, 1.442695
        %v770 = vpow.pop %v769
        %v771 = vmul.f32 %v765, 1.442695
        %v772 = vpow.pop %v771
        %v773 = vmul.f32 %v766, 1.442695
        %v774 = vpow.pop %v773
        %v775 = vsel %vm750, %v768, 0.0
        %776 = vadd.xlane.f32.xlu0 %v775
        %v777 = vpop.xlane.xlu0 %776
        %v778 = vsel %vm750, %v770, 0.0
        %779 = vadd.xlane.f32.xlu0 %v778
        %v780 = vpop.xlane.xlu0 %779
        %v781 = vsel %vm750, %v772, 0.0
        %782 = vadd.xlane.f32.xlu0 %v781
        %v783 = vpop.xlane.xlu0 %782
        %v784 = vsel %vm750, %v774, 0.0
        %785 = vadd.xlane.f32.xlu0 %v784
        %v786 = vpop.xlane.xlu0 %785
        %v787 = vrcp.pop %v777
        %v788 = vmul.f32 %v777, %v787
        %v789 = vsub.f32 1.0, %v788
        %v790 = vmul.f32 %v787, %v789
        %v791 = vadd.f32 %v787, %v790
        %vm792 = vweird.f32 %v777
        %vm793 = vweird.f32 %v787
        %vm794 = vmor %vm792, %vm793
        %v795 = vsel %vm794, %v787, %v791
        %v796 = vand.u32 2147483647, %v777
        %vm797 = vcmp.eq.f32.partialorder %v796, 8.507059e+37
        %v798 = vand.u32 %v777, 2147483648
        %v799 = vor.u32 1.1754944e-38, %v798
        %v800 = vsel %vm797, %v799, %v795
        %v801 = vmul.f32 %v768, %v800
        %v802 = vrcp.pop %v780
        %v803 = vmul.f32 %v780, %v802
        %v804 = vsub.f32 1.0, %v803
        %v805 = vmul.f32 %v802, %v804
        %v806 = vadd.f32 %v802, %v805
        %vm807 = vweird.f32 %v780
        %vm808 = vweird.f32 %v802
        %vm809 = vmor %vm807, %vm808
        %v810 = vsel %vm809, %v802, %v806
        %v811 = vand.u32 2147483647, %v780
        %vm812 = vcmp.eq.f32.partialorder %v811, 8.507059e+37
        %v813 = vand.u32 %v780, 2147483648
        %v814 = vor.u32 1.1754944e-38, %v813
        %v815 = vsel %vm812, %v814, %v810
        %v816 = vmul.f32 %v770, %v815
        %v817 = vrcp.pop %v783
        %v818 = vmul.f32 %v783, %v817
        %v819 = vsub.f32 1.0, %v818
        %v820 = vmul.f32 %v817, %v819
        %v821 = vadd.f32 %v817, %v820
        %vm822 = vweird.f32 %v783
        %vm823 = vweird.f32 %v817
        %vm824 = vmor %vm822, %vm823
        %v825 = vsel %vm824, %v817, %v821
        %v826 = vand.u32 2147483647, %v783
        %vm827 = vcmp.eq.f32.partialorder %v826, 8.507059e+37
        %v828 = vand.u32 %v783, 2147483648
        %v829 = vor.u32 1.1754944e-38, %v828
        %v830 = vsel %vm827, %v829, %v825
        %v831 = vmul.f32 %v772, %v830
        %v832 = vrcp.pop %v786
        %v833 = vmul.f32 %v786, %v832
        %v834 = vsub.f32 1.0, %v833
        %v835 = vmul.f32 %v832, %v834
        %v836 = vadd.f32 %v832, %v835
        %vm837 = vweird.f32 %v786
        %vm838 = vweird.f32 %v832
        %vm839 = vmor %vm837, %vm838
        %v840 = vsel %vm839, %v832, %v836
        %v841 = vand.u32 2147483647, %v786
        %vm842 = vcmp.eq.f32.partialorder %v841, 8.507059e+37
        %v843 = vand.u32 %v786, 2147483648
        %v844 = vor.u32 1.1754944e-38, %v843
        %v845 = vsel %vm842, %v844, %v840
        %v846 = vmul.f32 %v774, %v845
        %v848 = vsel %vm750, %v801, 0
        %850 = vmatpush.msra.mxu0 0.0
        %851 = vmatpush.msra.mxu0 0.0
        %852 = vmatpush.msra.mxu0 0.0
        %853 = vmatpush.msra.mxu0 0.0
        %854 = vmatpush.msra.mxu0 0.0
        %855 = vmatpush.msra.mxu0 0.0
        %856 = vmatpush.msra.mxu0 0.0
        %857 = vmatpush.msra.mxu0 0.0
        %858 = vmatpush.msra.mxu0 0.0
        %859 = vmatpush.msra.mxu0 0.0
        %860 = vmatpush.msra.mxu0 0.0
        %861 = vmatpush.msra.mxu0 0.0
        %862 = vmatpush.msra.mxu0 0.0
        %863 = vmatpush.msra.mxu0 0.0
        %864 = vmatpush.msra.mxu0 0.0
        %865 = vmatpush.msra.mxu0 %v627
        %866 = vmatmul.f32.gmra.mxu0 %v848
        %v867 = vpop.f32.mrf.mxu0
        %v868 = vadd.f32 0.0, %v867
        %869 = vdwg.mxu0
        %v871 = vsel %vm750, %v816, 0
        %873 = vmatpush.msra.mxu0 0.0
        %874 = vmatpush.msra.mxu0 0.0
        %875 = vmatpush.msra.mxu0 0.0
        %876 = vmatpush.msra.mxu0 0.0
        %877 = vmatpush.msra.mxu0 0.0
        %878 = vmatpush.msra.mxu0 0.0
        %879 = vmatpush.msra.mxu0 0.0
        %880 = vmatpush.msra.mxu0 0.0
        %881 = vmatpush.msra.mxu0 0.0
        %882 = vmatpush.msra.mxu0 0.0
        %883 = vmatpush.msra.mxu0 0.0
        %884 = vmatpush.msra.mxu0 0.0
        %885 = vmatpush.msra.mxu0 0.0
        %886 = vmatpush.msra.mxu0 0.0
        %887 = vmatpush.msra.mxu0 0.0
        %888 = vmatpush.msra.mxu0 %v645
        %889 = vmatmul.f32.gmra.mxu0 %v871
        %v890 = vpop.f32.mrf.mxu0
        %v891 = vadd.f32 0.0, %v890
        %892 = vdwg.mxu0
        %v894 = vsel %vm750, %v831, 0
        %896 = vmatpush.msra.mxu0 0.0
        %897 = vmatpush.msra.mxu0 0.0
        %898 = vmatpush.msra.mxu0 0.0
        %899 = vmatpush.msra.mxu0 0.0
        %900 = vmatpush.msra.mxu0 0.0
        %901 = vmatpush.msra.mxu0 0.0
        %902 = vmatpush.msra.mxu0 0.0
        %903 = vmatpush.msra.mxu0 0.0
        %904 = vmatpush.msra.mxu0 0.0
        %905 = vmatpush.msra.mxu0 0.0
        %906 = vmatpush.msra.mxu0 0.0
        %907 = vmatpush.msra.mxu0 0.0
        %908 = vmatpush.msra.mxu0 0.0
        %909 = vmatpush.msra.mxu0 0.0
        %910 = vmatpush.msra.mxu0 0.0
        %911 = vmatpush.msra.mxu0 %v648
        %912 = vmatmul.f32.gmra.mxu0 %v894
        %v913 = vpop.f32.mrf.mxu0
        %v914 = vadd.f32 0.0, %v913
        %915 = vdwg.mxu0
        %v917 = vsel %vm750, %v846, 0
        %919 = vmatpush.msra.mxu0 0.0
        %920 = vmatpush.msra.mxu0 0.0
        %921 = vmatpush.msra.mxu0 0.0
        %922 = vmatpush.msra.mxu0 0.0
        %923 = vmatpush.msra.mxu0 0.0
        %924 = vmatpush.msra.mxu0 0.0
        %925 = vmatpush.msra.mxu0 0.0
        %926 = vmatpush.msra.mxu0 0.0
        %927 = vmatpush.msra.mxu0 0.0
        %928 = vmatpush.msra.mxu0 0.0
        %929 = vmatpush.msra.mxu0 0.0
        %930 = vmatpush.msra.mxu0 0.0
        %931 = vmatpush.msra.mxu0 0.0
        %932 = vmatpush.msra.mxu0 0.0
        %933 = vmatpush.msra.mxu0 0.0
        %934 = vmatpush.msra.mxu0 %v651
        %935 = vmatmul.f32.gmra.mxu0 %v917
        %v936 = vpop.f32.mrf.mxu0
        %v937 = vadd.f32 0.0, %v936
        %938 = vdwg.mxu0
        %v940 = vsel %vm653, %v868, 0
        %942 = vmatpush.msra.mxu0 0.0
        %943 = vmatpush.msra.mxu0 0.0
        %944 = vmatpush.msra.mxu0 0.0
        %945 = vmatpush.msra.mxu0 0.0
        %946 = vmatpush.msra.mxu0 0.0
        %947 = vmatpush.msra.mxu0 0.0
        %948 = vmatpush.msra.mxu0 0.0
        %949 = vmatpush.msra.mxu0 0.0
        %950 = vmatpush.msra.mxu0 0.0
        %951 = vmatpush.msra.mxu0 0.0
        %952 = vmatpush.msra.mxu0 0.0
        %953 = vmatpush.msra.mxu0 0.0
        %954 = vmatpush.msra.mxu0 %v446
        %955 = vmatpush.msra.mxu0 %v445
        %956 = vmatpush.msra.mxu0 %v444
        %957 = vmatpush.msra.mxu0 %v443
        %958 = vmatmul.f32.gmra.mxu0 %v940
        %v959 = vpop.f32.mrf.mxu0
        %v960 = vadd.f32 0.0, %v959
        %961 = vdwg.mxu0
        %v963 = vsel %vm653, %v891, 0
        %965 = vmatpush.msra.mxu0 0.0
        %966 = vmatpush.msra.mxu0 0.0
        %967 = vmatpush.msra.mxu0 0.0
        %968 = vmatpush.msra.mxu0 0.0
        %969 = vmatpush.msra.mxu0 0.0
        %970 = vmatpush.msra.mxu0 0.0
        %971 = vmatpush.msra.mxu0 0.0
        %972 = vmatpush.msra.mxu0 0.0
        %973 = vmatpush.msra.mxu0 0.0
        %974 = vmatpush.msra.mxu0 0.0
        %975 = vmatpush.msra.mxu0 0.0
        %976 = vmatpush.msra.mxu0 0.0
        %977 = vmatpush.msra.mxu0 %v450
        %978 = vmatpush.msra.mxu0 %v449
        %979 = vmatpush.msra.mxu0 %v448
        %980 = vmatpush.msra.mxu0 %v447
        %981 = vmatmul.f32.gmra.mxu0 %v963
        %v982 = vpop.f32.mrf.mxu0
        %v983 = vadd.f32 0.0, %v982
        %984 = vdwg.mxu0
        %v986 = vsel %vm653, %v914, 0
        %988 = vmatpush.msra.mxu0 0.0
        %989 = vmatpush.msra.mxu0 0.0
        %990 = vmatpush.msra.mxu0 0.0
        %991 = vmatpush.msra.mxu0 0.0
        %992 = vmatpush.msra.mxu0 0.0
        %993 = vmatpush.msra.mxu0 0.0
        %994 = vmatpush.msra.mxu0 0.0
        %995 = vmatpush.msra.mxu0 0.0
        %996 = vmatpush.msra.mxu0 0.0
        %997 = vmatpush.msra.mxu0 0.0
        %998 = vmatpush.msra.mxu0 0.0
        %999 = vmatpush.msra.mxu0 0.0
        %1000 = vmatpush.msra.mxu0 %v454
        %1001 = vmatpush.msra.mxu0 %v453
        %1002 = vmatpush.msra.mxu0 %v452
        %1003 = vmatpush.msra.mxu0 %v451
        %1004 = vmatmul.f32.gmra.mxu0 %v986
        %v1005 = vpop.f32.mrf.mxu0
        %v1006 = vadd.f32 0.0, %v1005
        %1007 = vdwg.mxu0
        %v1009 = vsel %vm653, %v937, 0
        %1011 = vmatpush.msra.mxu0 0.0
        %1012 = vmatpush.msra.mxu0 0.0
        %1013 = vmatpush.msra.mxu0 0.0
        %1014 = vmatpush.msra.mxu0 0.0
        %1015 = vmatpush.msra.mxu0 0.0
        %1016 = vmatpush.msra.mxu0 0.0
        %1017 = vmatpush.msra.mxu0 0.0
        %1018 = vmatpush.msra.mxu0 0.0
        %1019 = vmatpush.msra.mxu0 0.0
        %1020 = vmatpush.msra.mxu0 0.0
        %1021 = vmatpush.msra.mxu0 0.0
        %1022 = vmatpush.msra.mxu0 0.0
        %1023 = vmatpush.msra.mxu0 %v458
        %1024 = vmatpush.msra.mxu0 %v457
        %1025 = vmatpush.msra.mxu0 %v456
        %1026 = vmatpush.msra.mxu0 %v455
        %1027 = vmatmul.f32.gmra.mxu0 %v1009
        %v1028 = vpop.f32.mrf.mxu0
        %v1029 = vadd.f32 0.0, %v1028
        %1030 = vdwg.mxu0
        %v1031 = vadd.f32 %v960, %v983
        %v1032 = vadd.f32 %v1031, %v1006
        %v1033 = vadd.f32 %v1032, %v1029
        %v1034 = vadd.f32 %v324, %v1033
        %v1035 = vperm.slane %v527, 0
        %v1036 = vadd.f32 %v1034, %v1035
        %1037 = vadd.xlane.f32.xlu0 %v1036
        %v1038 = vpop.xlane.xlu0 %1037
        %v1039 = vmul.f32 %v1038, %v539
        %v1040 = vsub.f32 %v1036, %v1039
        %v1041 = vmul.f32 %v1040, %v1040
        %1042 = vadd.xlane.f32.xlu0 %v1041
        %v1043 = vpop.xlane.xlu0 %1042
        %v1044 = vmul.f32 %v1043, %v539
        %v1045 = vadd.f32 %v1044, 1e-05
        %v1046 = vrsqrt.pop %v1045
        %v1047 = vmul.f32 %v1046, %v1045
        %v1048 = vmul.f32 %v1047, %v1046
        %v1049 = vmul.f32 0.5, %v1048
        %v1050 = vsub.f32 1.5, %v1049
        %v1051 = vmul.f32 %v1046, %v1050
        %vm1052 = vweird.f32 %v1045
        %vm1053 = vweird.f32 %v1046
        %vm1054 = vmor %vm1052, %vm1053
        %v1055 = vsel %vm1054, %v1046, %v1051
        %v1056 = vmul.f32 %v1040, %v1055
        %v1057 = vperm.slane %v525, 0
        %v1058 = vmul.f32 %v1056, %v1057
        %v1059 = vperm.slane %v526, 0
        %v1060 = vadd.f32 %v1058, %v1059
        %v1062 = vperm.slane %v530, 0
        %v1063 = vperm.slane %v530, 1
        %v1064 = vperm.slane %v530, 2
        %v1065 = vperm.slane %v530, 3
        %1070 = vmatpush.msra.mxu0 %v439
        %1071 = vmatpush.msra.mxu0 %v435
        %1072 = vmatpush.msra.mxu0 %v431
        %1073 = vmatpush.msra.mxu0 %v427
        %1074 = vmatpush.msra.mxu0 %v423
        %1075 = vmatpush.msra.mxu0 %v419
        %1076 = vmatpush.msra.mxu0 %v415
        %1077 = vmatpush.msra.mxu0 %v411
        %1078 = vmatpush.msra.mxu0 %v407
        %1079 = vmatpush.msra.mxu0 %v403
        %1080 = vmatpush.msra.mxu0 %v399
        %1081 = vmatpush.msra.mxu0 %v395
        %1082 = vmatpush.msra.mxu0 %v391
        %1083 = vmatpush.msra.mxu0 %v387
        %1084 = vmatpush.msra.mxu0 %v383
        %1085 = vmatpush.msra.mxu0 %v379
        %1086 = vmatmul.f32.gmra.mxu0 %v1060
        %v1087 = vpop.f32.mrf.mxu0
        %v1088 = vadd.f32 %v1062, %v1087
        %1089 = vdwg.mxu0
        %1090 = vmatpush.msra.mxu0 %v440
        %1091 = vmatpush.msra.mxu0 %v436
        %1092 = vmatpush.msra.mxu0 %v432
        %1093 = vmatpush.msra.mxu0 %v428
        %1094 = vmatpush.msra.mxu0 %v424
        %1095 = vmatpush.msra.mxu0 %v420
        %1096 = vmatpush.msra.mxu0 %v416
        %1097 = vmatpush.msra.mxu0 %v412
        %1098 = vmatpush.msra.mxu0 %v408
        %1099 = vmatpush.msra.mxu0 %v404
        %1100 = vmatpush.msra.mxu0 %v400
        %1101 = vmatpush.msra.mxu0 %v396
        %1102 = vmatpush.msra.mxu0 %v392
        %1103 = vmatpush.msra.mxu0 %v388
        %1104 = vmatpush.msra.mxu0 %v384
        %1105 = vmatpush.msra.mxu0 %v380
        %1106 = vmatmul.f32.gmra.mxu0 %v1060
        %v1107 = vpop.f32.mrf.mxu0
        %v1108 = vadd.f32 %v1063, %v1107
        %1109 = vdwg.mxu0
        %1110 = vmatpush.msra.mxu0 %v441
        %1111 = vmatpush.msra.mxu0 %v437
        %1112 = vmatpush.msra.mxu0 %v433
        %1113 = vmatpush.msra.mxu0 %v429
        %1114 = vmatpush.msra.mxu0 %v425
        %1115 = vmatpush.msra.mxu0 %v421
        %1116 = vmatpush.msra.mxu0 %v417
        %1117 = vmatpush.msra.mxu0 %v413
        %1118 = vmatpush.msra.mxu0 %v409
        %1119 = vmatpush.msra.mxu0 %v405
        %1120 = vmatpush.msra.mxu0 %v401
        %1121 = vmatpush.msra.mxu0 %v397
        %1122 = vmatpush.msra.mxu0 %v393
        %1123 = vmatpush.msra.mxu0 %v389
        %1124 = vmatpush.msra.mxu0 %v385
        %1125 = vmatpush.msra.mxu0 %v381
        %1126 = vmatmul.f32.gmra.mxu0 %v1060
        %v1127 = vpop.f32.mrf.mxu0
        %v1128 = vadd.f32 %v1064, %v1127
        %1129 = vdwg.mxu0
        %1130 = vmatpush.msra.mxu0 %v442
        %1131 = vmatpush.msra.mxu0 %v438
        %1132 = vmatpush.msra.mxu0 %v434
        %1133 = vmatpush.msra.mxu0 %v430
        %1134 = vmatpush.msra.mxu0 %v426
        %1135 = vmatpush.msra.mxu0 %v422
        %1136 = vmatpush.msra.mxu0 %v418
        %1137 = vmatpush.msra.mxu0 %v414
        %1138 = vmatpush.msra.mxu0 %v410
        %1139 = vmatpush.msra.mxu0 %v406
        %1140 = vmatpush.msra.mxu0 %v402
        %1141 = vmatpush.msra.mxu0 %v398
        %1142 = vmatpush.msra.mxu0 %v394
        %1143 = vmatpush.msra.mxu0 %v390
        %1144 = vmatpush.msra.mxu0 %v386
        %1145 = vmatpush.msra.mxu0 %v382
        %1146 = vmatmul.f32.gmra.mxu0 %v1060
        %v1147 = vpop.f32.mrf.mxu0
        %v1148 = vadd.f32 %v1065, %v1147
        %1149 = vdwg.mxu0
        %v1150 = vmul.f32 %v1088, 1.702
        %v1151 = vmul.f32 %v1108, 1.702
        %v1152 = vmul.f32 %v1128, 1.702
        %v1153 = vmul.f32 %v1148, 1.702
        %v1154 = vxor.u32 %v1150, 2147483648
        %v1155 = vxor.u32 %v1151, 2147483648
        %v1156 = vxor.u32 %v1152, 2147483648
        %v1157 = vxor.u32 %v1153, 2147483648
        %v1158 = vmul.f32 %v1154, 1.442695
        %v1159 = vpow.pop %v1158
        %v1160 = vmul.f32 %v1155, 1.442695
        %v1161 = vpow.pop %v1160
        %v1162 = vmul.f32 %v1156, 1.442695
        %v1163 = vpow.pop %v1162
        %v1164 = vmul.f32 %v1157, 1.442695
        %v1165 = vpow.pop %v1164
        %v1166 = vadd.f32 %v1159, 1.0
        %v1167 = vadd.f32 %v1161, 1.0
        %v1168 = vadd.f32 %v1163, 1.0
        %v1169 = vadd.f32 %v1165, 1.0
        %v1170 = vrcp.pop %v1166
        %v1171 = vmul.f32 %v1166, %v1170
        %v1172 = vsub.f32 1.0, %v1171
        %v1173 = vmul.f32 %v1170, %v1172
        %v1174 = vadd.f32 %v1170, %v1173
        %vm1175 = vweird.f32 %v1166
        %vm1176 = vweird.f32 %v1170
        %vm1177 = vmor %vm1175, %vm1176
        %v1178 = vsel %vm1177, %v1170, %v1174
        %v1179 = vand.u32 2147483647, %v1166
        %vm1180 = vcmp.eq.f32.partialorder %v1179, 8.507059e+37
        %v1181 = vand.u32 %v1166, 2147483648
        %v1182 = vor.u32 1.1754944e-38, %v1181
        %v1183 = vsel %vm1180, %v1182, %v1178
        %v1184 = vmul.f32 1.0, %v1183
        %v1185 = vrcp.pop %v1167
        %v1186 = vmul.f32 %v1167, %v1185
        %v1187 = vsub.f32 1.0, %v1186
        %v1188 = vmul.f32 %v1185, %v1187
        %v1189 = vadd.f32 %v1185, %v1188
        %vm1190 = vweird.f32 %v1167
        %vm1191 = vweird.f32 %v1185
        %vm1192 = vmor %vm1190, %vm1191
        %v1193 = vsel %vm1192, %v1185, %v1189
        %v1194 = vand.u32 2147483647, %v1167
        %vm1195 = vcmp.eq.f32.partialorder %v1194, 8.507059e+37
        %v1196 = vand.u32 %v1167, 2147483648
        %v1197 = vor.u32 1.1754944e-38, %v1196
        %v1198 = vsel %vm1195, %v1197, %v1193
        %v1199 = vmul.f32 1.0, %v1198
        %v1200 = vrcp.pop %v1168
        %v1201 = vmul.f32 %v1168, %v1200
        %v1202 = vsub.f32 1.0, %v1201
        %v1203 = vmul.f32 %v1200, %v1202
        %v1204 = vadd.f32 %v1200, %v1203
        %vm1205 = vweird.f32 %v1168
        %vm1206 = vweird.f32 %v1200
        %vm1207 = vmor %vm1205, %vm1206
        %v1208 = vsel %vm1207, %v1200, %v1204
        %v1209 = vand.u32 2147483647, %v1168
        %vm1210 = vcmp.eq.f32.partialorder %v1209, 8.507059e+37
        %v1211 = vand.u32 %v1168, 2147483648
        %v1212 = vor.u32 1.1754944e-38, %v1211
        %v1213 = vsel %vm1210, %v1212, %v1208
        %v1214 = vmul.f32 1.0, %v1213
        %v1215 = vrcp.pop %v1169
        %v1216 = vmul.f32 %v1169, %v1215
        %v1217 = vsub.f32 1.0, %v1216
        %v1218 = vmul.f32 %v1215, %v1217
        %v1219 = vadd.f32 %v1215, %v1218
        %vm1220 = vweird.f32 %v1169
        %vm1221 = vweird.f32 %v1215
        %vm1222 = vmor %vm1220, %vm1221
        %v1223 = vsel %vm1222, %v1215, %v1219
        %v1224 = vand.u32 2147483647, %v1169
        %vm1225 = vcmp.eq.f32.partialorder %v1224, 8.507059e+37
        %v1226 = vand.u32 %v1169, 2147483648
        %v1227 = vor.u32 1.1754944e-38, %v1226
        %v1228 = vsel %vm1225, %v1227, %v1223
        %v1229 = vmul.f32 1.0, %v1228
        %v1230 = vmul.f32 %v1088, %v1184
        %v1231 = vmul.f32 %v1108, %v1199
        %v1232 = vmul.f32 %v1128, %v1214
        %v1233 = vmul.f32 %v1148, %v1229
        %1234 = vmatpush.msra.mxu0 %v474
        %1235 = vmatpush.msra.mxu0 %v473
        %1236 = vmatpush.msra.mxu0 %v472
        %1237 = vmatpush.msra.mxu0 %v471
        %1238 = vmatpush.msra.mxu0 %v470
        %1239 = vmatpush.msra.mxu0 %v469
        %1240 = vmatpush.msra.mxu0 %v468
        %1241 = vmatpush.msra.mxu0 %v467
        %1242 = vmatpush.msra.mxu0 %v466
        %1243 = vmatpush.msra.mxu0 %v465
        %1244 = vmatpush.msra.mxu0 %v464
        %1245 = vmatpush.msra.mxu0 %v463
        %1246 = vmatpush.msra.mxu0 %v462
        %1247 = vmatpush.msra.mxu0 %v461
        %1248 = vmatpush.msra.mxu0 %v460
        %1249 = vmatpush.msra.mxu0 %v459
        %1250 = vmatmul.f32.gmra.mxu0 %v1230
        %v1251 = vpop.f32.mrf.mxu0
        %v1252 = vadd.f32 0.0, %v1251
        %1253 = vdwg.mxu0
        %1254 = vmatpush.msra.mxu0 %v490
        %1255 = vmatpush.msra.mxu0 %v489
        %1256 = vmatpush.msra.mxu0 %v488
        %1257 = vmatpush.msra.mxu0 %v487
        %1258 = vmatpush.msra.mxu0 %v486
        %1259 = vmatpush.msra.mxu0 %v485
        %1260 = vmatpush.msra.mxu0 %v484
        %1261 = vmatpush.msra.mxu0 %v483
        %1262 = vmatpush.msra.mxu0 %v482
        %1263 = vmatpush.msra.mxu0 %v481
        %1264 = vmatpush.msra.mxu0 %v480
        %1265 = vmatpush.msra.mxu0 %v479
        %1266 = vmatpush.msra.mxu0 %v478
        %1267 = vmatpush.msra.mxu0 %v477
        %1268 = vmatpush.msra.mxu0 %v476
        %1269 = vmatpush.msra.mxu0 %v475
        %1270 = vmatmul.f32.gmra.mxu0 %v1231
        %v1271 = vpop.f32.mrf.mxu0
        %v1272 = vadd.f32 %v1252, %v1271
        %1273 = vdwg.mxu0
        %1274 = vmatpush.msra.mxu0 %v506
        %1275 = vmatpush.msra.mxu0 %v505
        %1276 = vmatpush.msra.mxu0 %v504
        %1277 = vmatpush.msra.mxu0 %v503
        %1278 = vmatpush.msra.mxu0 %v502
        %1279 = vmatpush.msra.mxu0 %v501
        %1280 = vmatpush.msra.mxu0 %v500
        %1281 = vmatpush.msra.mxu0 %v499
        %1282 = vmatpush.msra.mxu0 %v498
        %1283 = vmatpush.msra.mxu0 %v497
        %1284 = vmatpush.msra.mxu0 %v496
        %1285 = vmatpush.msra.mxu0 %v495
        %1286 = vmatpush.msra.mxu0 %v494
        %1287 = vmatpush.msra.mxu0 %v493
        %1288 = vmatpush.msra.mxu0 %v492
        %1289 = vmatpush.msra.mxu0 %v491
        %1290 = vmatmul.f32.gmra.mxu0 %v1232
        %v1291 = vpop.f32.mrf.mxu0
        %v1292 = vadd.f32 %v1272, %v1291
        %1293 = vdwg.mxu0
        %1294 = vmatpush.msra.mxu0 %v522
        %1295 = vmatpush.msra.mxu0 %v521
        %1296 = vmatpush.msra.mxu0 %v520
        %1297 = vmatpush.msra.mxu0 %v519
        %1298 = vmatpush.msra.mxu0 %v518
        %1299 = vmatpush.msra.mxu0 %v517
        %1300 = vmatpush.msra.mxu0 %v516
        %1301 = vmatpush.msra.mxu0 %v515
        %1302 = vmatpush.msra.mxu0 %v514
        %1303 = vmatpush.msra.mxu0 %v513
        %1304 = vmatpush.msra.mxu0 %v512
        %1305 = vmatpush.msra.mxu0 %v511
        %1306 = vmatpush.msra.mxu0 %v510
        %1307 = vmatpush.msra.mxu0 %v509
        %1308 = vmatpush.msra.mxu0 %v508
        %1309 = vmatpush.msra.mxu0 %v507
        %1310 = vmatmul.f32.gmra.mxu0 %v1233
        %v1311 = vpop.f32.mrf.mxu0
        %v1312 = vadd.f32 %v1292, %v1311
        %1313 = vdwg.mxu0
        %v1314 = vadd.f32 %v1036, %v1312
        %v1315 = vperm.slane %v528, 0
        %v1316 = vadd.f32 %v1314, %v1315
        %s1317 = scalar_lea.vmem [#allocation2], 896
        %v1318 = vld [vmem:[%s1317] sm:$0xff]
        %v1319 = vld [vmem:[%s1317 + $0x8] sm:$0xff]
        %v1320 = vld [vmem:[%s1317 + $0x10] sm:$0xff]
        %v1321 = vld [vmem:[%s1317 + $0x38] sm:$0xff]
        %v1322 = vld [vmem:[%s1317 + $0x40] sm:$0xff]
        %v1323 = vld [vmem:[%s1317 + $0x48] sm:$0xff]
        %v1324 = vld [vmem:[%s1317 + $0x70] sm:$0xff]
        %v1325 = vld [vmem:[%s1317 + $0x78] sm:$0xff]
        %v1326 = vld [vmem:[%s1317 + $0x80] sm:$0xff]
        %v1327 = vld [vmem:[%s1317 + $0xa8] sm:$0xff]
        %v1328 = vld [vmem:[%s1317 + $0xb0] sm:$0xff]
        %v1329 = vld [vmem:[%s1317 + $0xb8] sm:$0xff]
        %v1330 = vld [vmem:[%s1317 + $0xe0] sm:$0xff]
        %v1331 = vld [vmem:[%s1317 + $0xe8] sm:$0xff]
        %v1332 = vld [vmem:[%s1317 + $0xf0] sm:$0xff]
        %v1333 = vld [vmem:[%s1317 + $0x118] sm:$0xff]
        %v1334 = vld [vmem:[%s1317 + $0x120] sm:$0xff]
        %v1335 = vld [vmem:[%s1317 + $0x128] sm:$0xff]
        %v1336 = vld [vmem:[%s1317 + $0x150] sm:$0xff]
        %v1337 = vld [vmem:[%s1317 + $0x158] sm:$0xff]
        %v1338 = vld [vmem:[%s1317 + $0x160] sm:$0xff]
        %v1339 = vld [vmem:[%s1317 + $0x188] sm:$0xff]
        %v1340 = vld [vmem:[%s1317 + $0x190] sm:$0xff]
        %v1341 = vld [vmem:[%s1317 + $0x198] sm:$0xff]
        %v1342 = vld [vmem:[%s1317 + $0x1c0] sm:$0xff]
        %v1343 = vld [vmem:[%s1317 + $0x1c8] sm:$0xff]
        %v1344 = vld [vmem:[%s1317 + $0x1d0] sm:$0xff]
        %v1345 = vld [vmem:[%s1317 + $0x1f8] sm:$0xff]
        %v1346 = vld [vmem:[%s1317 + $0x200] sm:$0xff]
        %v1347 = vld [vmem:[%s1317 + $0x208] sm:$0xff]
        %v1348 = vld [vmem:[%s1317 + $0x230] sm:$0xff]
        %v1349 = vld [vmem:[%s1317 + $0x238] sm:$0xff]
        %v1350 = vld [vmem:[%s1317 + $0x240] sm:$0xff]
        %v1351 = vld [vmem:[%s1317 + $0x268] sm:$0xff]
        %v1352 = vld [vmem:[%s1317 + $0x270] sm:$0xff]
        %v1353 = vld [vmem:[%s1317 + $0x278] sm:$0xff]
        %v1354 = vld [vmem:[%s1317 + $0x2a0] sm:$0xff]
        %v1355 = vld [vmem:[%s1317 + $0x2a8] sm:$0xff]
        %v1356 = vld [vmem:[%s1317 + $0x2b0] sm:$0xff]
        %v1357 = vld [vmem:[%s1317 + $0x2d8] sm:$0xff]
        %v1358 = vld [vmem:[%s1317 + $0x2e0] sm:$0xff]
        %v1359 = vld [vmem:[%s1317 + $0x2e8] sm:$0xff]
        %v1360 = vld [vmem:[%s1317 + $0x310] sm:$0xff]
        %v1361 = vld [vmem:[%s1317 + $0x318] sm:$0xff]
        %v1362 = vld [vmem:[%s1317 + $0x320] sm:$0xff]
        %v1363 = vld [vmem:[%s1317 + $0x348] sm:$0xff]
        %v1364 = vld [vmem:[%s1317 + $0x350] sm:$0xff]
        %v1365 = vld [vmem:[%s1317 + $0x358] sm:$0xff]
        %v1366 = vld [vmem:[%s1317 + $0x18] sm:$0xff]
        %v1367 = vld [vmem:[%s1317 + $0x20] sm:$0xff]
        %v1368 = vld [vmem:[%s1317 + $0x28] sm:$0xff]
        %v1369 = vld [vmem:[%s1317 + $0x30] sm:$0xff]
        %v1370 = vld [vmem:[%s1317 + $0x50] sm:$0xff]
        %v1371 = vld [vmem:[%s1317 + $0x58] sm:$0xff]
        %v1372 = vld [vmem:[%s1317 + $0x60] sm:$0xff]
        %v1373 = vld [vmem:[%s1317 + $0x68] sm:$0xff]
        %v1374 = vld [vmem:[%s1317 + $0x88] sm:$0xff]
        %v1375 = vld [vmem:[%s1317 + $0x90] sm:$0xff]
        %v1376 = vld [vmem:[%s1317 + $0x98] sm:$0xff]
        %v1377 = vld [vmem:[%s1317 + $0xa0] sm:$0xff]
        %v1378 = vld [vmem:[%s1317 + $0xc0] sm:$0xff]
        %v1379 = vld [vmem:[%s1317 + $0xc8] sm:$0xff]
        %v1380 = vld [vmem:[%s1317 + $0xd0] sm:$0xff]
        %v1381 = vld [vmem:[%s1317 + $0xd8] sm:$0xff]
        %v1382 = vld [vmem:[%s1317 + $0xf8] sm:$0xff]
        %v1383 = vld [vmem:[%s1317 + $0x100] sm:$0xff]
        %v1384 = vld [vmem:[%s1317 + $0x108] sm:$0xff]
        %v1385 = vld [vmem:[%s1317 + $0x110] sm:$0xff]
        %v1386 = vld [vmem:[%s1317 + $0x130] sm:$0xff]
        %v1387 = vld [vmem:[%s1317 + $0x138] sm:$0xff]
        %v1388 = vld [vmem:[%s1317 + $0x140] sm:$0xff]
        %v1389 = vld [vmem:[%s1317 + $0x148] sm:$0xff]
        %v1390 = vld [vmem:[%s1317 + $0x168] sm:$0xff]
        %v1391 = vld [vmem:[%s1317 + $0x170] sm:$0xff]
        %v1392 = vld [vmem:[%s1317 + $0x178] sm:$0xff]
        %v1393 = vld [vmem:[%s1317 + $0x180] sm:$0xff]
        %v1394 = vld [vmem:[%s1317 + $0x1a0] sm:$0xff]
        %v1395 = vld [vmem:[%s1317 + $0x1a8] sm:$0xff]
        %v1396 = vld [vmem:[%s1317 + $0x1b0] sm:$0xff]
        %v1397 = vld [vmem:[%s1317 + $0x1b8] sm:$0xff]
        %v1398 = vld [vmem:[%s1317 + $0x1d8] sm:$0xff]
        %v1399 = vld [vmem:[%s1317 + $0x1e0] sm:$0xff]
        %v1400 = vld [vmem:[%s1317 + $0x1e8] sm:$0xff]
        %v1401 = vld [vmem:[%s1317 + $0x1f0] sm:$0xff]
        %v1402 = vld [vmem:[%s1317 + $0x210] sm:$0xff]
        %v1403 = vld [vmem:[%s1317 + $0x218] sm:$0xff]
        %v1404 = vld [vmem:[%s1317 + $0x220] sm:$0xff]
        %v1405 = vld [vmem:[%s1317 + $0x228] sm:$0xff]
        %v1406 = vld [vmem:[%s1317 + $0x248] sm:$0xff]
        %v1407 = vld [vmem:[%s1317 + $0x250] sm:$0xff]
        %v1408 = vld [vmem:[%s1317 + $0x258] sm:$0xff]
        %v1409 = vld [vmem:[%s1317 + $0x260] sm:$0xff]
        %v1410 = vld [vmem:[%s1317 + $0x280] sm:$0xff]
        %v1411 = vld [vmem:[%s1317 + $0x288] sm:$0xff]
        %v1412 = vld [vmem:[%s1317 + $0x290] sm:$0xff]
        %v1413 = vld [vmem:[%s1317 + $0x298] sm:$0xff]
        %v1414 = vld [vmem:[%s1317 + $0x2b8] sm:$0xff]
        %v1415 = vld [vmem:[%s1317 + $0x2c0] sm:$0xff]
        %v1416 = vld [vmem:[%s1317 + $0x2c8] sm:$0xff]
        %v1417 = vld [vmem:[%s1317 + $0x2d0] sm:$0xff]
        %v1418 = vld [vmem:[%s1317 + $0x2f0] sm:$0xff]
        %v1419 = vld [vmem:[%s1317 + $0x2f8] sm:$0xff]
        %v1420 = vld [vmem:[%s1317 + $0x300] sm:$0xff]
        %v1421 = vld [vmem:[%s1317 + $0x308] sm:$0xff]
        %v1422 = vld [vmem:[%s1317 + $0x328] sm:$0xff]
        %v1423 = vld [vmem:[%s1317 + $0x330] sm:$0xff]
        %v1424 = vld [vmem:[%s1317 + $0x338] sm:$0xff]
        %v1425 = vld [vmem:[%s1317 + $0x340] sm:$0xff]
        %v1426 = vld [vmem:[%s1317 + $0x360] sm:$0xff]
        %v1427 = vld [vmem:[%s1317 + $0x368] sm:$0xff]
        %v1428 = vld [vmem:[%s1317 + $0x370] sm:$0xff]
        %v1429 = vld [vmem:[%s1317 + $0x378] sm:$0xff]
        %s1430 = scalar_lea.vmem [#allocation4], 128
        %v1431 = vld [vmem:[%s1430] sm:$0xff]
        %v1432 = vld [vmem:[%s1430 + $0x8] sm:$0xff]
        %v1433 = vld [vmem:[%s1430 + $0x10] sm:$0xff]
        %v1434 = vld [vmem:[%s1430 + $0x18] sm:$0xff]
        %v1435 = vld [vmem:[%s1430 + $0x20] sm:$0xff]
        %v1436 = vld [vmem:[%s1430 + $0x28] sm:$0xff]
        %v1437 = vld [vmem:[%s1430 + $0x30] sm:$0xff]
        %v1438 = vld [vmem:[%s1430 + $0x38] sm:$0xff]
        %v1439 = vld [vmem:[%s1430 + $0x40] sm:$0xff]
        %v1440 = vld [vmem:[%s1430 + $0x48] sm:$0xff]
        %v1441 = vld [vmem:[%s1430 + $0x50] sm:$0xff]
        %v1442 = vld [vmem:[%s1430 + $0x58] sm:$0xff]
        %v1443 = vld [vmem:[%s1430 + $0x60] sm:$0xff]
        %v1444 = vld [vmem:[%s1430 + $0x68] sm:$0xff]
        %v1445 = vld [vmem:[%s1430 + $0x70] sm:$0xff]
        %v1446 = vld [vmem:[%s1430 + $0x78] sm:$0xff]
        %s1447 = scalar_lea.vmem [#allocation6], 512
        %v1448 = vld [vmem:[%s1447] sm:$0xff]
        %v1449 = vld [vmem:[%s1447 + $0x8] sm:$0xff]
        %v1450 = vld [vmem:[%s1447 + $0x10] sm:$0xff]
        %v1451 = vld [vmem:[%s1447 + $0x18] sm:$0xff]
        %v1452 = vld [vmem:[%s1447 + $0x20] sm:$0xff]
        %v1453 = vld [vmem:[%s1447 + $0x28] sm:$0xff]
        %v1454 = vld [vmem:[%s1447 + $0x30] sm:$0xff]
        %v1455 = vld [vmem:[%s1447 + $0x38] sm:$0xff]
        %v1456 = vld [vmem:[%s1447 + $0x40] sm:$0xff]
        %v1457 = vld [vmem:[%s1447 + $0x48] sm:$0xff]
        %v1458 = vld [vmem:[%s1447 + $0x50] sm:$0xff]
        %v1459 = vld [vmem:[%s1447 + $0x58] sm:$0xff]
        %v1460 = vld [vmem:[%s1447 + $0x60] sm:$0xff]
        %v1461 = vld [vmem:[%s1447 + $0x68] sm:$0xff]
        %v1462 = vld [vmem:[%s1447 + $0x70] sm:$0xff]
        %v1463 = vld [vmem:[%s1447 + $0x78] sm:$0xff]
        %v1464 = vld [vmem:[%s1447 + $0x80] sm:$0xff]
        %v1465 = vld [vmem:[%s1447 + $0x88] sm:$0xff]
        %v1466 = vld [vmem:[%s1447 + $0x90] sm:$0xff]
        %v1467 = vld [vmem:[%s1447 + $0x98] sm:$0xff]
        %v1468 = vld [vmem:[%s1447 + $0xa0] sm:$0xff]
        %v1469 = vld [vmem:[%s1447 + $0xa8] sm:$0xff]
        %v1470 = vld [vmem:[%s1447 + $0xb0] sm:$0xff]
        %v1471 = vld [vmem:[%s1447 + $0xb8] sm:$0xff]
        %v1472 = vld [vmem:[%s1447 + $0xc0] sm:$0xff]
        %v1473 = vld [vmem:[%s1447 + $0xc8] sm:$0xff]
        %v1474 = vld [vmem:[%s1447 + $0xd0] sm:$0xff]
        %v1475 = vld [vmem:[%s1447 + $0xd8] sm:$0xff]
        %v1476 = vld [vmem:[%s1447 + $0xe0] sm:$0xff]
        %v1477 = vld [vmem:[%s1447 + $0xe8] sm:$0xff]
        %v1478 = vld [vmem:[%s1447 + $0xf0] sm:$0xff]
        %v1479 = vld [vmem:[%s1447 + $0xf8] sm:$0xff]
        %v1480 = vld [vmem:[%s1447 + $0x100] sm:$0xff]
        %v1481 = vld [vmem:[%s1447 + $0x108] sm:$0xff]
        %v1482 = vld [vmem:[%s1447 + $0x110] sm:$0xff]
        %v1483 = vld [vmem:[%s1447 + $0x118] sm:$0xff]
        %v1484 = vld [vmem:[%s1447 + $0x120] sm:$0xff]
        %v1485 = vld [vmem:[%s1447 + $0x128] sm:$0xff]
        %v1486 = vld [vmem:[%s1447 + $0x130] sm:$0xff]
        %v1487 = vld [vmem:[%s1447 + $0x138] sm:$0xff]
        %v1488 = vld [vmem:[%s1447 + $0x140] sm:$0xff]
        %v1489 = vld [vmem:[%s1447 + $0x148] sm:$0xff]
        %v1490 = vld [vmem:[%s1447 + $0x150] sm:$0xff]
        %v1491 = vld [vmem:[%s1447 + $0x158] sm:$0xff]
        %v1492 = vld [vmem:[%s1447 + $0x160] sm:$0xff]
        %v1493 = vld [vmem:[%s1447 + $0x168] sm:$0xff]
        %v1494 = vld [vmem:[%s1447 + $0x170] sm:$0xff]
        %v1495 = vld [vmem:[%s1447 + $0x178] sm:$0xff]
        %v1496 = vld [vmem:[%s1447 + $0x180] sm:$0xff]
        %v1497 = vld [vmem:[%s1447 + $0x188] sm:$0xff]
        %v1498 = vld [vmem:[%s1447 + $0x190] sm:$0xff]
        %v1499 = vld [vmem:[%s1447 + $0x198] sm:$0xff]
        %v1500 = vld [vmem:[%s1447 + $0x1a0] sm:$0xff]
        %v1501 = vld [vmem:[%s1447 + $0x1a8] sm:$0xff]
        %v1502 = vld [vmem:[%s1447 + $0x1b0] sm:$0xff]
        %v1503 = vld [vmem:[%s1447 + $0x1b8] sm:$0xff]
        %v1504 = vld [vmem:[%s1447 + $0x1c0] sm:$0xff]
        %v1505 = vld [vmem:[%s1447 + $0x1c8] sm:$0xff]
        %v1506 = vld [vmem:[%s1447 + $0x1d0] sm:$0xff]
        %v1507 = vld [vmem:[%s1447 + $0x1d8] sm:$0xff]
        %v1508 = vld [vmem:[%s1447 + $0x1e0] sm:$0xff]
        %v1509 = vld [vmem:[%s1447 + $0x1e8] sm:$0xff]
        %v1510 = vld [vmem:[%s1447 + $0x1f0] sm:$0xff]
        %v1511 = vld [vmem:[%s1447 + $0x1f8] sm:$0xff]
        %s1512 = scalar_lea.vmem %s4, 8
        %v1513 = vld [vmem:[%s1512] sm:$0x1]
        %v1514 = vld [vmem:[%s1512 + $0x1] sm:$0x1]
        %v1515 = vld [vmem:[%s1512 + $0x2] sm:$0x1]
        %v1516 = vld [vmem:[%s1512 + $0x3] sm:$0x1]
        %v1517 = vld [vmem:[%s1512 + $0x4] sm:$0x1]
        %v1518 = vld [vmem:[%s1512 + $0x5] sm:$0x1]
        %s1519 = scalar_lea.vmem %s5, 7
        %v1520 = vld [vmem:[%s1519] sm:$0x7]
        %v1521 = vld [vmem:[%s1519 + $0x3] sm:$0xf]
        %1522 = vadd.xlane.f32.xlu0 %v1316
        %v1523 = vpop.xlane.xlu0 %1522
        %v1524 = vmul.f32 %v1523, %v539
        %v1525 = vsub.f32 %v1316, %v1524
        %v1526 = vmul.f32 %v1525, %v1525
        %1527 = vadd.xlane.f32.xlu0 %v1526
        %v1528 = vpop.xlane.xlu0 %1527
        %v1529 = vmul.f32 %v1528, %v539
        %v1530 = vadd.f32 %v1529, 1e-05
        %v1531 = vrsqrt.pop %v1530
        %v1532 = vmul.f32 %v1531, %v1530
        %v1533 = vmul.f32 %v1532, %v1531
        %v1534 = vmul.f32 0.5, %v1533
        %v1535 = vsub.f32 1.5, %v1534
        %v1536 = vmul.f32 %v1531, %v1535
        %vm1537 = vweird.f32 %v1530
        %vm1538 = vweird.f32 %v1531
        %vm1539 = vmor %vm1537, %vm1538
        %v1540 = vsel %vm1539, %v1531, %v1536
        %v1541 = vmul.f32 %v1525, %v1540
        %v1542 = vperm.slane %v1513, 0
        %v1543 = vmul.f32 %v1541, %v1542
        %v1544 = vperm.slane %v1514, 0
        %v1545 = vadd.f32 %v1543, %v1544
        %v1547 = vperm.slane %v1520, 0
        %v1548 = vperm.slane %v1520, 1
        %v1549 = vperm.slane %v1520, 2
        %1553 = vmatpush.msra.mxu0 %v1363
        %1554 = vmatpush.msra.mxu0 %v1360
        %1555 = vmatpush.msra.mxu0 %v1357
        %1556 = vmatpush.msra.mxu0 %v1354
        %1557 = vmatpush.msra.mxu0 %v1351
        %1558 = vmatpush.msra.mxu0 %v1348
        %1559 = vmatpush.msra.mxu0 %v1345
        %1560 = vmatpush.msra.mxu0 %v1342
        %1561 = vmatpush.msra.mxu0 %v1339
        %1562 = vmatpush.msra.mxu0 %v1336
        %1563 = vmatpush.msra.mxu0 %v1333
        %1564 = vmatpush.msra.mxu0 %v1330
        %1565 = vmatpush.msra.mxu0 %v1327
        %1566 = vmatpush.msra.mxu0 %v1324
        %1567 = vmatpush.msra.mxu0 %v1321
        %1568 = vmatpush.msra.mxu0 %v1318
        %1569 = vmatmul.f32.gmra.mxu0 %v1545
        %v1570 = vpop.f32.mrf.mxu0
        %v1571 = vadd.f32 %v1547, %v1570
        %1572 = vdwg.mxu0
        %1573 = vmatpush.msra.mxu0 %v1364
        %1574 = vmatpush.msra.mxu0 %v1361
        %1575 = vmatpush.msra.mxu0 %v1358
        %1576 = vmatpush.msra.mxu0 %v1355
        %1577 = vmatpush.msra.mxu0 %v1352
        %1578 = vmatpush.msra.mxu0 %v1349
        %1579 = vmatpush.msra.mxu0 %v1346
        %1580 = vmatpush.msra.mxu0 %v1343
        %1581 = vmatpush.msra.mxu0 %v1340
        %1582 = vmatpush.msra.mxu0 %v1337
        %1583 = vmatpush.msra.mxu0 %v1334
        %1584 = vmatpush.msra.mxu0 %v1331
        %1585 = vmatpush.msra.mxu0 %v1328
        %1586 = vmatpush.msra.mxu0 %v1325
        %1587 = vmatpush.msra.mxu0 %v1322
        %1588 = vmatpush.msra.mxu0 %v1319
        %1589 = vmatmul.f32.gmra.mxu0 %v1545
        %v1590 = vpop.f32.mrf.mxu0
        %v1591 = vadd.f32 %v1548, %v1590
        %1592 = vdwg.mxu0
        %1593 = vmatpush.msra.mxu0 %v1365
        %1594 = vmatpush.msra.mxu0 %v1362
        %1595 = vmatpush.msra.mxu0 %v1359
        %1596 = vmatpush.msra.mxu0 %v1356
        %1597 = vmatpush.msra.mxu0 %v1353
        %1598 = vmatpush.msra.mxu0 %v1350
        %1599 = vmatpush.msra.mxu0 %v1347
        %1600 = vmatpush.msra.mxu0 %v1344
        %1601 = vmatpush.msra.mxu0 %v1341
        %1602 = vmatpush.msra.mxu0 %v1338
        %1603 = vmatpush.msra.mxu0 %v1335
        %1604 = vmatpush.msra.mxu0 %v1332
        %1605 = vmatpush.msra.mxu0 %v1329
        %1606 = vmatpush.msra.mxu0 %v1326
        %1607 = vmatpush.msra.mxu0 %v1323
        %1608 = vmatpush.msra.mxu0 %v1320
        %1609 = vmatmul.f32.gmra.mxu0 %v1545
        %v1610 = vpop.f32.mrf.mxu0
        %v1611 = vadd.f32 %v1549, %v1610
        %1612 = vdwg.mxu0
        %1614 = vrot.lane.b32.xlu0 %v1571, 96
        %v1615 = vpop.permute.xlu0 %1614
        %1616 = vrot.lane.b32.xlu0 %v1571, 64
        %v1617 = vpop.permute.xlu0 %1616
        %1618 = vrot.lane.b32.xlu0 %v1571, 32
        %v1619 = vpop.permute.xlu0 %1618
        %1621 = vrot.lane.b32.xlu0 %v1591, 96
        %v1622 = vpop.permute.xlu0 %1621
        %1623 = vrot.lane.b32.xlu0 %v1591, 64
        %v1624 = vpop.permute.xlu0 %1623
        %1625 = vrot.lane.b32.xlu0 %v1591, 32
        %v1626 = vpop.permute.xlu0 %1625
        %1628 = vrot.lane.b32.xlu0 %v1611, 96
        %v1629 = vpop.permute.xlu0 %1628
        %1631 = vrot.lane.b32.xlu0 %v1611, 64
        %v1632 = vpop.permute.xlu0 %1631
        %1634 = vrot.lane.b32.xlu0 %v1611, 32
        %v1635 = vpop.permute.xlu0 %1634
        %v1637 = vsel %vm653, %v1571, 0
        %v1639 = vsel %vm653, %v1591, 0
        %1641 = vmatpush.xpose.msra.mxu0 0.0
        %1642 = vmatpush.xpose.msra.mxu0 0.0
        %1643 = vmatpush.xpose.msra.mxu0 0.0
        %1644 = vmatpush.xpose.msra.mxu0 0.0
        %1645 = vmatpush.xpose.msra.mxu0 0.0
        %1646 = vmatpush.xpose.msra.mxu0 0.0
        %1647 = vmatpush.xpose.msra.mxu0 0.0
        %1648 = vmatpush.xpose.msra.mxu0 0.0
        %1649 = vmatpush.xpose.msra.mxu0 0.0
        %1650 = vmatpush.xpose.msra.mxu0 0.0
        %1651 = vmatpush.xpose.msra.mxu0 0.0
        %1652 = vmatpush.xpose.msra.mxu0 0.0
        %1653 = vmatpush.xpose.msra.mxu0 0.0
        %1654 = vmatpush.xpose.msra.mxu0 0.0
        %1655 = vmatpush.xpose.msra.mxu0 0.0
        %1656 = vmatpush.xpose.msra.mxu0 %v1639
        %1657 = vmatmul.f32.gmra.mxu0 %v1637
        %v1658 = vpop.f32.mrf.mxu0
        %v1659 = vadd.f32 %v330, %v1658
        %1660 = vdwg.mxu0
        %v1661 = vsel %vm653, %v1615, 0
        %v1663 = vsel %vm653, %v1622, 0
        %1665 = vmatpush.xpose.msra.mxu0 0.0
        %1666 = vmatpush.xpose.msra.mxu0 0.0
        %1667 = vmatpush.xpose.msra.mxu0 0.0
        %1668 = vmatpush.xpose.msra.mxu0 0.0
        %1669 = vmatpush.xpose.msra.mxu0 0.0
        %1670 = vmatpush.xpose.msra.mxu0 0.0
        %1671 = vmatpush.xpose.msra.mxu0 0.0
        %1672 = vmatpush.xpose.msra.mxu0 0.0
        %1673 = vmatpush.xpose.msra.mxu0 0.0
        %1674 = vmatpush.xpose.msra.mxu0 0.0
        %1675 = vmatpush.xpose.msra.mxu0 0.0
        %1676 = vmatpush.xpose.msra.mxu0 0.0
        %1677 = vmatpush.xpose.msra.mxu0 0.0
        %1678 = vmatpush.xpose.msra.mxu0 0.0
        %1679 = vmatpush.xpose.msra.mxu0 0.0
        %1680 = vmatpush.xpose.msra.mxu0 %v1663
        %1681 = vmatmul.f32.gmra.mxu0 %v1661
        %v1682 = vpop.f32.mrf.mxu0
        %v1683 = vadd.f32 %v330, %v1682
        %1684 = vdwg.mxu0
        %v1685 = vsel %vm653, %v1617, 0
        %v1687 = vsel %vm653, %v1624, 0
        %1689 = vmatpush.xpose.msra.mxu0 0.0
        %1690 = vmatpush.xpose.msra.mxu0 0.0
        %1691 = vmatpush.xpose.msra.mxu0 0.0
        %1692 = vmatpush.xpose.msra.mxu0 0.0
        %1693 = vmatpush.xpose.msra.mxu0 0.0
        %1694 = vmatpush.xpose.msra.mxu0 0.0
        %1695 = vmatpush.xpose.msra.mxu0 0.0
        %1696 = vmatpush.xpose.msra.mxu0 0.0
        %1697 = vmatpush.xpose.msra.mxu0 0.0
        %1698 = vmatpush.xpose.msra.mxu0 0.0
        %1699 = vmatpush.xpose.msra.mxu0 0.0
        %1700 = vmatpush.xpose.msra.mxu0 0.0
        %1701 = vmatpush.xpose.msra.mxu0 0.0
        %1702 = vmatpush.xpose.msra.mxu0 0.0
        %1703 = vmatpush.xpose.msra.mxu0 0.0
        %1704 = vmatpush.xpose.msra.mxu0 %v1687
        %1705 = vmatmul.f32.gmra.mxu0 %v1685
        %v1706 = vpop.f32.mrf.mxu0
        %v1707 = vadd.f32 %v330, %v1706
        %1708 = vdwg.mxu0
        %v1709 = vsel %vm653, %v1619, 0
        %v1711 = vsel %vm653, %v1626, 0
        %1713 = vmatpush.xpose.msra.mxu0 0.0
        %1714 = vmatpush.xpose.msra.mxu0 0.0
        %1715 = vmatpush.xpose.msra.mxu0 0.0
        %1716 = vmatpush.xpose.msra.mxu0 0.0
        %1717 = vmatpush.xpose.msra.mxu0 0.0
        %1718 = vmatpush.xpose.msra.mxu0 0.0
        %1719 = vmatpush.xpose.msra.mxu0 0.0
        %1720 = vmatpush.xpose.msra.mxu0 0.0
        %1721 = vmatpush.xpose.msra.mxu0 0.0
        %1722 = vmatpush.xpose.msra.mxu0 0.0
        %1723 = vmatpush.xpose.msra.mxu0 0.0
        %1724 = vmatpush.xpose.msra.mxu0 0.0
        %1725 = vmatpush.xpose.msra.mxu0 0.0
        %1726 = vmatpush.xpose.msra.mxu0 0.0
        %1727 = vmatpush.xpose.msra.mxu0 0.0
        %1728 = vmatpush.xpose.msra.mxu0 %v1711
        %1729 = vmatmul.f32.gmra.mxu0 %v1709
        %v1730 = vpop.f32.mrf.mxu0
        %v1731 = vadd.f32 %v330, %v1730
        %1732 = vdwg.mxu0
        %v1733 = vsel %vm750, %v1659, -inf
        %1734 = vmax.xlane.f32.xlu0 %v1733
        %v1735 = vpop.xlane.xlu0 %1734
        %v1736 = vsel %vm750, %v1683, -inf
        %1737 = vmax.xlane.f32.xlu0 %v1736
        %v1738 = vpop.xlane.xlu0 %1737
        %v1739 = vsel %vm750, %v1707, -inf
        %1740 = vmax.xlane.f32.xlu0 %v1739
        %v1741 = vpop.xlane.xlu0 %1740
        %v1742 = vsel %vm750, %v1731, -inf
        %1743 = vmax.xlane.f32.xlu0 %v1742
        %v1744 = vpop.xlane.xlu0 %1743
        %v1745 = vsub.f32 %v1659, %v1735
        %v1746 = vsub.f32 %v1683, %v1738
        %v1747 = vsub.f32 %v1707, %v1741
        %v1748 = vsub.f32 %v1731, %v1744
        %v1749 = vmul.f32 %v1745, 1.442695
        %v1750 = vpow.pop %v1749
        %v1751 = vmul.f32 %v1746, 1.442695
        %v1752 = vpow.pop %v1751
        %v1753 = vmul.f32 %v1747, 1.442695
        %v1754 = vpow.pop %v1753
        %v1755 = vmul.f32 %v1748, 1.442695
        %v1756 = vpow.pop %v1755
        %v1757 = vsel %vm750, %v1750, 0.0
        %1758 = vadd.xlane.f32.xlu0 %v1757
        %v1759 = vpop.xlane.xlu0 %1758
        %v1760 = vsel %vm750, %v1752, 0.0
        %1761 = vadd.xlane.f32.xlu0 %v1760
        %v1762 = vpop.xlane.xlu0 %1761
        %v1763 = vsel %vm750, %v1754, 0.0
        %1764 = vadd.xlane.f32.xlu0 %v1763
        %v1765 = vpop.xlane.xlu0 %1764
        %v1766 = vsel %vm750, %v1756, 0.0
        %1767 = vadd.xlane.f32.xlu0 %v1766
        %v1768 = vpop.xlane.xlu0 %1767
        %v1769 = vrcp.pop %v1759
        %v1770 = vmul.f32 %v1759, %v1769
        %v1771 = vsub.f32 1.0, %v1770
        %v1772 = vmul.f32 %v1769, %v1771
        %v1773 = vadd.f32 %v1769, %v1772
        %vm1774 = vweird.f32 %v1759
        %vm1775 = vweird.f32 %v1769
        %vm1776 = vmor %vm1774, %vm1775
        %v1777 = vsel %vm1776, %v1769, %v1773
        %v1778 = vand.u32 2147483647, %v1759
        %vm1779 = vcmp.eq.f32.partialorder %v1778, 8.507059e+37
        %v1780 = vand.u32 %v1759, 2147483648
        %v1781 = vor.u32 1.1754944e-38, %v1780
        %v1782 = vsel %vm1779, %v1781, %v1777
        %v1783 = vmul.f32 %v1750, %v1782
        %v1784 = vrcp.pop %v1762
        %v1785 = vmul.f32 %v1762, %v1784
        %v1786 = vsub.f32 1.0, %v1785
        %v1787 = vmul.f32 %v1784, %v1786
        %v1788 = vadd.f32 %v1784, %v1787
        %vm1789 = vweird.f32 %v1762
        %vm1790 = vweird.f32 %v1784
        %vm1791 = vmor %vm1789, %vm1790
        %v1792 = vsel %vm1791, %v1784, %v1788
        %v1793 = vand.u32 2147483647, %v1762
        %vm1794 = vcmp.eq.f32.partialorder %v1793, 8.507059e+37
        %v1795 = vand.u32 %v1762, 2147483648
        %v1796 = vor.u32 1.1754944e-38, %v1795
        %v1797 = vsel %vm1794, %v1796, %v1792
        %v1798 = vmul.f32 %v1752, %v1797
        %v1799 = vrcp.pop %v1765
        %v1800 = vmul.f32 %v1765, %v1799
        %v1801 = vsub.f32 1.0, %v1800
        %v1802 = vmul.f32 %v1799, %v1801
        %v1803 = vadd.f32 %v1799, %v1802
        %vm1804 = vweird.f32 %v1765
        %vm1805 = vweird.f32 %v1799
        %vm1806 = vmor %vm1804, %vm1805
        %v1807 = vsel %vm1806, %v1799, %v1803
        %v1808 = vand.u32 2147483647, %v1765
        %vm1809 = vcmp.eq.f32.partialorder %v1808, 8.507059e+37
        %v1810 = vand.u32 %v1765, 2147483648
        %v1811 = vor.u32 1.1754944e-38, %v1810
        %v1812 = vsel %vm1809, %v1811, %v1807
        %v1813 = vmul.f32 %v1754, %v1812
        %v1814 = vrcp.pop %v1768
        %v1815 = vmul.f32 %v1768, %v1814
        %v1816 = vsub.f32 1.0, %v1815
        %v1817 = vmul.f32 %v1814, %v1816
        %v1818 = vadd.f32 %v1814, %v1817
        %vm1819 = vweird.f32 %v1768
        %vm1820 = vweird.f32 %v1814
        %vm1821 = vmor %vm1819, %vm1820
        %v1822 = vsel %vm1821, %v1814, %v1818
        %v1823 = vand.u32 2147483647, %v1768
        %vm1824 = vcmp.eq.f32.partialorder %v1823, 8.507059e+37
        %v1825 = vand.u32 %v1768, 2147483648
        %v1826 = vor.u32 1.1754944e-38, %v1825
        %v1827 = vsel %vm1824, %v1826, %v1822
        %v1828 = vmul.f32 %v1756, %v1827
        %v1830 = vsel %vm750, %v1783, 0
        %1832 = vmatpush.msra.mxu0 0.0
        %1833 = vmatpush.msra.mxu0 0.0
        %1834 = vmatpush.msra.mxu0 0.0
        %1835 = vmatpush.msra.mxu0 0.0
        %1836 = vmatpush.msra.mxu0 0.0
        %1837 = vmatpush.msra.mxu0 0.0
        %1838 = vmatpush.msra.mxu0 0.0
        %1839 = vmatpush.msra.mxu0 0.0
        %1840 = vmatpush.msra.mxu0 0.0
        %1841 = vmatpush.msra.mxu0 0.0
        %1842 = vmatpush.msra.mxu0 0.0
        %1843 = vmatpush.msra.mxu0 0.0
        %1844 = vmatpush.msra.mxu0 0.0
        %1845 = vmatpush.msra.mxu0 0.0
        %1846 = vmatpush.msra.mxu0 0.0
        %1847 = vmatpush.msra.mxu0 %v1611
        %1848 = vmatmul.f32.gmra.mxu0 %v1830
        %v1849 = vpop.f32.mrf.mxu0
        %v1850 = vadd.f32 0.0, %v1849
        %1851 = vdwg.mxu0
        %v1853 = vsel %vm750, %v1798, 0
        %1855 = vmatpush.msra.mxu0 0.0
        %1856 = vmatpush.msra.mxu0 0.0
        %1857 = vmatpush.msra.mxu0 0.0
        %1858 = vmatpush.msra.mxu0 0.0
        %1859 = vmatpush.msra.mxu0 0.0
        %1860 = vmatpush.msra.mxu0 0.0
        %1861 = vmatpush.msra.mxu0 0.0
        %1862 = vmatpush.msra.mxu0 0.0
        %1863 = vmatpush.msra.mxu0 0.0
        %1864 = vmatpush.msra.mxu0 0.0
        %1865 = vmatpush.msra.mxu0 0.0
        %1866 = vmatpush.msra.mxu0 0.0
        %1867 = vmatpush.msra.mxu0 0.0
        %1868 = vmatpush.msra.mxu0 0.0
        %1869 = vmatpush.msra.mxu0 0.0
        %1870 = vmatpush.msra.mxu0 %v1629
        %1871 = vmatmul.f32.gmra.mxu0 %v1853
        %v1872 = vpop.f32.mrf.mxu0
        %v1873 = vadd.f32 0.0, %v1872
        %1874 = vdwg.mxu0
        %v1876 = vsel %vm750, %v1813, 0
        %1878 = vmatpush.msra.mxu0 0.0
        %1879 = vmatpush.msra.mxu0 0.0
        %1880 = vmatpush.msra.mxu0 0.0
        %1881 = vmatpush.msra.mxu0 0.0
        %1882 = vmatpush.msra.mxu0 0.0
        %1883 = vmatpush.msra.mxu0 0.0
        %1884 = vmatpush.msra.mxu0 0.0
        %1885 = vmatpush.msra.mxu0 0.0
        %1886 = vmatpush.msra.mxu0 0.0
        %1887 = vmatpush.msra.mxu0 0.0
        %1888 = vmatpush.msra.mxu0 0.0
        %1889 = vmatpush.msra.mxu0 0.0
        %1890 = vmatpush.msra.mxu0 0.0
        %1891 = vmatpush.msra.mxu0 0.0
        %1892 = vmatpush.msra.mxu0 0.0
        %1893 = vmatpush.msra.mxu0 %v1632
        %1894 = vmatmul.f32.gmra.mxu0 %v1876
        %v1895 = vpop.f32.mrf.mxu0
        %v1896 = vadd.f32 0.0, %v1895
        %1897 = vdwg.mxu0
        %v1899 = vsel %vm750, %v1828, 0
        %1901 = vmatpush.msra.mxu0 0.0
        %1902 = vmatpush.msra.mxu0 0.0
        %1903 = vmatpush.msra.mxu0 0.0
        %1904 = vmatpush.msra.mxu0 0.0
        %1905 = vmatpush.msra.mxu0 0.0
        %1906 = vmatpush.msra.mxu0 0.0
        %1907 = vmatpush.msra.mxu0 0.0
        %1908 = vmatpush.msra.mxu0 0.0
        %1909 = vmatpush.msra.mxu0 0.0
        %1910 = vmatpush.msra.mxu0 0.0
        %1911 = vmatpush.msra.mxu0 0.0
        %1912 = vmatpush.msra.mxu0 0.0
        %1913 = vmatpush.msra.mxu0 0.0
        %1914 = vmatpush.msra.mxu0 0.0
        %1915 = vmatpush.msra.mxu0 0.0
        %1916 = vmatpush.msra.mxu0 %v1635
        %1917 = vmatmul.f32.gmra.mxu0 %v1899
        %v1918 = vpop.f32.mrf.mxu0
        %v1919 = vadd.f32 0.0, %v1918
        %1920 = vdwg.mxu0
        %v1922 = vsel %vm653, %v1850, 0
        %1924 = vmatpush.msra.mxu0 0.0
        %1925 = vmatpush.msra.mxu0 0.0
        %1926 = vmatpush.msra.mxu0 0.0
        %1927 = vmatpush.msra.mxu0 0.0
        %1928 = vmatpush.msra.mxu0 0.0
        %1929 = vmatpush.msra.mxu0 0.0
        %1930 = vmatpush.msra.mxu0 0.0
        %1931 = vmatpush.msra.mxu0 0.0
        %1932 = vmatpush.msra.mxu0 0.0
        %1933 = vmatpush.msra.mxu0 0.0
        %1934 = vmatpush.msra.mxu0 0.0
        %1935 = vmatpush.msra.mxu0 0.0
        %1936 = vmatpush.msra.mxu0 %v1434
        %1937 = vmatpush.msra.mxu0 %v1433
        %1938 = vmatpush.msra.mxu0 %v1432
        %1939 = vmatpush.msra.mxu0 %v1431
        %1940 = vmatmul.f32.gmra.mxu0 %v1922
        %v1941 = vpop.f32.mrf.mxu0
        %v1942 = vadd.f32 0.0, %v1941
        %1943 = vdwg.mxu0
        %v1945 = vsel %vm653, %v1873, 0
        %1947 = vmatpush.msra.mxu0 0.0
        %1948 = vmatpush.msra.mxu0 0.0
        %1949 = vmatpush.msra.mxu0 0.0
        %1950 = vmatpush.msra.mxu0 0.0
        %1951 = vmatpush.msra.mxu0 0.0
        %1952 = vmatpush.msra.mxu0 0.0
        %1953 = vmatpush.msra.mxu0 0.0
        %1954 = vmatpush.msra.mxu0 0.0
        %1955 = vmatpush.msra.mxu0 0.0
        %1956 = vmatpush.msra.mxu0 0.0
        %1957 = vmatpush.msra.mxu0 0.0
        %1958 = vmatpush.msra.mxu0 0.0
        %1959 = vmatpush.msra.mxu0 %v1438
        %1960 = vmatpush.msra.mxu0 %v1437
        %1961 = vmatpush.msra.mxu0 %v1436
        %1962 = vmatpush.msra.mxu0 %v1435
        %1963 = vmatmul.f32.gmra.mxu0 %v1945
        %v1964 = vpop.f32.mrf.mxu0
        %v1965 = vadd.f32 0.0, %v1964
        %1966 = vdwg.mxu0
        %v1968 = vsel %vm653, %v1896, 0
        %1970 = vmatpush.msra.mxu0 0.0
        %1971 = vmatpush.msra.mxu0 0.0
        %1972 = vmatpush.msra.mxu0 0.0
        %1973 = vmatpush.msra.mxu0 0.0
        %1974 = vmatpush.msra.mxu0 0.0
        %1975 = vmatpush.msra.mxu0 0.0
        %1976 = vmatpush.msra.mxu0 0.0
        %1977 = vmatpush.msra.mxu0 0.0
        %1978 = vmatpush.msra.mxu0 0.0
        %1979 = vmatpush.msra.mxu0 0.0
        %1980 = vmatpush.msra.mxu0 0.0
        %1981 = vmatpush.msra.mxu0 0.0
        %1982 = vmatpush.msra.mxu0 %v1442
        %1983 = vmatpush.msra.mxu0 %v1441
        %1984 = vmatpush.msra.mxu0 %v1440
        %1985 = vmatpush.msra.mxu0 %v1439
        %1986 = vmatmul.f32.gmra.mxu0 %v1968
        %v1987 = vpop.f32.mrf.mxu0
        %v1988 = vadd.f32 0.0, %v1987
        %1989 = vdwg.mxu0
        %v1991 = vsel %vm653, %v1919, 0
        %1993 = vmatpush.msra.mxu0 0.0
        %1994 = vmatpush.msra.mxu0 0.0
        %1995 = vmatpush.msra.mxu0 0.0
        %1996 = vmatpush.msra.mxu0 0.0
        %1997 = vmatpush.msra.mxu0 0.0
        %1998 = vmatpush.msra.mxu0 0.0
        %1999 = vmatpush.msra.mxu0 0.0
        %2000 = vmatpush.msra.mxu0 0.0
        %2001 = vmatpush.msra.mxu0 0.0
        %2002 = vmatpush.msra.mxu0 0.0
        %2003 = vmatpush.msra.mxu0 0.0
        %2004 = vmatpush.msra.mxu0 0.0
        %2005 = vmatpush.msra.mxu0 %v1446
        %2006 = vmatpush.msra.mxu0 %v1445
        %2007 = vmatpush.msra.mxu0 %v1444
        %2008 = vmatpush.msra.mxu0 %v1443
        %2009 = vmatmul.f32.gmra.mxu0 %v1991
        %v2010 = vpop.f32.mrf.mxu0
        %v2011 = vadd.f32 0.0, %v2010
        %2012 = vdwg.mxu0
        %v2013 = vadd.f32 %v1942, %v1965
        %v2014 = vadd.f32 %v2013, %v1988
        %v2015 = vadd.f32 %v2014, %v2011
        %v2016 = vadd.f32 %v1316, %v2015
        %v2017 = vperm.slane %v1517, 0
        %v2018 = vadd.f32 %v2016, %v2017
        %2019 = vadd.xlane.f32.xlu0 %v2018
        %v2020 = vpop.xlane.xlu0 %2019
        %v2021 = vmul.f32 %v2020, %v539
        %v2022 = vsub.f32 %v2018, %v2021
        %v2023 = vmul.f32 %v2022, %v2022
        %2024 = vadd.xlane.f32.xlu0 %v2023
        %v2025 = vpop.xlane.xlu0 %2024
        %v2026 = vmul.f32 %v2025, %v539
        %v2027 = vadd.f32 %v2026, 1e-05
        %v2028 = vrsqrt.pop %v2027
        %v2029 = vmul.f32 %v2028, %v2027
        %v2030 = vmul.f32 %v2029, %v2028
        %v2031 = vmul.f32 0.5, %v2030
        %v2032 = vsub.f32 1.5, %v2031
        %v2033 = vmul.f32 %v2028, %v2032
        %vm2034 = vweird.f32 %v2027
        %vm2035 = vweird.f32 %v2028
        %vm2036 = vmor %vm2034, %vm2035
        %v2037 = vsel %vm2036, %v2028, %v2033
        %v2038 = vmul.f32 %v2022, %v2037
        %v2039 = vperm.slane %v1515, 0
        %v2040 = vmul.f32 %v2038, %v2039
        %v2041 = vperm.slane %v1516, 0
        %v2042 = vadd.f32 %v2040, %v2041
        %v2044 = vperm.slane %v1521, 0
        %v2045 = vperm.slane %v1521, 1
        %v2046 = vperm.slane %v1521, 2
        %v2047 = vperm.slane %v1521, 3
        %2052 = vmatpush.msra.mxu0 %v1426
        %2053 = vmatpush.msra.mxu0 %v1422
        %2054 = vmatpush.msra.mxu0 %v1418
        %2055 = vmatpush.msra.mxu0 %v1414
        %2056 = vmatpush.msra.mxu0 %v1410
        %2057 = vmatpush.msra.mxu0 %v1406
        %2058 = vmatpush.msra.mxu0 %v1402
        %2059 = vmatpush.msra.mxu0 %v1398
        %2060 = vmatpush.msra.mxu0 %v1394
        %2061 = vmatpush.msra.mxu0 %v1390
        %2062 = vmatpush.msra.mxu0 %v1386
        %2063 = vmatpush.msra.mxu0 %v1382
        %2064 = vmatpush.msra.mxu0 %v1378
        %2065 = vmatpush.msra.mxu0 %v1374
        %2066 = vmatpush.msra.mxu0 %v1370
        %2067 = vmatpush.msra.mxu0 %v1366
        %2068 = vmatmul.f32.gmra.mxu0 %v2042
        %v2069 = vpop.f32.mrf.mxu0
        %v2070 = vadd.f32 %v2044, %v2069
        %2071 = vdwg.mxu0
        %2072 = vmatpush.msra.mxu0 %v1427
        %2073 = vmatpush.msra.mxu0 %v1423
        %2074 = vmatpush.msra.mxu0 %v1419
        %2075 = vmatpush.msra.mxu0 %v1415
        %2076 = vmatpush.msra.mxu0 %v1411
        %2077 = vmatpush.msra.mxu0 %v1407
        %2078 = vmatpush.msra.mxu0 %v1403
        %2079 = vmatpush.msra.mxu0 %v1399
        %2080 = vmatpush.msra.mxu0 %v1395
        %2081 = vmatpush.msra.mxu0 %v1391
        %2082 = vmatpush.msra.mxu0 %v1387
        %2083 = vmatpush.msra.mxu0 %v1383
        %2084 = vmatpush.msra.mxu0 %v1379
        %2085 = vmatpush.msra.mxu0 %v1375
        %2086 = vmatpush.msra.mxu0 %v1371
        %2087 = vmatpush.msra.mxu0 %v1367
        %2088 = vmatmul.f32.gmra.mxu0 %v2042
        %v2089 = vpop.f32.mrf.mxu0
        %v2090 = vadd.f32 %v2045, %v2089
        %2091 = vdwg.mxu0
        %2092 = vmatpush.msra.mxu0 %v1428
        %2093 = vmatpush.msra.mxu0 %v1424
        %2094 = vmatpush.msra.mxu0 %v1420
        %2095 = vmatpush.msra.mxu0 %v1416
        %2096 = vmatpush.msra.mxu0 %v1412
        %2097 = vmatpush.msra.mxu0 %v1408
        %2098 = vmatpush.msra.mxu0 %v1404
        %2099 = vmatpush.msra.mxu0 %v1400
        %2100 = vmatpush.msra.mxu0 %v1396
        %2101 = vmatpush.msra.mxu0 %v1392
        %2102 = vmatpush.msra.mxu0 %v1388
        %2103 = vmatpush.msra.mxu0 %v1384
        %2104 = vmatpush.msra.mxu0 %v1380
        %2105 = vmatpush.msra.mxu0 %v1376
        %2106 = vmatpush.msra.mxu0 %v1372
        %2107 = vmatpush.msra.mxu0 %v1368
        %2108 = vmatmul.f32.gmra.mxu0 %v2042
        %v2109 = vpop.f32.mrf.mxu0
        %v2110 = vadd.f32 %v2046, %v2109
        %2111 = vdwg.mxu0
        %2112 = vmatpush.msra.mxu0 %v1429
        %2113 = vmatpush.msra.mxu0 %v1425
        %2114 = vmatpush.msra.mxu0 %v1421
        %2115 = vmatpush.msra.mxu0 %v1417
        %2116 = vmatpush.msra.mxu0 %v1413
        %2117 = vmatpush.msra.mxu0 %v1409
        %2118 = vmatpush.msra.mxu0 %v1405
        %2119 = vmatpush.msra.mxu0 %v1401
        %2120 = vmatpush.msra.mxu0 %v1397
        %2121 = vmatpush.msra.mxu0 %v1393
        %2122 = vmatpush.msra.mxu0 %v1389
        %2123 = vmatpush.msra.mxu0 %v1385
        %2124 = vmatpush.msra.mxu0 %v1381
        %2125 = vmatpush.msra.mxu0 %v1377
        %2126 = vmatpush.msra.mxu0 %v1373
        %2127 = vmatpush.msra.mxu0 %v1369
        %2128 = vmatmul.f32.gmra.mxu0 %v2042
        %v2129 = vpop.f32.mrf.mxu0
        %v2130 = vadd.f32 %v2047, %v2129
        %2131 = vdwg.mxu0
        %v2132 = vmul.f32 %v2070, 1.702
        %v2133 = vmul.f32 %v2090, 1.702
        %v2134 = vmul.f32 %v2110, 1.702
        %v2135 = vmul.f32 %v2130, 1.702
        %v2136 = vxor.u32 %v2132, 2147483648
        %v2137 = vxor.u32 %v2133, 2147483648
        %v2138 = vxor.u32 %v2134, 2147483648
        %v2139 = vxor.u32 %v2135, 2147483648
        %v2140 = vmul.f32 %v2136, 1.442695
        %v2141 = vpow.pop %v2140
        %v2142 = vmul.f32 %v2137, 1.442695
        %v2143 = vpow.pop %v2142
        %v2144 = vmul.f32 %v2138, 1.442695
        %v2145 = vpow.pop %v2144
        %v2146 = vmul.f32 %v2139, 1.442695
        %v2147 = vpow.pop %v2146
        %v2148 = vadd.f32 %v2141, 1.0
        %v2149 = vadd.f32 %v2143, 1.0
        %v2150 = vadd.f32 %v2145, 1.0
        %v2151 = vadd.f32 %v2147, 1.0
        %v2152 = vrcp.pop %v2148
        %v2153 = vmul.f32 %v2148, %v2152
        %v2154 = vsub.f32 1.0, %v2153
        %v2155 = vmul.f32 %v2152, %v2154
        %v2156 = vadd.f32 %v2152, %v2155
        %vm2157 = vweird.f32 %v2148
        %vm2158 = vweird.f32 %v2152
        %vm2159 = vmor %vm2157, %vm2158
        %v2160 = vsel %vm2159, %v2152, %v2156
        %v2161 = vand.u32 2147483647, %v2148
        %vm2162 = vcmp.eq.f32.partialorder %v2161, 8.507059e+37
        %v2163 = vand.u32 %v2148, 2147483648
        %v2164 = vor.u32 1.1754944e-38, %v2163
        %v2165 = vsel %vm2162, %v2164, %v2160
        %v2166 = vmul.f32 1.0, %v2165
        %v2167 = vrcp.pop %v2149
        %v2168 = vmul.f32 %v2149, %v2167
        %v2169 = vsub.f32 1.0, %v2168
        %v2170 = vmul.f32 %v2167, %v2169
        %v2171 = vadd.f32 %v2167, %v2170
        %vm2172 = vweird.f32 %v2149
        %vm2173 = vweird.f32 %v2167
        %vm2174 = vmor %vm2172, %vm2173
        %v2175 = vsel %vm2174, %v2167, %v2171
        %v2176 = vand.u32 2147483647, %v2149
        %vm2177 = vcmp.eq.f32.partialorder %v2176, 8.507059e+37
        %v2178 = vand.u32 %v2149, 2147483648
        %v2179 = vor.u32 1.1754944e-38, %v2178
        %v2180 = vsel %vm2177, %v2179, %v2175
        %v2181 = vmul.f32 1.0, %v2180
        %v2182 = vrcp.pop %v2150
        %v2183 = vmul.f32 %v2150, %v2182
        %v2184 = vsub.f32 1.0, %v2183
        %v2185 = vmul.f32 %v2182, %v2184
        %v2186 = vadd.f32 %v2182, %v2185
        %vm2187 = vweird.f32 %v2150
        %vm2188 = vweird.f32 %v2182
        %vm2189 = vmor %vm2187, %vm2188
        %v2190 = vsel %vm2189, %v2182, %v2186
        %v2191 = vand.u32 2147483647, %v2150
        %vm2192 = vcmp.eq.f32.partialorder %v2191, 8.507059e+37
        %v2193 = vand.u32 %v2150, 2147483648
        %v2194 = vor.u32 1.1754944e-38, %v2193
        %v2195 = vsel %vm2192, %v2194, %v2190
        %v2196 = vmul.f32 1.0, %v2195
        %v2197 = vrcp.pop %v2151
        %v2198 = vmul.f32 %v2151, %v2197
        %v2199 = vsub.f32 1.0, %v2198
        %v2200 = vmul.f32 %v2197, %v2199
        %v2201 = vadd.f32 %v2197, %v2200
        %vm2202 = vweird.f32 %v2151
        %vm2203 = vweird.f32 %v2197
        %vm2204 = vmor %vm2202, %vm2203
        %v2205 = vsel %vm2204, %v2197, %v2201
        %v2206 = vand.u32 2147483647, %v2151
        %vm2207 = vcmp.eq.f32.partialorder %v2206, 8.507059e+37
        %v2208 = vand.u32 %v2151, 2147483648
        %v2209 = vor.u32 1.1754944e-38, %v2208
        %v2210 = vsel %vm2207, %v2209, %v2205
        %v2211 = vmul.f32 1.0, %v2210
        %v2212 = vmul.f32 %v2070, %v2166
        %v2213 = vmul.f32 %v2090, %v2181
        %v2214 = vmul.f32 %v2110, %v2196
        %v2215 = vmul.f32 %v2130, %v2211
        %2216 = vmatpush.msra.mxu0 %v1463
        %2217 = vmatpush.msra.mxu0 %v1462
        %2218 = vmatpush.msra.mxu0 %v1461
        %2219 = vmatpush.msra.mxu0 %v1460
        %2220 = vmatpush.msra.mxu0 %v1459
        %2221 = vmatpush.msra.mxu0 %v1458
        %2222 = vmatpush.msra.mxu0 %v1457
        %2223 = vmatpush.msra.mxu0 %v1456
        %2224 = vmatpush.msra.mxu0 %v1455
        %2225 = vmatpush.msra.mxu0 %v1454
        %2226 = vmatpush.msra.mxu0 %v1453
        %2227 = vmatpush.msra.mxu0 %v1452
        %2228 = vmatpush.msra.mxu0 %v1451
        %2229 = vmatpush.msra.mxu0 %v1450
        %2230 = vmatpush.msra.mxu0 %v1449
        %2231 = vmatpush.msra.mxu0 %v1448
        %2232 = vmatmul.f32.gmra.mxu0 %v2212
        %v2233 = vpop.f32.mrf.mxu0
        %v2234 = vadd.f32 0.0, %v2233
        %2235 = vdwg.mxu0
        %2236 = vmatpush.msra.mxu0 %v1479
        %2237 = vmatpush.msra.mxu0 %v1478
        %2238 = vmatpush.msra.mxu0 %v1477
        %2239 = vmatpush.msra.mxu0 %v1476
        %2240 = vmatpush.msra.mxu0 %v1475
        %2241 = vmatpush.msra.mxu0 %v1474
        %2242 = vmatpush.msra.mxu0 %v1473
        %2243 = vmatpush.msra.mxu0 %v1472
        %2244 = vmatpush.msra.mxu0 %v1471
        %2245 = vmatpush.msra.mxu0 %v1470
        %2246 = vmatpush.msra.mxu0 %v1469
        %2247 = vmatpush.msra.mxu0 %v1468
        %2248 = vmatpush.msra.mxu0 %v1467
        %2249 = vmatpush.msra.mxu0 %v1466
        %2250 = vmatpush.msra.mxu0 %v1465
        %2251 = vmatpush.msra.mxu0 %v1464
        %2252 = vmatmul.f32.gmra.mxu0 %v2213
        %v2253 = vpop.f32.mrf.mxu0
        %v2254 = vadd.f32 %v2234, %v2253
        %2255 = vdwg.mxu0
        %2256 = vmatpush.msra.mxu0 %v1495
        %2257 = vmatpush.msra.mxu0 %v1494
        %2258 = vmatpush.msra.mxu0 %v1493
        %2259 = vmatpush.msra.mxu0 %v1492
        %2260 = vmatpush.msra.mxu0 %v1491
        %2261 = vmatpush.msra.mxu0 %v1490
        %2262 = vmatpush.msra.mxu0 %v1489
        %2263 = vmatpush.msra.mxu0 %v1488
        %2264 = vmatpush.msra.mxu0 %v1487
        %2265 = vmatpush.msra.mxu0 %v1486
        %2266 = vmatpush.msra.mxu0 %v1485
        %2267 = vmatpush.msra.mxu0 %v1484
        %2268 = vmatpush.msra.mxu0 %v1483
        %2269 = vmatpush.msra.mxu0 %v1482
        %2270 = vmatpush.msra.mxu0 %v1481
        %2271 = vmatpush.msra.mxu0 %v1480
        %2272 = vmatmul.f32.gmra.mxu0 %v2214
        %v2273 = vpop.f32.mrf.mxu0
        %v2274 = vadd.f32 %v2254, %v2273
        %2275 = vdwg.mxu0
        %2276 = vmatpush.msra.mxu0 %v1511
        %2277 = vmatpush.msra.mxu0 %v1510
        %2278 = vmatpush.msra.mxu0 %v1509
        %2279 = vmatpush.msra.mxu0 %v1508
        %2280 = vmatpush.msra.mxu0 %v1507
        %2281 = vmatpush.msra.mxu0 %v1506
        %2282 = vmatpush.msra.mxu0 %v1505
        %2283 = vmatpush.msra.mxu0 %v1504
        %2284 = vmatpush.msra.mxu0 %v1503
        %2285 = vmatpush.msra.mxu0 %v1502
        %2286 = vmatpush.msra.mxu0 %v1501
        %2287 = vmatpush.msra.mxu0 %v1500
        %2288 = vmatpush.msra.mxu0 %v1499
        %2289 = vmatpush.msra.mxu0 %v1498
        %2290 = vmatpush.msra.mxu0 %v1497
        %2291 = vmatpush.msra.mxu0 %v1496
        %2292 = vmatmul.f32.gmra.mxu0 %v2215
        %v2293 = vpop.f32.mrf.mxu0
        %v2294 = vadd.f32 %v2274, %v2293
        %2295 = vdwg.mxu0
        %v2296 = vadd.f32 %v2018, %v2294
        %v2297 = vperm.slane %v1518, 0
        %v2298 = vadd.f32 %v2296, %v2297
        %v2299 = vld [vmem:[%s6] sm:$0x1]
        %v2300 = vld [vmem:[%s6 + $0x1] sm:$0x1]
        %2301 = vadd.xlane.f32.xlu0 %v2298
        %v2302 = vpop.xlane.xlu0 %2301
        %v2303 = vmul.f32 %v2302, %v539
        %v2304 = vsub.f32 %v2298, %v2303
        %v2305 = vmul.f32 %v2304, %v2304
        %2306 = vadd.xlane.f32.xlu0 %v2305
        %v2307 = vpop.xlane.xlu0 %2306
        %v2308 = vmul.f32 %v2307, %v539
        %v2309 = vadd.f32 %v2308, 1e-05
        %v2310 = vrsqrt.pop %v2309
        %v2311 = vmul.f32 %v2310, %v2309
        %v2312 = vmul.f32 %v2311, %v2310
        %v2313 = vmul.f32 0.5, %v2312
        %v2314 = vsub.f32 1.5, %v2313
        %v2315 = vmul.f32 %v2310, %v2314
        %vm2316 = vweird.f32 %v2309
        %vm2317 = vweird.f32 %v2310
        %vm2318 = vmor %vm2316, %vm2317
        %v2319 = vsel %vm2318, %v2310, %v2315
        %v2320 = vmul.f32 %v2304, %v2319
        %v2321 = vperm.slane %v2299, 0
        %v2322 = vmul.f32 %v2320, %v2321
        %v2323 = vperm.slane %v2300, 0
        %v2324 = vadd.f32 %v2322, %v2323
        %2325 = vst [vmem:[%s323] sm:$0xff] %v2324
        %p2326 = scmp.lt.s32.totalorder %s20, 1
        %s2327 = scalar_select %p2326, %s20, 1
        %s2328 = smul.addr %s2327, 8
        %s2329 = scalar_lea.vmem %s7, %s2328
        // Predicated region
        $region61: #{clip_encode_text.1} parent=47 // pred_check
          %p2330 = pneg %p190
        $region62: #{clip_encode_text.1} parent=47 // pred_check_branch
          %2332 = sbr.rel (%p2330) target = $region64
        $region63: #{clip_encode_text.1} parent=47 // pred_region
          _
        $region64: #{clip_encode_text.1} parent=47 // pred_fallthru
          _
      $region48: #{clip_encode_text.1} parent=5 // pred_fallthru
        _
      %p2333 = scmp.le.s32.totalorder 2, %s15
      // Predicated region
      $region65: #{clip_encode_text.1} parent=5 // pred_check
        %p2334 = pneg %p2333
      $region66: #{clip_encode_text.1} parent=5 // pred_check_branch
        %2336 = sbr.rel (%p2334) target = $region68
      $region67: #{clip_encode_text.1} parent=5 // pred_region
        %s2337 = ssub.s32 %s15, 2
        // Predicated region
        $region69: #{clip_encode_text.1} parent=67 // pred_check
          %p2338 = pneg %p196
        $region70: #{clip_encode_text.1} parent=67 // pred_check_branch
          %2340 = sbr.rel (%p2338) target = $region72
        $region71: #{clip_encode_text.1} parent=67 // pred_region
          %p2341 = scmp.lt.s32.totalorder %s21, 1
          %s2342 = scalar_select %p2341, %s21, 1
          %s2343 = smul.addr %s2342, 8
          %s2344 = scalar_lea.vmem %s7, %s2343
        $region72: #{clip_encode_text.1} parent=67 // pred_fallthru
          _
      $region68: #{clip_encode_text.1} parent=5 // pred_fallthru
        _
    $region6: #{clip_encode_text.1} parent=1 // loop_footer
      %s19 = sadd.s32 1, %s15
    $region7: #{clip_encode_text.1} parent=1 // loop_footer_branch
      %14 = sbr.rel target = $region3
    $region8: #{clip_encode_text.1} parent=1 // loop_exit
      _
    %2345 = vsyncpa [#allocation3], 1
    %s2346 = scalar_lea.sflag [#allocation3], 1
    %2347 = vsyncpa %s2346, 1
    %2348 = vsyncpa [#allocation5], 1

</llo_original>
